<compile_context>
chip_gen: v7x
topology: tpu7x:2x2x1
jax: 0.10.0
libtpu: 0.0.40
codegen_flags: <defaults>
</compile_context>

<pallas_src>
import functools

import jax
import jax.numpy as jnp
import numpy as np
from jax import lax
from jax.experimental import pallas as pl
from jax.experimental.pallas import tpu as pltpu

EPS = 1e-5  # PyTorch BatchNorm2d default
LANE = 128


def _round_up(v, m):
    return (v + m - 1) // m * m


# --------------------------------------------------------------------------
# One-off probe: verify pltpu.roll along the row (sublane) axis.
#   +1 : pltpu.roll follows jnp.roll semantics   (result[i] = x[(i-shift)%N])
#   -1 : opposite convention
#    0 : roll unusable -> use a slice+concat fallback shift
# --------------------------------------------------------------------------
_ROLL_MODE = None


def _detect_roll_mode():
    def probe_kernel(x_ref, o_ref):
        o_ref[...] = pltpu.roll(x_ref[...], 1, 0)

    try:
        x = jnp.arange(16 * 128, dtype=jnp.float32).reshape(16, 128)
        y = pl.pallas_call(
            probe_kernel,
            out_shape=jax.ShapeDtypeStruct((16, 128), jnp.float32),
        )(x)
        y = np.asarray(jax.block_until_ready(y))
        xn = np.asarray(x)
        if np.array_equal(y, np.roll(xn, 1, axis=0)):
            return 1
        if np.array_equal(y, np.roll(xn, -1, axis=0)):
            return -1
    except Exception:
        pass
    return 0


def _roll_mode():
    global _ROLL_MODE
    if _ROLL_MODE is None:
        _ROLL_MODE = _detect_roll_mode()
    return _ROLL_MODE


def _shift_rows(a, off, n_rows):
    """Return b with b[r] = a[(r + off) % n_rows] (rows = sublane axis)."""
    if off == 0:
        return a
    mode = _roll_mode()
    if mode == 1:
        return pltpu.roll(a, (-off) % n_rows, 0)
    if mode == -1:
        return pltpu.roll(a, off % n_rows, 0)
    k = off % n_rows
    return jnp.concatenate([a[k:], a[:k]], axis=0)


# --------------------------------------------------------------------------
# Pallas kernel: [conv1 (im2col matmul) + BN1 + ReLU]
#                -> [conv2 via shift-accumulate + BN2]
#                -> (+ shortcut matmul [projection or identity]) -> ReLU
# --------------------------------------------------------------------------
def make_block_kernel(Nb, Ho, Wo, K1, Cin, Pp):
    HoWo = Ho * Wo
    Mb = Nb * HoWo

    def kernel(xcol_ref, xs_ref, w1_ref, s1_ref, b1_ref,
               w2_ref, s2_ref, b2_ref, ws_ref, ss_ref, bs_ref, out_ref):
        # ---- conv1: one im2col matmul (bf16 operands, f32 acc) + BN1 + ReLU
        xcol = xcol_ref[...].reshape(Mb, K1)                     # (M, 9*Cin) bf16
        acc1 = jnp.dot(xcol, w1_ref[...],
                       preferred_element_type=jnp.float32)       # (M, Pp) f32
        h1 = jnp.maximum(acc1 * s1_ref[...] + b1_ref[...], 0.0)
        h1 = h1.astype(jnp.bfloat16)                             # shared MXU LHS

        # Row-coordinate boundary masks, built once and reused by all taps.
        r = lax.broadcasted_iota(jnp.int32, (Mb, 1), 0)
        q = r % HoWo                         # flat position inside the image
        xq = r % Wo                          # column inside the row
        not_top = q >= Wo                    # y >= 1      (needed for ky == 0)
        not_bot = q < (Ho - 1) * Wo          # y <= Ho-2   (needed for ky == 2)
        not_lft = xq >= 1                    # x >= 1      (needed for kx == 0)
        not_rgt = xq <= Wo - 2               # x <= Wo-2   (needed for kx == 2)

        # ---- conv2: 9 clean K=Pp matmuls on the *unshifted* h1; the spatial
        # shift of each tap is applied to the f32 result via a static roll on
        # the row axis + boundary masking (no relayout copies, no scratch).
        # TODO(synk): on v6e/v7x, pair taps along K (2*128=256 contraction
        #             depth) once Pp == 128 to halve MXU issue count.
        acc2 = jnp.zeros((Mb, Pp), jnp.float32)
        for ky in range(3):
            for kx in range(3):
                off = (ky - 1) * Wo + (kx - 1)       # source-row offset
                c = jnp.dot(h1, w2_ref[ky * 3 + kx],
                            preferred_element_type=jnp.float32)  # (M, Pp) f32
                c = _shift_rows(c, off, Mb)
                mask = None
                if ky == 0:
                    mask = not_top
                elif ky == 2:
                    mask = not_bot
                if kx == 0:
                    mask = not_lft if mask is None else (mask & not_lft)
                elif kx == 2:
                    mask = not_rgt if mask is None else (mask & not_rgt)
                if mask is not None:
                    c = jnp.where(mask, c, 0.0)
                acc2 = acc2 + c
        out = acc2 * s2_ref[...] + b2_ref[...]

        # ---- shortcut: unified projection matmul (identity uses ws = I) ----
        xs = xs_ref[...].reshape(Mb, Cin)                        # (M, Cin) bf16
        sc = jnp.dot(xs, ws_ref[...], preferred_element_type=jnp.float32)
        sc = sc * ss_ref[...] + bs_ref[...]

        res = jnp.maximum(out + sc, 0.0)
        # lane-dense (last dim = Pp = multiple of 128) unmasked output store
        out_ref[...] = res.reshape(Nb, HoWo, Pp).astype(out_ref.dtype)

    return kernel


# --------------------------------------------------------------------------
# Wrapper helpers
# --------------------------------------------------------------------------
def bn_fold(gamma, beta, mean, var, Pp):
    s = gamma / jnp.sqrt(var + EPS)
    b = beta - mean * s
    s = jnp.pad(s, (0, Pp - s.shape[0]))
    b = jnp.pad(b, (0, Pp - b.shape[0]))
    return (s.reshape(1, Pp).astype(jnp.float32),
            b.reshape(1, Pp).astype(jnp.float32))


def _vmem_limit_bytes():
    """Generation-aware VMEM budget: ~75% of per-core VMEM, capped at 96 MiB."""
    try:
        cap = int(pltpu.get_tpu_info().vmem_capacity_bytes)
    except Exception:
        cap = 64 << 20          # conservative fallback (v7x per-core VMEM)
    return min((cap * 3) // 4, 96 << 20)


def _pick_nb(N, HoWo, K1, Cin, Pp, weight_bytes, budget):
    """Largest batch fold whose honest per-step VMEM footprint fits `budget`.

    Counts double-buffered input/output streams, in-kernel f32/bf16
    intermediates (acc1/h1/per-tap result/acc2/res, plus spill headroom) and
    the weights.  Nb is additionally capped at N//2 so the grid keeps >= 2
    steps and v7x's second TensorCore gets work on the "parallel" axis.
    """
    best = 1
    cap_nb = max(1, N // 2)
    for nb in range(1, cap_nb + 1):
        if N % nb:
            continue
        m = nb * HoWo
        streams = 2 * m * (K1 * 2 + Cin * 2 + Pp * 4)   # double-buffered in/out
        interm = 6 * m * Pp * 4                         # f32 intermediates + headroom
        if streams + interm + weight_bytes <= budget:
            best = nb
    return best


# --------------------------------------------------------------------------
# Wrapper
# --------------------------------------------------------------------------
def basic_block_forward(x_nchw, params, stride):
    N, Cin, H, W = x_nchw.shape
    P = params["w1"].shape[-1]
    # PyTorch conv (k=3, pad=1): works for odd H/W too.
    Ho = (H - 1) // stride + 1
    Wo = (W - 1) // stride + 1
    HoWo = Ho * Wo
    Pp = _round_up(P, LANE)           # pad out-channels to the 128-lane width
    K1 = 9 * Cin
    has_proj = (stride != 1) or (Cin != P)
    if not has_proj:
        assert stride == 1 and Cin == P, "identity shortcut needs stride==1, Cin==P"

    x_nhwc = jnp.transpose(x_nchw, (0, 2, 3, 1)).astype(jnp.float32)
    xpad = jnp.pad(x_nhwc, ((0, 0), (1, 1), (1, 1), (0, 0)))

    # conv1 im2col in the wrapper; tap ordering matches w1.reshape(9*Cin, P).
    # TODO(synk): for large Cin (>=64) move the conv1 im2col into the kernel
    #             (9 in-kernel taps like conv2) to avoid streaming 9x the
    #             input bytes from HBM (matters most on v5e).
    cols = []
    for dy in range(3):
        for dx in range(3):
            cols.append(xpad[:, dy:dy + (Ho - 1) * stride + 1:stride,
                             dx:dx + (Wo - 1) * stride + 1:stride, :])
    xcol = jnp.concatenate(cols, axis=-1).reshape(N, HoWo, K1).astype(jnp.bfloat16)

    # Weights in matmul form, channel-padded, bf16 MXU operands.
    w1r = jnp.pad(params["w1"].reshape(K1, P),
                  ((0, 0), (0, Pp - P))).astype(jnp.bfloat16)
    w2r = jnp.pad(params["w2"].reshape(9, P, P),
                  ((0, 0), (0, Pp - P), (0, Pp - P))).astype(jnp.bfloat16)
    s1, b1 = bn_fold(*params["bn1"], Pp)
    s2, b2 = bn_fold(*params["bn2"], Pp)

    # Shortcut: always a (M, Cin) bf16 stream.  Identity is folded in as a
    # 1x1 conv with the identity matrix (scale=1, bias=0).
    xs = x_nhwc[:, ::stride, ::stride, :].reshape(N, HoWo, Cin).astype(jnp.bfloat16)
    if has_proj:
        ws_src = params["ws"]                               # (Cin, P)
        ss, bs = bn_fold(*params["bns"], Pp)
    else:
        ws_src = jnp.eye(Cin, dtype=jnp.float32)            # (Cin, Cin == P)
        ss = jnp.ones((1, Pp), jnp.float32)
        bs = jnp.zeros((1, Pp), jnp.float32)
    wsr = jnp.pad(ws_src, ((0, 0), (0, Pp - ws_src.shape[1]))).astype(jnp.bfloat16)

    # Honest per-step VMEM accounting + generation-aware limit.
    w_bytes = (K1 * Pp + 9 * Pp * Pp + Cin * Pp) * 2 + 6 * Pp * 4
    single_buf_w = w_bytes > (8 << 20)          # only for production channel counts
    weight_bufs = 1 if single_buf_w else 2
    vmem_limit = _vmem_limit_bytes()
    Nb = _pick_nb(N, HoWo, K1, Cin, Pp, weight_bufs * w_bytes,
                  budget=int(vmem_limit * 0.85))
    grid = (N // Nb,)

    def stream_spec(last):
        return pl.BlockSpec((Nb, HoWo, last), lambda n: (n, 0, 0))

    def const_spec(shape):
        idx_map = lambda n: (0,) * len(shape)
        if single_buf_w:
            try:
                return pl.BlockSpec(shape, idx_map, pipeline_mode=pl.Buffered(1))
            except Exception:
                pass
        return pl.BlockSpec(shape, idx_map)

    in_specs = [
        stream_spec(K1),                                   # xcol
        stream_spec(Cin),                                  # shortcut source
        const_spec((K1, Pp)),                              # w1
        const_spec((1, Pp)), const_spec((1, Pp)),          # s1, b1
        const_spec((9, Pp, Pp)),                           # w2
        const_spec((1, Pp)), const_spec((1, Pp)),          # s2, b2
        const_spec((Cin, Pp)),                             # ws
        const_spec((1, Pp)), const_spec((1, Pp)),          # ss, bs
    ]
    args = [xcol, xs, w1r, s1, b1, w2r, s2, b2, wsr, ss, bs]

    # TODO(synk): for production ResNet shapes (H=56..112, C=64..512) add row
    #             tiling over Ho (1-px halo handled by the roll masks) so
    #             blocks fit v7x's 64 MiB VMEM.
    # TODO(synk): when chaining blocks, emit bf16 NHWC/padded output directly
    #             and skip the slice + NCHW transpose round trip.
    out_flat = pl.pallas_call(
        make_block_kernel(Nb, Ho, Wo, K1, Cin, Pp),
        out_shape=jax.ShapeDtypeStruct((N, HoWo, Pp), jnp.float32),
        grid=grid,
        in_specs=in_specs,
        out_specs=pl.BlockSpec((Nb, HoWo, Pp), lambda n: (n, 0, 0)),
        compiler_params=pltpu.CompilerParams(
            dimension_semantics=("parallel",),     # batch axis: v7x 2-TC split
            vmem_limit_bytes=int(vmem_limit),
        ),
    )(*args)

    out = out_flat[:, :, :P].reshape(N, Ho, Wo, P)
    return jnp.transpose(out, (0, 3, 1, 2)).astype(x_nchw.dtype)  # back to NCHW


# --------------------------------------------------------------------------
# Pure-JAX reference (eval-mode BN).  matmul_dtype=bf16 mirrors the kernel's
# precision choices (bf16 matmul operands, f32 accumulation, f32 BN/ReLU,
# identity shortcut routed through a bf16 identity matmul).
# --------------------------------------------------------------------------
def ref_forward(x_nchw, params, stride, matmul_dtype=jnp.float32):
    def conv(x, w_hwio, s, pad):
        return lax.conv_general_dilated(
            x.astype(matmul_dtype), w_hwio.astype(matmul_dtype),
            window_strides=(s, s), padding=[(pad, pad), (pad, pad)],
            dimension_numbers=("NCHW", "HWIO", "NCHW"),
            preferred_element_type=jnp.float32)

    def bn(x, gamma, beta, mean, var):
        s = gamma / jnp.sqrt(var + EPS)
        b = beta - mean * s
        return x * s[None, :, None, None] + b[None, :, None, None]

    Cin = x_nchw.shape[1]
    P = params["w1"].shape[-1]
    has_proj = (stride != 1) or (Cin != P)

    h1 = jax.nn.relu(bn(conv(x_nchw, params["w1"], stride, 1), *params["bn1"]))
    out = bn(conv(h1, params["w2"], 1, 1), *params["bn2"])
    if has_proj:
        sc = bn(conv(x_nchw, params["ws"][None, None], stride, 0), *params["bns"])
    else:
        # Mirror the kernel: identity shortcut goes through a 1x1 identity
        # matmul in matmul_dtype (exactly x when matmul_dtype == f32).
        sc = conv(x_nchw, jnp.eye(Cin)[None, None], 1, 0)
    return jax.nn.relu(out + sc)


# --------------------------------------------------------------------------
# Deterministic synthetic parameter init
# --------------------------------------------------------------------------
def init_params(key, in_planes, planes, stride):
    ks = jax.random.split(key, 8)

    def bn_params(k):
        k1, k2, k3, k4 = jax.random.split(k, 4)
        gamma = jax.random.uniform(k1, (planes,), jnp.float32, 0.5, 1.5)
        beta = jax.random.normal(k2, (planes,), jnp.float32) * 0.1
        mean = jax.random.normal(k3, (planes,), jnp.float32) * 0.1
        var = jax.random.uniform(k4, (planes,), jnp.float32, 0.5, 1.5)
        return (gamma, beta, mean, var)

    params = {
        "w1": jax.random.normal(ks[0], (3, 3, in_planes, planes), jnp.float32) * 0.1,
        "bn1": bn_params(ks[1]),
        "w2": jax.random.normal(ks[2], (3, 3, planes, planes), jnp.float32) * 0.1,
        "bn2": bn_params(ks[3]),
    }
    if stride != 1 or in_planes != planes:
        params["ws"] = jax.random.normal(ks[4], (in_planes, planes), jnp.float32) * 0.1
        params["bns"] = bn_params(ks[5])
    return params


if __name__ == "__main__":
    _roll_mode()  # probe pltpu.roll once, before any jit trace of the block

    key = jax.random.PRNGKey(0)

    configs = [
        # (in_planes, planes, stride)
        (4, 8, 1),   # projection shortcut (channel change)
        (8, 8, 1),   # identity shortcut
        (4, 8, 2),   # projection shortcut with stride 2
    ]

    ok = True
    for in_planes, planes, stride in configs:
        k_x, k_p, key = jax.random.split(key, 3)
        x = jax.random.normal(k_x, (2, in_planes, 16, 16), jnp.float32)  # NCHW
        params = init_params(k_p, in_planes, planes, stride)

        fwd = jax.jit(functools.partial(basic_block_forward, stride=stride))
        out = np.asarray(jax.block_until_ready(fwd(x, params)))

        # Tight check vs a reference that mirrors the kernel's bf16/f32 split.
        ref_bf = np.asarray(jax.block_until_ready(
            ref_forward(x, params, stride, matmul_dtype=jnp.bfloat16)))
        # Loose check vs the full-f32 PyTorch-equivalent semantics.
        ref_32 = np.asarray(jax.block_until_ready(
            ref_forward(x, params, stride, matmul_dtype=jnp.float32)))

        if not np.allclose(out, ref_bf, atol=3e-3, rtol=3e-3):
            ok = False
            print(f"MISMATCH (bf16-ref) {(in_planes, planes, stride)}: "
                  f"max abs err = {np.max(np.abs(out - ref_bf))}")
        if not np.allclose(out, ref_32, atol=1e-1, rtol=1e-1):
            ok = False
            print(f"MISMATCH (f32-ref)  {(in_planes, planes, stride)}: "
                  f"max abs err = {np.max(np.abs(out - ref_32))}")

    if ok:
        print("KERNEL_OK")
</pallas_src>

<mosaic_0001>
module attributes {stable_mosaic.version = 11 : i64} {
  func.func @probe_kernel(%arg0: memref<16x128xf32, #tpu.memory_space<vmem>>, %arg1: memref<16x128xf32, #tpu.memory_space<vmem>>) attributes {dimension_semantics = [], scalar_prefetch = 0 : i64, scratch_operands = 0 : i64, tpu.core_type = #tpu.core_type<tc>} {
    %c0 = arith.constant 0 : index
    %c0_0 = arith.constant 0 : index
    %0 = vector.load %arg0[%c0, %c0_0] : memref<16x128xf32, #tpu.memory_space<vmem>>, vector<16x128xf32>
    %c1_i32 = arith.constant 1 : i32
    %1 = tpu.dynamic_rotate %0 by %c1_i32 dim 0 : vector<16x128xf32>, i32 -> vector<16x128xf32>
    %c0_1 = arith.constant 0 : index
    %c0_2 = arith.constant 0 : index
    %2 = vector.load %arg1[%c0_1, %c0_2] : memref<16x128xf32, #tpu.memory_space<vmem>>, vector<16x128xf32>
    tpu.vector_store %arg1[%c0_1, %c0_2], %1 {strides = array<i32>} : memref<16x128xf32, #tpu.memory_space<vmem>>, vector<16x128xf32>,
    return
  }
}

module attributes {stable_mosaic.version = 11 : i64} {
  func.func @kernel(%arg0: i32, %arg1: memref<1x256x36xbf16, #tpu.memory_space<vmem>>, %arg2: memref<1x256x4xbf16, #tpu.memory_space<vmem>>, %arg3: memref<36x128xbf16, #tpu.memory_space<vmem>>, %arg4: memref<1x128xf32, #tpu.memory_space<vmem>>, %arg5: memref<1x128xf32, #tpu.memory_space<vmem>>, %arg6: memref<9x128x128xbf16, #tpu.memory_space<vmem>>, %arg7: memref<1x128xf32, #tpu.memory_space<vmem>>, %arg8: memref<1x128xf32, #tpu.memory_space<vmem>>, %arg9: memref<4x128xbf16, #tpu.memory_space<vmem>>, %arg10: memref<1x128xf32, #tpu.memory_space<vmem>>, %arg11: memref<1x128xf32, #tpu.memory_space<vmem>>, %arg12: memref<1x256x128xf32, #tpu.memory_space<vmem>>) attributes {dimension_semantics = [#tpu.dimension_semantics<parallel>], iteration_bounds = array<i64: 2>, scalar_prefetch = 0 : i64, scratch_operands = 0 : i64, tpu.core_type = #tpu.core_type<tc>, window_params = [{transform_indices = @transform_0, window_bounds = array<i64: 1, 256, 36>}, {transform_indices = @transform_1, window_bounds = array<i64: 1, 256, 4>}, {pipeline_mode = #tpu.pipeline_mode<synchronous>, transform_indices = @transform_2, window_bounds = array<i64: 36, 128>}, {pipeline_mode = #tpu.pipeline_mode<synchronous>, transform_indices = @transform_3, window_bounds = array<i64: 1, 128>}, {pipeline_mode = #tpu.pipeline_mode<synchronous>, transform_indices = @transform_4, window_bounds = array<i64: 1, 128>}, {pipeline_mode = #tpu.pipeline_mode<synchronous>, transform_indices = @transform_5, window_bounds = array<i64: 9, 128, 128>}, {pipeline_mode = #tpu.pipeline_mode<synchronous>, transform_indices = @transform_6, window_bounds = array<i64: 1, 128>}, {pipeline_mode = #tpu.pipeline_mode<synchronous>, transform_indices = @transform_7, window_bounds = array<i64: 1, 128>}, {pipeline_mode = #tpu.pipeline_mode<synchronous>, transform_indices = @transform_8, window_bounds = array<i64: 4, 128>}, {pipeline_mode = #tpu.pipeline_mode<synchronous>, transform_indices = @transform_9, window_bounds = array<i64: 1, 128>}, {pipeline_mode = #tpu.pipeline_mode<synchronous>, transform_indices = @transform_10, window_bounds = array<i64: 1, 128>}, {transform_indices = @transform_11, window_bounds = array<i64: 1, 256, 128>}]} {
    %c0 = arith.constant 0 : index
    %c0_0 = arith.constant 0 : index
    %c0_1 = arith.constant 0 : index
    %0 = vector.load %arg1[%c0, %c0_0, %c0_1] : memref<1x256x36xbf16, #tpu.memory_space<vmem>>, vector<1x256x36xbf16>
    %1 = vector.shape_cast %0 : vector<1x256x36xbf16> to vector<256x36xbf16>
    %c0_2 = arith.constant 0 : index
    %c0_3 = arith.constant 0 : index
    %2 = vector.load %arg3[%c0_2, %c0_3] : memref<36x128xbf16, #tpu.memory_space<vmem>>, vector<36x128xbf16>
    %cst = arith.constant dense<0.000000e+00> : vector<256x128xf32>
    %3 = tpu.matmul %1, %2, %cst {dimension_numbers = #tpu.dot_dimension_numbers<[1], [0], [0], [1], [0, 0, 1, 1], [], []>} : vector<256x36xbf16>, vector<36x128xbf16>, vector<256x128xf32> -> vector<256x128xf32>
    %c0_4 = arith.constant 0 : index
    %c0_5 = arith.constant 0 : index
    %4 = vector.load %arg4[%c0_4, %c0_5] : memref<1x128xf32, #tpu.memory_space<vmem>>, vector<1x128xf32>
    %5 = vector.broadcast %4 : vector<1x128xf32> to vector<256x128xf32>
    %6 = arith.mulf %3, %5 : vector<256x128xf32>
    %c0_6 = arith.constant 0 : index
    %c0_7 = arith.constant 0 : index
    %7 = vector.load %arg5[%c0_6, %c0_7] : memref<1x128xf32, #tpu.memory_space<vmem>>, vector<1x128xf32>
    %8 = vector.broadcast %7 : vector<1x128xf32> to vector<256x128xf32>
    %9 = arith.addf %6, %8 : vector<256x128xf32>
    %cst_8 = arith.constant 0.000000e+00 : f32
    %10 = vector.broadcast %cst_8 : f32 to vector<256x128xf32>
    %11 = arith.maximumf %9, %10 : vector<256x128xf32>
    %12 = arith.truncf %11 : vector<256x128xf32> to vector<256x128xbf16>
    %13 = tpu.iota {dimensions = array<i32: 0>} : vector<256x1xi32>
    %c256_i32 = arith.constant 256 : i32
    %c0_i32 = arith.constant 0 : i32
    %14 = arith.cmpi eq, %c256_i32, %c0_i32 : i32
    %c1_i32 = arith.constant 1 : i32
    %15 = arith.select %14, %c1_i32, %c256_i32 : i32
    %16 = vector.broadcast %15 : i32 to vector<256x1xi32>
    %17 = arith.remsi %13, %16 : vector<256x1xi32>
    %c0_i32_9 = arith.constant 0 : i32
    %18 = vector.broadcast %c0_i32_9 : i32 to vector<256x1xi32>
    %19 = arith.cmpi ne, %17, %18 : vector<256x1xi32>
    %c0_i32_10 = arith.constant 0 : i32
    %20 = vector.broadcast %c0_i32_10 : i32 to vector<256x1xi32>
    %21 = arith.cmpi slt, %17, %20 : vector<256x1xi32>
    %c0_i32_11 = arith.constant 0 : i32
    %22 = arith.cmpi slt, %15, %c0_i32_11 : i32
    %23 = vector.broadcast %22 : i1 to vector<256x1xi1>
    %24 = vector.broadcast %23 : vector<256x1xi1> to vector<256x1xi1>
    %25 = arith.xori %21, %24 : vector<256x1xi1>
    %26 = arith.andi %25, %19 : vector<256x1xi1>
    %27 = vector.broadcast %15 : i32 to vector<256x1xi32>
    %28 = arith.addi %17, %27 : vector<256x1xi32>
    %29 = arith.select %26, %28, %17 : vector<256x1xi1>, vector<256x1xi32>
    %c16_i32 = arith.constant 16 : i32
    %c0_i32_12 = arith.constant 0 : i32
    %30 = arith.cmpi eq, %c16_i32, %c0_i32_12 : i32
    %c1_i32_13 = arith.constant 1 : i32
    %31 = arith.select %30, %c1_i32_13, %c16_i32 : i32
    %32 = vector.broadcast %31 : i32 to vector<256x1xi32>
    %33 = arith.remsi %13, %32 : vector<256x1xi32>
    %c0_i32_14 = arith.constant 0 : i32
    %34 = vector.broadcast %c0_i32_14 : i32 to vector<256x1xi32>
    %35 = arith.cmpi ne, %33, %34 : vector<256x1xi32>
    %c0_i32_15 = arith.constant 0 : i32
    %36 = vector.broadcast %c0_i32_15 : i32 to vector<256x1xi32>
    %37 = arith.cmpi slt, %33, %36 : vector<256x1xi32>
    %c0_i32_16 = arith.constant 0 : i32
    %38 = arith.cmpi slt, %31, %c0_i32_16 : i32
    %39 = vector.broadcast %38 : i1 to vector<256x1xi1>
    %40 = vector.broadcast %39 : vector<256x1xi1> to vector<256x1xi1>
    %41 = arith.xori %37, %40 : vector<256x1xi1>
    %42 = arith.andi %41, %35 : vector<256x1xi1>
    %43 = vector.broadcast %31 : i32 to vector<256x1xi32>
    %44 = arith.addi %33, %43 : vector<256x1xi32>
    %45 = arith.select %42, %44, %33 : vector<256x1xi1>, vector<256x1xi32>
    %c16_i32_17 = arith.constant 16 : i32
    %46 = vector.broadcast %c16_i32_17 : i32 to vector<256x1xi32>
    %47 = arith.cmpi sge, %29, %46 : vector<256x1xi32>
    %c240_i32 = arith.constant 240 : i32
    %48 = vector.broadcast %c240_i32 : i32 to vector<256x1xi32>
    %49 = arith.cmpi slt, %29, %48 : vector<256x1xi32>
    %c1_i32_18 = arith.constant 1 : i32
    %50 = vector.broadcast %c1_i32_18 : i32 to vector<256x1xi32>
    %51 = arith.cmpi sge, %45, %50 : vector<256x1xi32>
    %c14_i32 = arith.constant 14 : i32
    %52 = vector.broadcast %c14_i32 : i32 to vector<256x1xi32>
    %53 = arith.cmpi sle, %45, %52 : vector<256x1xi32>
    %cst_19 = arith.constant 0.000000e+00 : f32
    %54 = vector.broadcast %cst_19 : f32 to vector<256x128xf32>
    %c0_20 = arith.constant 0 : index
    %c0_21 = arith.constant 0 : index
    %c0_22 = arith.constant 0 : index
    %55 = vector.load %arg6[%c0_20, %c0_21, %c0_22] : memref<9x128x128xbf16, #tpu.memory_space<vmem>>, vector<1x128x128xbf16>
    %56 = vector.shape_cast %55 : vector<1x128x128xbf16> to vector<128x128xbf16>
    %cst_23 = arith.constant dense<0.000000e+00> : vector<256x128xf32>
    %57 = tpu.matmul %12, %56, %cst_23 {dimension_numbers = #tpu.dot_dimension_numbers<[1], [0], [0], [1], [0, 0, 1, 1], [], []>} : vector<256x128xbf16>, vector<128x128xbf16>, vector<256x128xf32> -> vector<256x128xf32>
    %58 = vector.extract_strided_slice %57 {offsets = [239, 0], sizes = [17, 128], strides = [1, 1]} : vector<256x128xf32> to vector<17x128xf32>
    %59 = vector.extract_strided_slice %57 {offsets = [0, 0], sizes = [239, 128], strides = [1, 1]} : vector<256x128xf32> to vector<239x128xf32>
    %60 = tpu.concatenate %58, %59 in 0 : vector<17x128xf32>, vector<239x128xf32> -> vector<256x128xf32>
    %61 = arith.andi %47, %51 : vector<256x1xi1>
    %cst_24 = arith.constant 0.000000e+00 : f32
    %62 = vector.shape_cast %61 : vector<256x1xi1> to vector<256x1xi1>
    %63 = vector.broadcast %62 : vector<256x1xi1> to vector<256x128xi1>
    %64 = vector.broadcast %cst_24 : f32 to vector<256x128xf32>
    %65 = arith.select %63, %60, %64 : vector<256x128xi1>, vector<256x128xf32>
    %66 = arith.addf %54, %65 : vector<256x128xf32>
    %c1 = arith.constant 1 : index
    %c0_25 = arith.constant 0 : index
    %c0_26 = arith.constant 0 : index
    %67 = vector.load %arg6[%c1, %c0_25, %c0_26] : memref<9x128x128xbf16, #tpu.memory_space<vmem>>, vector<1x128x128xbf16>
    %68 = vector.shape_cast %67 : vector<1x128x128xbf16> to vector<128x128xbf16>
    %cst_27 = arith.constant dense<0.000000e+00> : vector<256x128xf32>
    %69 = tpu.matmul %12, %68, %cst_27 {dimension_numbers = #tpu.dot_dimension_numbers<[1], [0], [0], [1], [0, 0, 1, 1], [], []>} : vector<256x128xbf16>, vector<128x128xbf16>, vector<256x128xf32> -> vector<256x128xf32>
    %70 = vector.extract_strided_slice %69 {offsets = [240, 0], sizes = [16, 128], strides = [1, 1]} : vector<256x128xf32> to vector<16x128xf32>
    %71 = vector.extract_strided_slice %69 {offsets = [0, 0], sizes = [240, 128], strides = [1, 1]} : vector<256x128xf32> to vector<240x128xf32>
    %72 = tpu.concatenate %70, %71 in 0 : vector<16x128xf32>, vector<240x128xf32> -> vector<256x128xf32>
    %cst_28 = arith.constant 0.000000e+00 : f32
    %73 = vector.shape_cast %47 : vector<256x1xi1> to vector<256x1xi1>
    %74 = vector.broadcast %73 : vector<256x1xi1> to vector<256x128xi1>
    %75 = vector.broadcast %cst_28 : f32 to vector<256x128xf32>
    %76 = arith.select %74, %72, %75 : vector<256x128xi1>, vector<256x128xf32>
    %77 = arith.addf %66, %76 : vector<256x128xf32>
    %c2 = arith.constant 2 : index
    %c0_29 = arith.constant 0 : index
    %c0_30 = arith.constant 0 : index
    %78 = vector.load %arg6[%c2, %c0_29, %c0_30] : memref<9x128x128xbf16, #tpu.memory_space<vmem>>, vector<1x128x128xbf16>
    %79 = vector.shape_cast %78 : vector<1x128x128xbf16> to vector<128x128xbf16>
    %cst_31 = arith.constant dense<0.000000e+00> : vector<256x128xf32>
    %80 = tpu.matmul %12, %79, %cst_31 {dimension_numbers = #tpu.dot_dimension_numbers<[1], [0], [0], [1], [0, 0, 1, 1], [], []>} : vector<256x128xbf16>, vector<128x128xbf16>, vector<256x128xf32> -> vector<256x128xf32>
    %81 = vector.extract_strided_slice %80 {offsets = [241, 0], sizes = [15, 128], strides = [1, 1]} : vector<256x128xf32> to vector<15x128xf32>
    %82 = vector.extract_strided_slice %80 {offsets = [0, 0], sizes = [241, 128], strides = [1, 1]} : vector<256x128xf32> to vector<241x128xf32>
    %83 = tpu.concatenate %81, %82 in 0 : vector<15x128xf32>, vector<241x128xf32> -> vector<256x128xf32>
    %84 = arith.andi %47, %53 : vector<256x1xi1>
    %cst_32 = arith.constant 0.000000e+00 : f32
    %85 = vector.shape_cast %84 : vector<256x1xi1> to vector<256x1xi1>
    %86 = vector.broadcast %85 : vector<256x1xi1> to vector<256x128xi1>
    %87 = vector.broadcast %cst_32 : f32 to vector<256x128xf32>
    %88 = arith.select %86, %83, %87 : vector<256x128xi1>, vector<256x128xf32>
    %89 = arith.addf %77, %88 : vector<256x128xf32>
    %c3 = arith.constant 3 : index
    %c0_33 = arith.constant 0 : index
    %c0_34 = arith.constant 0 : index
    %90 = vector.load %arg6[%c3, %c0_33, %c0_34] : memref<9x128x128xbf16, #tpu.memory_space<vmem>>, vector<1x128x128xbf16>
    %91 = vector.shape_cast %90 : vector<1x128x128xbf16> to vector<128x128xbf16>
    %cst_35 = arith.constant dense<0.000000e+00> : vector<256x128xf32>
    %92 = tpu.matmul %12, %91, %cst_35 {dimension_numbers = #tpu.dot_dimension_numbers<[1], [0], [0], [1], [0, 0, 1, 1], [], []>} : vector<256x128xbf16>, vector<128x128xbf16>, vector<256x128xf32> -> vector<256x128xf32>
    %93 = vector.extract_strided_slice %92 {offsets = [255, 0], sizes = [1, 128], strides = [1, 1]} : vector<256x128xf32> to vector<1x128xf32>
    %94 = vector.extract_strided_slice %92 {offsets = [0, 0], sizes = [255, 128], strides = [1, 1]} : vector<256x128xf32> to vector<255x128xf32>
    %95 = tpu.concatenate %93, %94 in 0 : vector<1x128xf32>, vector<255x128xf32> -> vector<256x128xf32>
    %cst_36 = arith.constant 0.000000e+00 : f32
    %96 = vector.shape_cast %51 : vector<256x1xi1> to vector<256x1xi1>
    %97 = vector.broadcast %96 : vector<256x1xi1> to vector<256x128xi1>
    %98 = vector.broadcast %cst_36 : f32 to vector<256x128xf32>
    %99 = arith.select %97, %95, %98 : vector<256x128xi1>, vector<256x128xf32>
    %100 = arith.addf %89, %99 : vector<256x128xf32>
    %c4 = arith.constant 4 : index
    %c0_37 = arith.constant 0 : index
    %c0_38 = arith.constant 0 : index
    %101 = vector.load %arg6[%c4, %c0_37, %c0_38] : memref<9x128x128xbf16, #tpu.memory_space<vmem>>, vector<1x128x128xbf16>
    %102 = vector.shape_cast %101 : vector<1x128x128xbf16> to vector<128x128xbf16>
    %cst_39 = arith.constant dense<0.000000e+00> : vector<256x128xf32>
    %103 = tpu.matmul %12, %102, %cst_39 {dimension_numbers = #tpu.dot_dimension_numbers<[1], [0], [0], [1], [0, 0, 1, 1], [], []>} : vector<256x128xbf16>, vector<128x128xbf16>, vector<256x128xf32> -> vector<256x128xf32>
    %104 = arith.addf %100, %103 : vector<256x128xf32>
    %c5 = arith.constant 5 : index
    %c0_40 = arith.constant 0 : index
    %c0_41 = arith.constant 0 : index
    %105 = vector.load %arg6[%c5, %c0_40, %c0_41] : memref<9x128x128xbf16, #tpu.memory_space<vmem>>, vector<1x128x128xbf16>
    %106 = vector.shape_cast %105 : vector<1x128x128xbf16> to vector<128x128xbf16>
    %cst_42 = arith.constant dense<0.000000e+00> : vector<256x128xf32>
    %107 = tpu.matmul %12, %106, %cst_42 {dimension_numbers = #tpu.dot_dimension_numbers<[1], [0], [0], [1], [0, 0, 1, 1], [], []>} : vector<256x128xbf16>, vector<128x128xbf16>, vector<256x128xf32> -> vector<256x128xf32>
    %108 = vector.extract_strided_slice %107 {offsets = [1, 0], sizes = [255, 128], strides = [1, 1]} : vector<256x128xf32> to vector<255x128xf32>
    %109 = vector.extract_strided_slice %107 {offsets = [0, 0], sizes = [1, 128], strides = [1, 1]} : vector<256x128xf32> to vector<1x128xf32>
    %110 = tpu.concatenate %108, %109 in 0 : vector<255x128xf32>, vector<1x128xf32> -> vector<256x128xf32>
    %cst_43 = arith.constant 0.000000e+00 : f32
    %111 = vector.shape_cast %53 : vector<256x1xi1> to vector<256x1xi1>
    %112 = vector.broadcast %111 : vector<256x1xi1> to vector<256x128xi1>
    %113 = vector.broadcast %cst_43 : f32 to vector<256x128xf32>
    %114 = arith.select %112, %110, %113 : vector<256x128xi1>, vector<256x128xf32>
    %115 = arith.addf %104, %114 : vector<256x128xf32>
    %c6 = arith.constant 6 : index
    %c0_44 = arith.constant 0 : index
    %c0_45 = arith.constant 0 : index
    %116 = vector.load %arg6[%c6, %c0_44, %c0_45] : memref<9x128x128xbf16, #tpu.memory_space<vmem>>, vector<1x128x128xbf16>
    %117 = vector.shape_cast %116 : vector<1x128x128xbf16> to vector<128x128xbf16>
    %cst_46 = arith.constant dense<0.000000e+00> : vector<256x128xf32>
    %118 = tpu.matmul %12, %117, %cst_46 {dimension_numbers = #tpu.dot_dimension_numbers<[1], [0], [0], [1], [0, 0, 1, 1], [], []>} : vector<256x128xbf16>, vector<128x128xbf16>, vector<256x128xf32> -> vector<256x128xf32>
    %119 = vector.extract_strided_slice %118 {offsets = [15, 0], sizes = [241, 128], strides = [1, 1]} : vector<256x128xf32> to vector<241x128xf32>
    %120 = vector.extract_strided_slice %118 {offsets = [0, 0], sizes = [15, 128], strides = [1, 1]} : vector<256x128xf32> to vector<15x128xf32>
    %121 = tpu.concatenate %119, %120 in 0 : vector<241x128xf32>, vector<15x128xf32> -> vector<256x128xf32>
    %122 = arith.andi %49, %51 : vector<256x1xi1>
    %cst_47 = arith.constant 0.000000e+00 : f32
    %123 = vector.shape_cast %122 : vector<256x1xi1> to vector<256x1xi1>
    %124 = vector.broadcast %123 : vector<256x1xi1> to vector<256x128xi1>
    %125 = vector.broadcast %cst_47 : f32 to vector<256x128xf32>
    %126 = arith.select %124, %121, %125 : vector<256x128xi1>, vector<256x128xf32>
    %127 = arith.addf %115, %126 : vector<256x128xf32>
    %c7 = arith.constant 7 : index
    %c0_48 = arith.constant 0 : index
    %c0_49 = arith.constant 0 : index
    %128 = vector.load %arg6[%c7, %c0_48, %c0_49] : memref<9x128x128xbf16, #tpu.memory_space<vmem>>, vector<1x128x128xbf16>
    %129 = vector.shape_cast %128 : vector<1x128x128xbf16> to vector<128x128xbf16>
    %cst_50 = arith.constant dense<0.000000e+00> : vector<256x128xf32>
    %130 = tpu.matmul %12, %129, %cst_50 {dimension_numbers = #tpu.dot_dimension_numbers<[1], [0], [0], [1], [0, 0, 1, 1], [], []>} : vector<256x128xbf16>, vector<128x128xbf16>, vector<256x128xf32> -> vector<256x128xf32>
    %131 = vector.extract_strided_slice %130 {offsets = [16, 0], sizes = [240, 128], strides = [1, 1]} : vector<256x128xf32> to vector<240x128xf32>
    %132 = vector.extract_strided_slice %130 {offsets = [0, 0], sizes = [16, 128], strides = [1, 1]} : vector<256x128xf32> to vector<16x128xf32>
    %133 = tpu.concatenate %131, %132 in 0 : vector<240x128xf32>, vector<16x128xf32> -> vector<256x128xf32>
    %cst_51 = arith.constant 0.000000e+00 : f32
    %134 = vector.shape_cast %49 : vector<256x1xi1> to vector<256x1xi1>
    %135 = vector.broadcast %134 : vector<256x1xi1> to vector<256x128xi1>
    %136 = vector.broadcast %cst_51 : f32 to vector<256x128xf32>
    %137 = arith.select %135, %133, %136 : vector<256x128xi1>, vector<256x128xf32>
    %138 = arith.addf %127, %137 : vector<256x128xf32>
    %c8 = arith.constant 8 : index
    %c0_52 = arith.constant 0 : index
    %c0_53 = arith.constant 0 : index
    %139 = vector.load %arg6[%c8, %c0_52, %c0_53] : memref<9x128x128xbf16, #tpu.memory_space<vmem>>, vector<1x128x128xbf16>
    %140 = vector.shape_cast %139 : vector<1x128x128xbf16> to vector<128x128xbf16>
    %cst_54 = arith.constant dense<0.000000e+00> : vector<256x128xf32>
    %141 = tpu.matmul %12, %140, %cst_54 {dimension_numbers = #tpu.dot_dimension_numbers<[1], [0], [0], [1], [0, 0, 1, 1], [], []>} : vector<256x128xbf16>, vector<128x128xbf16>, vector<256x128xf32> -> vector<256x128xf32>
    %142 = vector.extract_strided_slice %141 {offsets = [17, 0], sizes = [239, 128], strides = [1, 1]} : vector<256x128xf32> to vector<239x128xf32>
    %143 = vector.extract_strided_slice %141 {offsets = [0, 0], sizes = [17, 128], strides = [1, 1]} : vector<256x128xf32> to vector<17x128xf32>
    %144 = tpu.concatenate %142, %143 in 0 : vector<239x128xf32>, vector<17x128xf32> -> vector<256x128xf32>
    %145 = arith.andi %49, %53 : vector<256x1xi1>
    %cst_55 = arith.constant 0.000000e+00 : f32
    %146 = vector.shape_cast %145 : vector<256x1xi1> to vector<256x1xi1>
    %147 = vector.broadcast %146 : vector<256x1xi1> to vector<256x128xi1>
    %148 = vector.broadcast %cst_55 : f32 to vector<256x128xf32>
    %149 = arith.select %147, %144, %148 : vector<256x128xi1>, vector<256x128xf32>
    %150 = arith.addf %138, %149 : vector<256x128xf32>
    %c0_56 = arith.constant 0 : index
    %c0_57 = arith.constant 0 : index
    %151 = vector.load %arg7[%c0_56, %c0_57] : memref<1x128xf32, #tpu.memory_space<vmem>>, vector<1x128xf32>
    %152 = vector.broadcast %151 : vector<1x128xf32> to vector<256x128xf32>
    %153 = arith.mulf %150, %152 : vector<256x128xf32>
    %c0_58 = arith.constant 0 : index
    %c0_59 = arith.constant 0 : index
    %154 = vector.load %arg8[%c0_58, %c0_59] : memref<1x128xf32, #tpu.memory_space<vmem>>, vector<1x128xf32>
    %155 = vector.broadcast %154 : vector<1x128xf32> to vector<256x128xf32>
    %156 = arith.addf %153, %155 : vector<256x128xf32>
    %c0_60 = arith.constant 0 : index
    %c0_61 = arith.constant 0 : index
    %c0_62 = arith.constant 0 : index
    %157 = vector.load %arg2[%c0_60, %c0_61, %c0_62] : memref<1x256x4xbf16, #tpu.memory_space<vmem>>, vector<1x256x4xbf16>
    %158 = vector.shape_cast %157 : vector<1x256x4xbf16> to vector<256x4xbf16>
    %c0_63 = arith.constant 0 : index
    %c0_64 = arith.constant 0 : index
    %159 = vector.load %arg9[%c0_63, %c0_64] : memref<4x128xbf16, #tpu.memory_space<vmem>>, vector<4x128xbf16>
    %cst_65 = arith.constant dense<0.000000e+00> : vector<256x128xf32>
    %160 = tpu.matmul %158, %159, %cst_65 {dimension_numbers = #tpu.dot_dimension_numbers<[1], [0], [0], [1], [0, 0, 1, 1], [], []>} : vector<256x4xbf16>, vector<4x128xbf16>, vector<256x128xf32> -> vector<256x128xf32>
    %c0_66 = arith.constant 0 : index
    %c0_67 = arith.constant 0 : index
    %161 = vector.load %arg10[%c0_66, %c0_67] : memref<1x128xf32, #tpu.memory_space<vmem>>, vector<1x128xf32>
    %162 = vector.broadcast %161 : vector<1x128xf32> to vector<256x128xf32>
    %163 = arith.mulf %160, %162 : vector<256x128xf32>
    %c0_68 = arith.constant 0 : index
    %c0_69 = arith.constant 0 : index
    %164 = vector.load %arg11[%c0_68, %c0_69] : memref<1x128xf32, #tpu.memory_space<vmem>>, vector<1x128xf32>
    %165 = vector.broadcast %164 : vector<1x128xf32> to vector<256x128xf32>
    %166 = arith.addf %163, %165 : vector<256x128xf32>
    %167 = arith.addf %156, %166 : vector<256x128xf32>
    %cst_70 = arith.constant 0.000000e+00 : f32
    %168 = vector.broadcast %cst_70 : f32 to vector<256x128xf32>
    %169 = arith.maximumf %167, %168 : vector<256x128xf32>
    %170 = vector.shape_cast %169 : vector<256x128xf32> to vector<1x256x128xf32>
    %c0_71 = arith.constant 0 : index
    %c0_72 = arith.constant 0 : index
    %c0_73 = arith.constant 0 : index
    %171 = vector.load %arg12[%c0_71, %c0_72, %c0_73] : memref<1x256x128xf32, #tpu.memory_space<vmem>>, vector<1x256x128xf32>
    tpu.vector_store %arg12[%c0_71, %c0_72, %c0_73], %170 {strides = array<i32>} : memref<1x256x128xf32, #tpu.memory_space<vmem>>, vector<1x256x128xf32>,
    return
  }
  func.func @transform_0(%arg0: i32) -> (i32, i32, i32) {
    %c0_i32 = arith.constant 0 : i32
    %c0_i32_0 = arith.constant 0 : i32
    %c0_i32_1 = arith.constant 0 : i32
    return %arg0, %c0_i32, %c0_i32_0 : i32, i32, i32
  }
  func.func @transform_1(%arg0: i32) -> (i32, i32, i32) {
    %c0_i32 = arith.constant 0 : i32
    %c0_i32_0 = arith.constant 0 : i32
    %c0_i32_1 = arith.constant 0 : i32
    return %arg0, %c0_i32, %c0_i32_0 : i32, i32, i32
  }
  func.func @transform_2(%arg0: i32) -> (i32, i32) {
    %c0_i32 = arith.constant 0 : i32
    %c0_i32_0 = arith.constant 0 : i32
    %c0_i32_1 = arith.constant 0 : i32
    return %c0_i32, %c0_i32_0 : i32, i32
  }
  func.func @transform_3(%arg0: i32) -> (i32, i32) {
    %c0_i32 = arith.constant 0 : i32
    %c0_i32_0 = arith.constant 0 : i32
    %c0_i32_1 = arith.constant 0 : i32
    return %c0_i32, %c0_i32_0 : i32, i32
  }
  func.func @transform_4(%arg0: i32) -> (i32, i32) {
    %c0_i32 = arith.constant 0 : i32
    %c0_i32_0 = arith.constant 0 : i32
    %c0_i32_1 = arith.constant 0 : i32
    return %c0_i32, %c0_i32_0 : i32, i32
  }
  func.func @transform_5(%arg0: i32) -> (i32, i32, i32) {
    %c0_i32 = arith.constant 0 : i32
    %c0_i32_0 = arith.constant 0 : i32
    %c0_i32_1 = arith.constant 0 : i32
    %c0_i32_2 = arith.constant 0 : i32
    return %c0_i32, %c0_i32_0, %c0_i32_1 : i32, i32, i32
  }
  func.func @transform_6(%arg0: i32) -> (i32, i32) {
    %c0_i32 = arith.constant 0 : i32
    %c0_i32_0 = arith.constant 0 : i32
    %c0_i32_1 = arith.constant 0 : i32
    return %c0_i32, %c0_i32_0 : i32, i32
  }
  func.func @transform_7(%arg0: i32) -> (i32, i32) {
    %c0_i32 = arith.constant 0 : i32
    %c0_i32_0 = arith.constant 0 : i32
    %c0_i32_1 = arith.constant 0 : i32
    return %c0_i32, %c0_i32_0 : i32, i32
  }
  func.func @transform_8(%arg0: i32) -> (i32, i32) {
    %c0_i32 = arith.constant 0 : i32
    %c0_i32_0 = arith.constant 0 : i32
    %c0_i32_1 = arith.constant 0 : i32
    return %c0_i32, %c0_i32_0 : i32, i32
  }
  func.func @transform_9(%arg0: i32) -> (i32, i32) {
    %c0_i32 = arith.constant 0 : i32
    %c0_i32_0 = arith.constant 0 : i32
    %c0_i32_1 = arith.constant 0 : i32
    return %c0_i32, %c0_i32_0 : i32, i32
  }
  func.func @transform_10(%arg0: i32) -> (i32, i32) {
    %c0_i32 = arith.constant 0 : i32
    %c0_i32_0 = arith.constant 0 : i32
    %c0_i32_1 = arith.constant 0 : i32
    return %c0_i32, %c0_i32_0 : i32, i32
  }
  func.func @transform_11(%arg0: i32) -> (i32, i32, i32) {
    %c0_i32 = arith.constant 0 : i32
    %c0_i32_0 = arith.constant 0 : i32
    %c0_i32_1 = arith.constant 0 : i32
    return %arg0, %c0_i32, %c0_i32_0 : i32, i32, i32
  }
}

</mosaic_0001>

<llo_original>
// kernel: tpu_custom_call.1
$region0: #{tpu_custom_call.1}
  #allocation0 [shape = 'u32[]', space=smem, size = 0x4, offset = 0x4, fixed_abs, tag = 'smem constant byte address 0x4 - core index']
  #allocation1 [shape = 'u32[144,128]{1,0:T(1,128)}', space=vmem, size = 0x12000, scoped, tag = 'internal scratch']
  %s0 = inlined_call_operand.hbm [shape: f32[16,128], index: 0, kind: input, shape index: {}]
  %s1 = inlined_call_operand.hbm [shape: f32[16,128], index: 1, kind: output, shape index: {}]
  %s2 = sld [smem:[#allocation0]]
  $region18: #{tpu_custom_call.1} parent=0
    _
  %s4 = ssub.s32 1, %s2
  %s5 = scalar_select 0, %s4, %s2
  $region1: #{tpu_custom_call.1} parent=0
    #allocation2 [shape = 'u8[8192]{0}', space=vmem, size = 0x2000, scoped, tag = 'input window, operand 0, single buffered']
    #allocation3 [shape = 's32[1]{0}', space=sflag, size = 0x4, scoped, tag = 'scoped memory for tpu_custom_call.1']
    #allocation4 [shape = 's32[1]{0}', space=sflag, size = 0x4, scoped, tag = 'scoped memory for tpu_custom_call.1']
    #allocation5 [shape = 'u8[8192]{0}', space=vmem, size = 0x2000, scoped, tag = 'output window, operand 0, single buffered']
    %6 = vsyncpa [#allocation3], 0
    %7 = vsyncpa [#allocation4], 0
    // Predicated region
    $region2: #{tpu_custom_call.1} parent=1 // pred_check
      _
    $region3: #{tpu_custom_call.1} parent=1 // pred_check_branch
      %9 = sbr.rel (0) target = $region5
    $region4: #{tpu_custom_call.1} parent=1 // pred_region
      %s11 = ssub.s32 256, 256
      %12 = vsyncadd [#allocation3], %s11
      %s13 = sshll.u32 [#allocation2], 4
      %s14 = int_to_ptr.vmem [resolvable:$true] %s13
      %19 = dma.hbm_to_vmem [thread:$0]  %s0, 256, %s14, [#allocation3], 128, 128, 8
    $region5: #{tpu_custom_call.1} parent=1 // pred_fallthru
      _
    // Predicated region
    $region6: #{tpu_custom_call.1} parent=1 // pred_check
      _
    $region7: #{tpu_custom_call.1} parent=1 // pred_check_branch
      %21 = sbr.rel (0) target = $region9
    $region8: #{tpu_custom_call.1} parent=1 // pred_region
      %22 = dma.done [#allocation3], 256
    $region9: #{tpu_custom_call.1} parent=1 // pred_fallthru
      _
    %v23 = vld [vmem:[#allocation2] sm:$0xff]
    %v24 = vld [vmem:[#allocation2 + $0x8] sm:$0xff]
    %v25 = vrot.slane %v23, 7
    %v26 = vrot.slane %v24, 7
    %v27 = vlaneseq
    %v28 = vshrl.u32 %v27, 7
    %vm29 = vcmp.lt.s32.totalorder %v28, 1
    %v30 = vsel %vm29, %v25, %v26
    %v31 = vsel %vm29, %v26, %v25
    %32 = vst [vmem:[#allocation5] sm:$0xff] %v31
    %33 = vst [vmem:[#allocation5 + $0x8] sm:$0xff] %v30
    // Predicated region
    $region10: #{tpu_custom_call.1} parent=1 // pred_check
      _
    $region11: #{tpu_custom_call.1} parent=1 // pred_check_branch
      %35 = sbr.rel (0) target = $region13
    $region12: #{tpu_custom_call.1} parent=1 // pred_region
      %s37 = ssub.s32 256, 256
      %38 = vsyncadd [#allocation4], %s37
      %s39 = sshll.u32 [#allocation5], 4
      %s40 = int_to_ptr.vmem [resolvable:$true] %s39
      %45 = dma.vmem_to_hbm [thread:$0]  %s40, 256, %s1, [#allocation4], 128, 128, 8
    $region13: #{tpu_custom_call.1} parent=1 // pred_fallthru
      _
    // Predicated region
    $region14: #{tpu_custom_call.1} parent=1 // pred_check
      _
    $region15: #{tpu_custom_call.1} parent=1 // pred_check_branch
      %47 = sbr.rel (0) target = $region17
    $region16: #{tpu_custom_call.1} parent=1 // pred_region
      %48 = dma.done [#allocation4], 256
    $region17: #{tpu_custom_call.1} parent=1 // pred_fallthru
      _
    %49 = vsyncpa [#allocation3], 1
    %50 = vsyncpa [#allocation4], 1

// kernel: basic_block_forward.1
$region0: #{basic_block_forward.1}
  #allocation0 [shape = 'u32[]', space=smem, size = 0x4, offset = 0x4, fixed_abs, tag = 'smem constant byte address 0x4 - core index']
  #allocation1 [shape = 'u32[144,128]{1,0:T(1,128)}', space=vmem, size = 0x12000, scoped, tag = 'internal scratch']
  %s0 = inlined_call_operand.vmem [shape: bf16[2,256,36], index: 0, kind: input, shape index: {}]
  %s1 = inlined_call_operand.vmem [shape: bf16[2,256,4], index: 1, kind: input, shape index: {}]
  %s2 = inlined_call_operand.vmem [shape: bf16[36,128], index: 2, kind: input, shape index: {}]
  %s3 = inlined_call_operand.vmem [shape: f32[1,128], index: 3, kind: input, shape index: {}]
  %s4 = inlined_call_operand.vmem [shape: f32[1,128], index: 4, kind: input, shape index: {}]
  %s5 = inlined_call_operand.vmem [shape: bf16[9,128,128], index: 5, kind: input, shape index: {}]
  %s6 = inlined_call_operand.vmem [shape: f32[1,128], index: 6, kind: input, shape index: {}]
  %s7 = inlined_call_operand.vmem [shape: f32[1,128], index: 7, kind: input, shape index: {}]
  %s8 = inlined_call_operand.vmem [shape: bf16[4,128], index: 8, kind: input, shape index: {}]
  %s9 = inlined_call_operand.vmem [shape: f32[1,128], index: 9, kind: input, shape index: {}]
  %s10 = inlined_call_operand.vmem [shape: f32[1,128], index: 10, kind: input, shape index: {}]
  %s11 = inlined_call_operand.vmem [shape: f32[2,256,128], index: 11, kind: output, shape index: {}]
  %s12 = sld [smem:[#allocation0]]
  $region77: #{basic_block_forward.1} parent=0
    _
  %s14 = ssub.s32 1, %s12
  %s15 = scalar_select 0, %s14, %s12
  loop: start=0, step=1, limit=4
  $region2: #{basic_block_forward.1} parent=0 // loop_pre_header
    _
  $region3: #{basic_block_forward.1} parent=0 // loop_header
    %s17 = sphi 0, %s21
    %p18 = scmp.ge.s32.totalorder %s17, 4
    %s27 = sphi 0, %s29
    %s30 = sphi 0, %s27
    %s31 = sphi 0, %s30
    %s47 = sphi 0, %s31
    %s53 = sphi 0, %s55
    %s56 = sphi 0, %s53
    %s57 = sphi 0, %s56
    %s73 = sphi 0, %s57
    %s77 = sphi 0, %s77
    %s79 = sphi 0, %s77
    %s80 = sphi 0, %s79
    %s94 = sphi 0, %s80
    %s98 = sphi 0, %s98
    %s100 = sphi 0, %s98
    %s101 = sphi 0, %s100
    %s115 = sphi 0, %s101
    %s119 = sphi 0, %s119
    %s121 = sphi 0, %s119
    %s122 = sphi 0, %s121
    %s136 = sphi 0, %s122
    %s140 = sphi 0, %s140
    %s142 = sphi 0, %s140
    %s143 = sphi 0, %s142
    %s157 = sphi 0, %s143
    %s161 = sphi 0, %s161
    %s163 = sphi 0, %s161
    %s164 = sphi 0, %s163
    %s178 = sphi 0, %s164
    %s182 = sphi 0, %s182
    %s184 = sphi 0, %s182
    %s185 = sphi 0, %s184
    %s199 = sphi 0, %s185
    %s203 = sphi 0, %s203
    %s205 = sphi 0, %s203
    %s206 = sphi 0, %s205
    %s220 = sphi 0, %s206
    %s224 = sphi 0, %s224
    %s226 = sphi 0, %s224
    %s227 = sphi 0, %s226
    %s241 = sphi 0, %s227
    %s245 = sphi 0, %s245
    %s247 = sphi 0, %s245
    %s248 = sphi 0, %s247
    %s262 = sphi 0, %s248
    %s268 = sphi 0, %s270
    %s271 = sphi 0, %s268
    %s272 = sphi 0, %s271
    %s288 = sphi 0, %s272
  $region4: #{basic_block_forward.1} parent=0 // loop_header_branch
    %20 = sbr.rel (%p18) target = $region8
  $region5: #{basic_block_forward.1} parent=0 // loop_body
    %s22 = ssub.s32 %s17, 1
    %s23 = ssub.s32 %s17, 2
    %s24 = sadd.s32 %s17, 1
    %s25 = ssub.s32 %s17, %s24
    %p26 = scmp.eq.s32.totalorder %s25, 0
    %s28 = sadd.s32 %s27, 1
    %s29 = scalar_select %p26, %s27, %s28
    %p32 = pneg %p26
    %p33 = scmp.eq.s32.totalorder %s17, 1
    %p34 = por %p32, %p33
    %p35 = scmp.ne.s32.totalorder %s27, %s30
    %p36 = scmp.eq.s32.totalorder %s17, 0
    %p37 = por %p35, %p36
    %p38 = scmp.ne.s32.totalorder %s27, %s30
    %p39 = scmp.eq.s32.totalorder %s22, 1
    %p40 = por %p38, %p39
    %p41 = scmp.ne.s32.totalorder %s30, %s31
    %p42 = scmp.eq.s32.totalorder %s22, 0
    %p43 = por %p41, %p42
    %p44 = scmp.ne.s32.totalorder %s30, %s31
    %p45 = scmp.eq.s32.totalorder %s23, 1
    %p46 = por %p44, %p45
    %p48 = scmp.ne.s32.totalorder %s31, %s47
    %p49 = scmp.eq.s32.totalorder %s23, 0
    %p50 = por %p48, %p49
    %s51 = ssub.s32 %s17, %s24
    %p52 = scmp.eq.s32.totalorder %s51, 0
    %s54 = sadd.s32 %s53, 1
    %s55 = scalar_select %p52, %s53, %s54
    %p58 = pneg %p52
    %p59 = scmp.eq.s32.totalorder %s17, 1
    %p60 = por %p58, %p59
    %p61 = scmp.ne.s32.totalorder %s53, %s56
    %p62 = scmp.eq.s32.totalorder %s17, 0
    %p63 = por %p61, %p62
    %p64 = scmp.ne.s32.totalorder %s53, %s56
    %p65 = scmp.eq.s32.totalorder %s22, 1
    %p66 = por %p64, %p65
    %p67 = scmp.ne.s32.totalorder %s56, %s57
    %p68 = scmp.eq.s32.totalorder %s22, 0
    %p69 = por %p67, %p68
    %p70 = scmp.ne.s32.totalorder %s56, %s57
    %p71 = scmp.eq.s32.totalorder %s23, 1
    %p72 = por %p70, %p71
    %p74 = scmp.ne.s32.totalorder %s57, %s73
    %p75 = scmp.eq.s32.totalorder %s23, 0
    %p76 = por %p74, %p75
    %s78 = sadd.s32 %s77, 1
    %p81 = scmp.eq.s32.totalorder %s17, 1
    %p82 = scmp.ne.s32.totalorder %s77, %s79
    %p83 = scmp.eq.s32.totalorder %s17, 0
    %p84 = por %p82, %p83
    %p85 = scmp.ne.s32.totalorder %s77, %s79
    %p86 = scmp.eq.s32.totalorder %s22, 1
    %p87 = por %p85, %p86
    %p88 = scmp.ne.s32.totalorder %s79, %s80
    %p89 = scmp.eq.s32.totalorder %s22, 0
    %p90 = por %p88, %p89
    %p91 = scmp.ne.s32.totalorder %s79, %s80
    %p92 = scmp.eq.s32.totalorder %s23, 1
    %p93 = por %p91, %p92
    %p95 = scmp.ne.s32.totalorder %s80, %s94
    %p96 = scmp.eq.s32.totalorder %s23, 0
    %p97 = por %p95, %p96
    %s99 = sadd.s32 %s98, 1
    %p102 = scmp.eq.s32.totalorder %s17, 1
    %p103 = scmp.ne.s32.totalorder %s98, %s100
    %p104 = scmp.eq.s32.totalorder %s17, 0
    %p105 = por %p103, %p104
    %p106 = scmp.ne.s32.totalorder %s98, %s100
    %p107 = scmp.eq.s32.totalorder %s22, 1
    %p108 = por %p106, %p107
    %p109 = scmp.ne.s32.totalorder %s100, %s101
    %p110 = scmp.eq.s32.totalorder %s22, 0
    %p111 = por %p109, %p110
    %p112 = scmp.ne.s32.totalorder %s100, %s101
    %p113 = scmp.eq.s32.totalorder %s23, 1
    %p114 = por %p112, %p113
    %p116 = scmp.ne.s32.totalorder %s101, %s115
    %p117 = scmp.eq.s32.totalorder %s23, 0
    %p118 = por %p116, %p117
    %s120 = sadd.s32 %s119, 1
    %p123 = scmp.eq.s32.totalorder %s17, 1
    %p124 = scmp.ne.s32.totalorder %s119, %s121
    %p125 = scmp.eq.s32.totalorder %s17, 0
    %p126 = por %p124, %p125
    %p127 = scmp.ne.s32.totalorder %s119, %s121
    %p128 = scmp.eq.s32.totalorder %s22, 1
    %p129 = por %p127, %p128
    %p130 = scmp.ne.s32.totalorder %s121, %s122
    %p131 = scmp.eq.s32.totalorder %s22, 0
    %p132 = por %p130, %p131
    %p133 = scmp.ne.s32.totalorder %s121, %s122
    %p134 = scmp.eq.s32.totalorder %s23, 1
    %p135 = por %p133, %p134
    %p137 = scmp.ne.s32.totalorder %s122, %s136
    %p138 = scmp.eq.s32.totalorder %s23, 0
    %p139 = por %p137, %p138
    %s141 = sadd.s32 %s140, 1
    %p144 = scmp.eq.s32.totalorder %s17, 1
    %p145 = scmp.ne.s32.totalorder %s140, %s142
    %p146 = scmp.eq.s32.totalorder %s17, 0
    %p147 = por %p145, %p146
    %p148 = scmp.ne.s32.totalorder %s140, %s142
    %p149 = scmp.eq.s32.totalorder %s22, 1
    %p150 = por %p148, %p149
    %p151 = scmp.ne.s32.totalorder %s142, %s143
    %p152 = scmp.eq.s32.totalorder %s22, 0
    %p153 = por %p151, %p152
    %p154 = scmp.ne.s32.totalorder %s142, %s143
    %p155 = scmp.eq.s32.totalorder %s23, 1
    %p156 = por %p154, %p155
    %p158 = scmp.ne.s32.totalorder %s143, %s157
    %p159 = scmp.eq.s32.totalorder %s23, 0
    %p160 = por %p158, %p159
    %s162 = sadd.s32 %s161, 1
    %p165 = scmp.eq.s32.totalorder %s17, 1
    %p166 = scmp.ne.s32.totalorder %s161, %s163
    %p167 = scmp.eq.s32.totalorder %s17, 0
    %p168 = por %p166, %p167
    %p169 = scmp.ne.s32.totalorder %s161, %s163
    %p170 = scmp.eq.s32.totalorder %s22, 1
    %p171 = por %p169, %p170
    %p172 = scmp.ne.s32.totalorder %s163, %s164
    %p173 = scmp.eq.s32.totalorder %s22, 0
    %p174 = por %p172, %p173
    %p175 = scmp.ne.s32.totalorder %s163, %s164
    %p176 = scmp.eq.s32.totalorder %s23, 1
    %p177 = por %p175, %p176
    %p179 = scmp.ne.s32.totalorder %s164, %s178
    %p180 = scmp.eq.s32.totalorder %s23, 0
    %p181 = por %p179, %p180
    %s183 = sadd.s32 %s182, 1
    %p186 = scmp.eq.s32.totalorder %s17, 1
    %p187 = scmp.ne.s32.totalorder %s182, %s184
    %p188 = scmp.eq.s32.totalorder %s17, 0
    %p189 = por %p187, %p188
    %p190 = scmp.ne.s32.totalorder %s182, %s184
    %p191 = scmp.eq.s32.totalorder %s22, 1
    %p192 = por %p190, %p191
    %p193 = scmp.ne.s32.totalorder %s184, %s185
    %p194 = scmp.eq.s32.totalorder %s22, 0
    %p195 = por %p193, %p194
    %p196 = scmp.ne.s32.totalorder %s184, %s185
    %p197 = scmp.eq.s32.totalorder %s23, 1
    %p198 = por %p196, %p197
    %p200 = scmp.ne.s32.totalorder %s185, %s199
    %p201 = scmp.eq.s32.totalorder %s23, 0
    %p202 = por %p200, %p201
    %s204 = sadd.s32 %s203, 1
    %p207 = scmp.eq.s32.totalorder %s17, 1
    %p208 = scmp.ne.s32.totalorder %s203, %s205
    %p209 = scmp.eq.s32.totalorder %s17, 0
    %p210 = por %p208, %p209
    %p211 = scmp.ne.s32.totalorder %s203, %s205
    %p212 = scmp.eq.s32.totalorder %s22, 1
    %p213 = por %p211, %p212
    %p214 = scmp.ne.s32.totalorder %s205, %s206
    %p215 = scmp.eq.s32.totalorder %s22, 0
    %p216 = por %p214, %p215
    %p217 = scmp.ne.s32.totalorder %s205, %s206
    %p218 = scmp.eq.s32.totalorder %s23, 1
    %p219 = por %p217, %p218
    %p221 = scmp.ne.s32.totalorder %s206, %s220
    %p222 = scmp.eq.s32.totalorder %s23, 0
    %p223 = por %p221, %p222
    %s225 = sadd.s32 %s224, 1
    %p228 = scmp.eq.s32.totalorder %s17, 1
    %p229 = scmp.ne.s32.totalorder %s224, %s226
    %p230 = scmp.eq.s32.totalorder %s17, 0
    %p231 = por %p229, %p230
    %p232 = scmp.ne.s32.totalorder %s224, %s226
    %p233 = scmp.eq.s32.totalorder %s22, 1
    %p234 = por %p232, %p233
    %p235 = scmp.ne.s32.totalorder %s226, %s227
    %p236 = scmp.eq.s32.totalorder %s22, 0
    %p237 = por %p235, %p236
    %p238 = scmp.ne.s32.totalorder %s226, %s227
    %p239 = scmp.eq.s32.totalorder %s23, 1
    %p240 = por %p238, %p239
    %p242 = scmp.ne.s32.totalorder %s227, %s241
    %p243 = scmp.eq.s32.totalorder %s23, 0
    %p244 = por %p242, %p243
    %s246 = sadd.s32 %s245, 1
    %p249 = scmp.eq.s32.totalorder %s17, 1
    %p250 = scmp.ne.s32.totalorder %s245, %s247
    %p251 = scmp.eq.s32.totalorder %s17, 0
    %p252 = por %p250, %p251
    %p253 = scmp.ne.s32.totalorder %s245, %s247
    %p254 = scmp.eq.s32.totalorder %s22, 1
    %p255 = por %p253, %p254
    %p256 = scmp.ne.s32.totalorder %s247, %s248
    %p257 = scmp.eq.s32.totalorder %s22, 0
    %p258 = por %p256, %p257
    %p259 = scmp.ne.s32.totalorder %s247, %s248
    %p260 = scmp.eq.s32.totalorder %s23, 1
    %p261 = por %p259, %p260
    %p263 = scmp.ne.s32.totalorder %s248, %s262
    %p264 = scmp.eq.s32.totalorder %s23, 0
    %p265 = por %p263, %p264
    %s266 = ssub.s32 %s17, %s24
    %p267 = scmp.eq.s32.totalorder %s266, 0
    %s269 = sadd.s32 %s268, 1
    %s270 = scalar_select %p267, %s268, %s269
    %p273 = pneg %p267
    %p274 = scmp.eq.s32.totalorder %s17, 1
    %p275 = por %p273, %p274
    %p276 = scmp.ne.s32.totalorder %s268, %s271
    %p277 = scmp.eq.s32.totalorder %s17, 0
    %p278 = por %p276, %p277
    %p279 = scmp.ne.s32.totalorder %s268, %s271
    %p280 = scmp.eq.s32.totalorder %s22, 1
    %p281 = por %p279, %p280
    %p282 = scmp.ne.s32.totalorder %s271, %s272
    %p283 = scmp.eq.s32.totalorder %s22, 0
    %p284 = por %p282, %p283
    %p285 = scmp.ne.s32.totalorder %s271, %s272
    %p286 = scmp.eq.s32.totalorder %s23, 1
    %p287 = por %p285, %p286
    %p289 = scmp.ne.s32.totalorder %s272, %s288
    %p290 = scmp.eq.s32.totalorder %s23, 0
    %p291 = por %p289, %p290
    %p292 = scmp.le.s32.totalorder 1, %s17
    %p293 = scmp.lt.s32.totalorder %s17, 3
    %p294 = pnand %p292, %p293
    %p295 = pneg %p294
    // Predicated region
    $region9: #{basic_block_forward.1} parent=5 // pred_check
      _
    $region10: #{basic_block_forward.1} parent=5 // pred_check_branch
      %297 = sbr.rel (%p294) target = $region12
    $region11: #{basic_block_forward.1} parent=5 // pred_region
      %s298 = ssub.s32 %s17, 1
      // Predicated region
      $region13: #{basic_block_forward.1} parent=11 // pred_check
        %p299 = pneg %p90
      $region14: #{basic_block_forward.1} parent=11 // pred_check_branch
        %301 = sbr.rel (%p299) target = $region16
      $region15: #{basic_block_forward.1} parent=11 // pred_region
        _
      $region16: #{basic_block_forward.1} parent=11 // pred_fallthru
        _
      // Predicated region
      $region17: #{basic_block_forward.1} parent=11 // pred_check
        %p302 = pneg %p111
      $region18: #{basic_block_forward.1} parent=11 // pred_check_branch
        %304 = sbr.rel (%p302) target = $region20
      $region19: #{basic_block_forward.1} parent=11 // pred_region
        _
      $region20: #{basic_block_forward.1} parent=11 // pred_fallthru
        _
      // Predicated region
      $region21: #{basic_block_forward.1} parent=11 // pred_check
        %p305 = pneg %p132
      $region22: #{basic_block_forward.1} parent=11 // pred_check_branch
        %307 = sbr.rel (%p305) target = $region24
      $region23: #{basic_block_forward.1} parent=11 // pred_region
        _
      $region24: #{basic_block_forward.1} parent=11 // pred_fallthru
        _
      // Predicated region
      $region25: #{basic_block_forward.1} parent=11 // pred_check
        %p308 = pneg %p153
      $region26: #{basic_block_forward.1} parent=11 // pred_check_branch
        %310 = sbr.rel (%p308) target = $region28
      $region27: #{basic_block_forward.1} parent=11 // pred_region
        _
      $region28: #{basic_block_forward.1} parent=11 // pred_fallthru
        _
      // Predicated region
      $region29: #{basic_block_forward.1} parent=11 // pred_check
        %p311 = pneg %p174
      $region30: #{basic_block_forward.1} parent=11 // pred_check_branch
        %313 = sbr.rel (%p311) target = $region32
      $region31: #{basic_block_forward.1} parent=11 // pred_region
        _
      $region32: #{basic_block_forward.1} parent=11 // pred_fallthru
        _
      // Predicated region
      $region33: #{basic_block_forward.1} parent=11 // pred_check
        %p314 = pneg %p195
      $region34: #{basic_block_forward.1} parent=11 // pred_check_branch
        %316 = sbr.rel (%p314) target = $region36
      $region35: #{basic_block_forward.1} parent=11 // pred_region
        _
      $region36: #{basic_block_forward.1} parent=11 // pred_fallthru
        _
      // Predicated region
      $region37: #{basic_block_forward.1} parent=11 // pred_check
        %p317 = pneg %p216
      $region38: #{basic_block_forward.1} parent=11 // pred_check_branch
        %319 = sbr.rel (%p317) target = $region40
      $region39: #{basic_block_forward.1} parent=11 // pred_region
        _
      $region40: #{basic_block_forward.1} parent=11 // pred_fallthru
        _
      // Predicated region
      $region41: #{basic_block_forward.1} parent=11 // pred_check
        %p320 = pneg %p237
      $region42: #{basic_block_forward.1} parent=11 // pred_check_branch
        %322 = sbr.rel (%p320) target = $region44
      $region43: #{basic_block_forward.1} parent=11 // pred_region
        _
      $region44: #{basic_block_forward.1} parent=11 // pred_fallthru
        _
      // Predicated region
      $region45: #{basic_block_forward.1} parent=11 // pred_check
        %p323 = pneg %p258
      $region46: #{basic_block_forward.1} parent=11 // pred_check_branch
        %325 = sbr.rel (%p323) target = $region48
      $region47: #{basic_block_forward.1} parent=11 // pred_region
        _
      $region48: #{basic_block_forward.1} parent=11 // pred_fallthru
        _
    $region12: #{basic_block_forward.1} parent=5 // pred_fallthru
      _
    %p326 = scmp.lt.s32.totalorder %s17, 2
    // Predicated region
    $region49: #{basic_block_forward.1} parent=5 // pred_check
      %p327 = pneg %p326
    $region50: #{basic_block_forward.1} parent=5 // pred_check_branch
      %329 = sbr.rel (%p327) target = $region52
    $region51: #{basic_block_forward.1} parent=5 // pred_region
      // Predicated region
      $region53: #{basic_block_forward.1} parent=51 // pred_check
        %p330 = pneg %p37
      $region54: #{basic_block_forward.1} parent=51 // pred_check_branch
        %332 = sbr.rel (%p330) target = $region56
      $region55: #{basic_block_forward.1} parent=51 // pred_region
        %p333 = scmp.lt.s32.totalorder %s17, 1
        %s334 = scalar_select %p333, %s17, 1
        %s335 = smul.addr %s334, 32
        %s336 = smul.addr %s335, 4
        %s337 = scalar_lea.vmem %s0, %s336
      $region56: #{basic_block_forward.1} parent=51 // pred_fallthru
        _
      // Predicated region
      $region57: #{basic_block_forward.1} parent=51 // pred_check
        %p338 = pneg %p63
      $region58: #{basic_block_forward.1} parent=51 // pred_check_branch
        %340 = sbr.rel (%p338) target = $region60
      $region59: #{basic_block_forward.1} parent=51 // pred_region
        %p341 = scmp.lt.s32.totalorder %s17, 1
        %s342 = scalar_select %p341, %s17, 1
        %s343 = smul.addr %s342, 32
        %s344 = smul.addr %s343, 4
        %s345 = scalar_lea.vmem %s1, %s344
      $region60: #{basic_block_forward.1} parent=51 // pred_fallthru
        _
    $region52: #{basic_block_forward.1} parent=5 // pred_fallthru
      _
    %p346 = scmp.le.s32.totalorder 1, %s17
    %p347 = scmp.lt.s32.totalorder %s17, 3
    %p348 = pnand %p346, %p347
    %p349 = pneg %p348
    // Predicated region
    $region61: #{basic_block_forward.1} parent=5 // pred_check
      _
    $region62: #{basic_block_forward.1} parent=5 // pred_check_branch
      %351 = sbr.rel (%p348) target = $region64
    $region63: #{basic_block_forward.1} parent=5 // pred_region
      %s352 = ssub.s32 %s17, 1
      %p353 = scmp.lt.s32.totalorder %s22, 1
      %s354 = scalar_select %p353, %s22, 1
      %s355 = smul.addr %s354, 32
      %s356 = smul.addr %s355, 4
      %s357 = scalar_lea.vmem %s0, %s356
      %p358 = pneg %p43
      %p359 = pneg %p40
      %p360 = scmp.lt.s32.totalorder %s22, 1
      %s361 = scalar_select %p360, %s22, 1
      %s362 = smul.addr %s361, 32
      %s363 = smul.addr %s362, 4
      %s364 = scalar_lea.vmem %s1, %s363
      %p365 = pneg %p69
      %p366 = pneg %p66
      %p367 = pneg %p90
      %p368 = pneg %p87
      %p369 = pneg %p111
      %p370 = pneg %p108
      %p371 = pneg %p132
      %p372 = pneg %p129
      %p373 = pneg %p153
      %p374 = pneg %p150
      %p375 = pneg %p174
      %p376 = pneg %p171
      %p377 = pneg %p195
      %p378 = pneg %p192
      %p379 = pneg %p216
      %p380 = pneg %p213
      %p381 = pneg %p237
      %p382 = pneg %p234
      %p383 = pneg %p258
      %p384 = pneg %p255
      %p385 = pneg %p284
      %p386 = pneg %p281
      %p387 = scmp.lt.s32.totalorder %s22, 1
      %s388 = scalar_select %p387, %s22, 1
      %s389 = smul.addr %s388, 32
      %s390 = smul.addr %s389, 8
      %s391 = scalar_lea.vmem %s11, %s390
      %p392 = scmp.lt.s32.totalorder %s22, 1
      %s393 = scalar_select %p392, %s22, 1
      %s394 = smul.addr %s393, 32
      %s395 = smul.addr %s394, 4
      %s396 = scalar_lea.vmem %s0, %s395
      %p397 = scmp.lt.s32.totalorder %s22, 1
      %s398 = scalar_select %p397, %s22, 1
      %s399 = smul.addr %s398, 32
      %s400 = smul.addr %s399, 4
      %s401 = scalar_lea.vmem %s1, %s400
      %p402 = scmp.lt.s32.totalorder %s22, 1
      %s403 = scalar_select %p402, %s22, 1
      %s404 = smul.addr %s403, 32
      %s405 = smul.addr %s404, 8
      %s406 = scalar_lea.vmem %s11, %s405
      %v408 = vld [vmem:[%s396] sm:$0xf]
      %v409 = vld [vmem:[%s396 + $0x4] sm:$0xf]
      %v410 = vld [vmem:[%s396 + $0x8] sm:$0xf]
      %v411 = vld [vmem:[%s396 + $0xc] sm:$0xf]
      %v412 = vld [vmem:[%s396 + $0x10] sm:$0xf]
      %v413 = vld [vmem:[%s396 + $0x14] sm:$0xf]
      %v414 = vld [vmem:[%s396 + $0x18] sm:$0xf]
      %v415 = vld [vmem:[%s396 + $0x1c] sm:$0xf]
      %v416 = vld [vmem:[%s396 + $0x20] sm:$0xf]
      %v417 = vld [vmem:[%s396 + $0x24] sm:$0xf]
      %v418 = vld [vmem:[%s396 + $0x28] sm:$0xf]
      %v419 = vld [vmem:[%s396 + $0x2c] sm:$0xf]
      %v420 = vld [vmem:[%s396 + $0x30] sm:$0xf]
      %v421 = vld [vmem:[%s396 + $0x34] sm:$0xf]
      %v422 = vld [vmem:[%s396 + $0x38] sm:$0xf]
      %v423 = vld [vmem:[%s396 + $0x3c] sm:$0xf]
      %v424 = vld [vmem:[%s396 + $0x40] sm:$0xf]
      %v425 = vld [vmem:[%s396 + $0x44] sm:$0xf]
      %v426 = vld [vmem:[%s396 + $0x48] sm:$0xf]
      %v427 = vld [vmem:[%s396 + $0x4c] sm:$0xf]
      %v428 = vld [vmem:[%s396 + $0x50] sm:$0xf]
      %v429 = vld [vmem:[%s396 + $0x54] sm:$0xf]
      %v430 = vld [vmem:[%s396 + $0x58] sm:$0xf]
      %v431 = vld [vmem:[%s396 + $0x5c] sm:$0xf]
      %v432 = vld [vmem:[%s396 + $0x60] sm:$0xf]
      %v433 = vld [vmem:[%s396 + $0x64] sm:$0xf]
      %v434 = vld [vmem:[%s396 + $0x68] sm:$0xf]
      %v435 = vld [vmem:[%s396 + $0x6c] sm:$0xf]
      %v436 = vld [vmem:[%s396 + $0x70] sm:$0xf]
      %v437 = vld [vmem:[%s396 + $0x74] sm:$0xf]
      %v438 = vld [vmem:[%s396 + $0x78] sm:$0xf]
      %v439 = vld [vmem:[%s396 + $0x7c] sm:$0xf]
      %v440 = vld [vmem:[%s2] sm:$0xf]
      %v441 = vld [vmem:[%s2 + $0x4] sm:$0xf]
      %v442 = vld [vmem:[%s2 + $0x8] sm:$0xf]
      %v443 = vld [vmem:[%s2 + $0xc] sm:$0xf]
      %v444 = vld [vmem:[%s2 + $0x10] sm:$0x3]
      %v477 = vunpack.c.l.b16 %v408
      %v478 = vunpack.c.l.b16 %v409
      %v479 = vunpack.c.l.b16 %v410
      %v480 = vunpack.c.l.b16 %v411
      %v481 = vunpack.c.l.b16 %v412
      %v482 = vunpack.c.l.b16 %v413
      %v483 = vunpack.c.l.b16 %v414
      %v484 = vunpack.c.l.b16 %v415
      %v485 = vunpack.c.l.b16 %v416
      %v486 = vunpack.c.l.b16 %v417
      %v487 = vunpack.c.l.b16 %v418
      %v488 = vunpack.c.l.b16 %v419
      %v489 = vunpack.c.l.b16 %v420
      %v490 = vunpack.c.l.b16 %v421
      %v491 = vunpack.c.l.b16 %v422
      %v492 = vunpack.c.l.b16 %v423
      %v493 = vunpack.c.l.b16 %v424
      %v494 = vunpack.c.l.b16 %v425
      %v495 = vunpack.c.l.b16 %v426
      %v496 = vunpack.c.l.b16 %v427
      %v497 = vunpack.c.l.b16 %v428
      %v498 = vunpack.c.l.b16 %v429
      %v499 = vunpack.c.l.b16 %v430
      %v500 = vunpack.c.l.b16 %v431
      %v501 = vunpack.c.l.b16 %v432
      %v502 = vunpack.c.l.b16 %v433
      %v503 = vunpack.c.l.b16 %v434
      %v504 = vunpack.c.l.b16 %v435
      %v505 = vunpack.c.l.b16 %v436
      %v506 = vunpack.c.l.b16 %v437
      %v507 = vunpack.c.l.b16 %v438
      %v508 = vunpack.c.l.b16 %v439
      %v509 = vpack.c.b16 %v478, %v477
      %v510 = vpack.c.b16 %v480, %v479
      %v511 = vpack.c.b16 %v482, %v481
      %v512 = vpack.c.b16 %v484, %v483
      %v513 = vpack.c.b16 %v486, %v485
      %v514 = vpack.c.b16 %v488, %v487
      %v515 = vpack.c.b16 %v490, %v489
      %v516 = vpack.c.b16 %v492, %v491
      %v517 = vpack.c.b16 %v494, %v493
      %v518 = vpack.c.b16 %v496, %v495
      %v519 = vpack.c.b16 %v498, %v497
      %v520 = vpack.c.b16 %v500, %v499
      %v521 = vpack.c.b16 %v502, %v501
      %v522 = vpack.c.b16 %v504, %v503
      %v523 = vpack.c.b16 %v506, %v505
      %v524 = vpack.c.b16 %v508, %v507
      %v530 = vunpack.c.l.b16 %v440
      %v531 = vunpack.c.l.b16 %v441
      %v532 = vunpack.c.l.b16 %v442
      %v533 = vunpack.c.l.b16 %v443
      %v534 = vunpack.c.l.b16 %v444
      %v535 = vpack.c.b16 %v531, %v530
      %v536 = vpack.c.b16 %v533, %v532
      %v537 = vpack.c.b16 %v534, %v534
      %vm540 = vcmask 293888
      %v542 = vsel %vm540, %v509, 0
      %v545 = vsel %vm540, %v510, 0
      %v548 = vsel %vm540, %v511, 0
      %v551 = vsel %vm540, %v512, 0
      %v554 = vsel %vm540, %v513, 0
      %v557 = vsel %vm540, %v514, 0
      %v560 = vsel %vm540, %v515, 0
      %v563 = vsel %vm540, %v516, 0
      %v566 = vsel %vm540, %v517, 0
      %v569 = vsel %vm540, %v518, 0
      %v572 = vsel %vm540, %v519, 0
      %v575 = vsel %vm540, %v520, 0
      %v578 = vsel %vm540, %v521, 0
      %v581 = vsel %vm540, %v522, 0
      %v584 = vsel %vm540, %v523, 0
      %v587 = vsel %vm540, %v524, 0
      %vm589 = vcmask 1041408
      %v591 = vsel %vm589, %v537, 0
      %593 = vmatprep.subr.bf16.mxu0 0
      %594 = vmatpush1.bf16.msra.mxu0 %v535
      %595 = vmatprep.subr.bf16.mxu0 0
      %596 = vmatpush1.bf16.msra.mxu0 %v536
      %597 = vmatprep.subr.bf16.mxu0 0
      %598 = vmatpush1.bf16.msra.mxu0 %v591
      %599 = vmatprep.subr.bf16.mxu0 0
      %600 = vmatpush1.bf16.msra.mxu0 0
      %601 = vmatprep.subr.bf16.mxu0 0
      %602 = vmatpush1.bf16.msra.mxu0 0
      %603 = vmatprep.subr.bf16.mxu0 0
      %604 = vmatpush1.bf16.msra.mxu0 0
      %605 = vmatprep.subr.bf16.mxu0 0
      %606 = vmatpush1.bf16.msra.mxu0 0
      %607 = vmatprep.subr.bf16.mxu0 0
      %608 = vmatpush1.bf16.msra.mxu0 0
      %609 = vmatprep.subr.bf16.mxu0 0
      %610 = vmatpush1.bf16.msra.mxu0 0
      %611 = vmatprep.subr.bf16.mxu0 0
      %612 = vmatpush1.bf16.msra.mxu0 0
      %613 = vmatprep.subr.bf16.mxu0 0
      %614 = vmatpush1.bf16.msra.mxu0 0
      %615 = vmatprep.subr.bf16.mxu0 0
      %616 = vmatpush1.bf16.msra.mxu0 0
      %617 = vmatprep.subr.bf16.mxu0 0
      %618 = vmatpush1.bf16.msra.mxu0 0
      %619 = vmatprep.subr.bf16.mxu0 0
      %620 = vmatpush1.bf16.msra.mxu0 0
      %621 = vmatprep.subr.bf16.mxu0 0
      %622 = vmatpush1.bf16.msra.mxu0 0
      %623 = vmatprep.subr.bf16.mxu0 0
      %624 = vmatpush1.bf16.msra.mxu0 0
      %625 = vmatprep.mubr.bf16.mxu0 0
      %626 = vmatmul.mubr.bf16.gmra.mrb[0].mxu0 %v542
      %v627 = vpop.f32.mrb[0].mxu0
      %v628 = vadd.f32 0.0, %v627
      %v629 = vpop.f32.mrb[0].mxu0
      %v630 = vpop.f32.mrb[0].mxu0
      %v631 = vadd.f32 0.0, %v630
      %v632 = vpop.f32.mrb[0].mxu0
      %633 = vmatprep.mubr.bf16.mxu0 0
      %634 = vmatmul.mubr.bf16.gmra.mrb[0].mxu0 %v545
      %v635 = vpop.f32.mrb[0].mxu0
      %v636 = vadd.f32 0.0, %v635
      %v637 = vpop.f32.mrb[0].mxu0
      %v638 = vpop.f32.mrb[0].mxu0
      %v639 = vadd.f32 0.0, %v638
      %v640 = vpop.f32.mrb[0].mxu0
      %641 = vmatprep.mubr.bf16.mxu0 0
      %642 = vmatmul.mubr.bf16.gmra.mrb[0].mxu0 %v548
      %v643 = vpop.f32.mrb[0].mxu0
      %v644 = vadd.f32 0.0, %v643
      %v645 = vpop.f32.mrb[0].mxu0
      %v646 = vpop.f32.mrb[0].mxu0
      %v647 = vadd.f32 0.0, %v646
      %v648 = vpop.f32.mrb[0].mxu0
      %649 = vmatprep.mubr.bf16.mxu0 0
      %650 = vmatmul.mubr.bf16.gmra.mrb[0].mxu0 %v551
      %v651 = vpop.f32.mrb[0].mxu0
      %v652 = vadd.f32 0.0, %v651
      %v653 = vpop.f32.mrb[0].mxu0
      %v654 = vpop.f32.mrb[0].mxu0
      %v655 = vadd.f32 0.0, %v654
      %v656 = vpop.f32.mrb[0].mxu0
      %657 = vmatprep.mubr.bf16.mxu0 0
      %658 = vmatmul.mubr.bf16.gmra.mrb[0].mxu0 %v554
      %v659 = vpop.f32.mrb[0].mxu0
      %v660 = vadd.f32 0.0, %v659
      %v661 = vpop.f32.mrb[0].mxu0
      %v662 = vpop.f32.mrb[0].mxu0
      %v663 = vadd.f32 0.0, %v662
      %v664 = vpop.f32.mrb[0].mxu0
      %665 = vmatprep.mubr.bf16.mxu0 0
      %666 = vmatmul.mubr.bf16.gmra.mrb[0].mxu0 %v557
      %v667 = vpop.f32.mrb[0].mxu0
      %v668 = vadd.f32 0.0, %v667
      %v669 = vpop.f32.mrb[0].mxu0
      %v670 = vpop.f32.mrb[0].mxu0
      %v671 = vadd.f32 0.0, %v670
      %v672 = vpop.f32.mrb[0].mxu0
      %673 = vmatprep.mubr.bf16.mxu0 0
      %674 = vmatmul.mubr.bf16.gmra.mrb[0].mxu0 %v560
      %v675 = vpop.f32.mrb[0].mxu0
      %v676 = vadd.f32 0.0, %v675
      %v677 = vpop.f32.mrb[0].mxu0
      %v678 = vpop.f32.mrb[0].mxu0
      %v679 = vadd.f32 0.0, %v678
      %v680 = vpop.f32.mrb[0].mxu0
      %681 = vmatprep.mubr.bf16.mxu0 0
      %682 = vmatmul.mubr.bf16.gmra.mrb[0].mxu0 %v563
      %v683 = vpop.f32.mrb[0].mxu0
      %v684 = vadd.f32 0.0, %v683
      %v685 = vpop.f32.mrb[0].mxu0
      %v686 = vpop.f32.mrb[0].mxu0
      %v687 = vadd.f32 0.0, %v686
      %v688 = vpop.f32.mrb[0].mxu0
      %689 = vmatprep.mubr.bf16.mxu0 0
      %690 = vmatmul.mubr.bf16.gmra.mrb[0].mxu0 %v566
      %v691 = vpop.f32.mrb[0].mxu0
      %v692 = vadd.f32 0.0, %v691
      %v693 = vpop.f32.mrb[0].mxu0
      %v694 = vpop.f32.mrb[0].mxu0
      %v695 = vadd.f32 0.0, %v694
      %v696 = vpop.f32.mrb[0].mxu0
      %697 = vmatprep.mubr.bf16.mxu0 0
      %698 = vmatmul.mubr.bf16.gmra.mrb[0].mxu0 %v569
      %v699 = vpop.f32.mrb[0].mxu0
      %v700 = vadd.f32 0.0, %v699
      %v701 = vpop.f32.mrb[0].mxu0
      %v702 = vpop.f32.mrb[0].mxu0
      %v703 = vadd.f32 0.0, %v702
      %v704 = vpop.f32.mrb[0].mxu0
      %705 = vmatprep.mubr.bf16.mxu0 0
      %706 = vmatmul.mubr.bf16.gmra.mrb[0].mxu0 %v572
      %v707 = vpop.f32.mrb[0].mxu0
      %v708 = vadd.f32 0.0, %v707
      %v709 = vpop.f32.mrb[0].mxu0
      %v710 = vpop.f32.mrb[0].mxu0
      %v711 = vadd.f32 0.0, %v710
      %v712 = vpop.f32.mrb[0].mxu0
      %713 = vmatprep.mubr.bf16.mxu0 0
      %714 = vmatmul.mubr.bf16.gmra.mrb[0].mxu0 %v575
      %v715 = vpop.f32.mrb[0].mxu0
      %v716 = vadd.f32 0.0, %v715
      %v717 = vpop.f32.mrb[0].mxu0
      %v718 = vpop.f32.mrb[0].mxu0
      %v719 = vadd.f32 0.0, %v718
      %v720 = vpop.f32.mrb[0].mxu0
      %721 = vmatprep.mubr.bf16.mxu0 0
      %722 = vmatmul.mubr.bf16.gmra.mrb[0].mxu0 %v578
      %v723 = vpop.f32.mrb[0].mxu0
      %v724 = vadd.f32 0.0, %v723
      %v725 = vpop.f32.mrb[0].mxu0
      %v726 = vpop.f32.mrb[0].mxu0
      %v727 = vadd.f32 0.0, %v726
      %v728 = vpop.f32.mrb[0].mxu0
      %729 = vmatprep.mubr.bf16.mxu0 0
      %730 = vmatmul.mubr.bf16.gmra.mrb[0].mxu0 %v581
      %v731 = vpop.f32.mrb[0].mxu0
      %v732 = vadd.f32 0.0, %v731
      %v733 = vpop.f32.mrb[0].mxu0
      %v734 = vpop.f32.mrb[0].mxu0
      %v735 = vadd.f32 0.0, %v734
      %v736 = vpop.f32.mrb[0].mxu0
      %737 = vmatprep.mubr.bf16.mxu0 0
      %738 = vmatmul.mubr.bf16.gmra.mrb[0].mxu0 %v584
      %v739 = vpop.f32.mrb[0].mxu0
      %v740 = vadd.f32 0.0, %v739
      %v741 = vpop.f32.mrb[0].mxu0
      %v742 = vpop.f32.mrb[0].mxu0
      %v743 = vadd.f32 0.0, %v742
      %v744 = vpop.f32.mrb[0].mxu0
      %745 = vmatprep.mubr.bf16.mxu0 0
      %746 = vmatmul.mubr.bf16.gmra.mrb[0].mxu0 %v587
      %v747 = vpop.f32.mrb[0].mxu0
      %v748 = vadd.f32 0.0, %v747
      %v749 = vpop.f32.mrb[0].mxu0
      %v750 = vpop.f32.mrb[0].mxu0
      %v751 = vadd.f32 0.0, %v750
      %v752 = vpop.f32.mrb[0].mxu0
      %753 = vdwg.mxu0
      %v754 = vld [vmem:[%s3] sm:$0x1]
      %v756 = vlaneseq
      %v757 = vshrl.u32 %v756, 7
      %v758 = vsub.s32 0, %v757
      %v759 = vrot.slane %v754, %v758
      %v761 = vmul.f32 %v628, %v759
      %v762 = vmul.f32 %v631, %v759
      %v763 = vmul.f32 %v636, %v759
      %v764 = vmul.f32 %v639, %v759
      %v765 = vmul.f32 %v644, %v759
      %v766 = vmul.f32 %v647, %v759
      %v767 = vmul.f32 %v652, %v759
      %v768 = vmul.f32 %v655, %v759
      %v769 = vmul.f32 %v660, %v759
      %v770 = vmul.f32 %v663, %v759
      %v771 = vmul.f32 %v668, %v759
      %v772 = vmul.f32 %v671, %v759
      %v773 = vmul.f32 %v676, %v759
      %v774 = vmul.f32 %v679, %v759
      %v775 = vmul.f32 %v684, %v759
      %v776 = vmul.f32 %v687, %v759
      %v777 = vmul.f32 %v692, %v759
      %v778 = vmul.f32 %v695, %v759
      %v779 = vmul.f32 %v700, %v759
      %v780 = vmul.f32 %v703, %v759
      %v781 = vmul.f32 %v708, %v759
      %v782 = vmul.f32 %v711, %v759
      %v783 = vmul.f32 %v716, %v759
      %v784 = vmul.f32 %v719, %v759
      %v785 = vmul.f32 %v724, %v759
      %v786 = vmul.f32 %v727, %v759
      %v787 = vmul.f32 %v732, %v759
      %v788 = vmul.f32 %v735, %v759
      %v789 = vmul.f32 %v740, %v759
      %v790 = vmul.f32 %v743, %v759
      %v791 = vmul.f32 %v748, %v759
      %v792 = vmul.f32 %v751, %v759
      %v793 = vld [vmem:[%s4] sm:$0x1]
      %v795 = vlaneseq
      %v796 = vshrl.u32 %v795, 7
      %v797 = vsub.s32 0, %v796
      %v798 = vrot.slane %v793, %v797
      %v800 = vadd.f32 %v761, %v798
      %v801 = vadd.f32 %v762, %v798
      %v802 = vadd.f32 %v763, %v798
      %v803 = vadd.f32 %v764, %v798
      %v804 = vadd.f32 %v765, %v798
      %v805 = vadd.f32 %v766, %v798
      %v806 = vadd.f32 %v767, %v798
      %v807 = vadd.f32 %v768, %v798
      %v808 = vadd.f32 %v769, %v798
      %v809 = vadd.f32 %v770, %v798
      %v810 = vadd.f32 %v771, %v798
      %v811 = vadd.f32 %v772, %v798
      %v812 = vadd.f32 %v773, %v798
      %v813 = vadd.f32 %v774, %v798
      %v814 = vadd.f32 %v775, %v798
      %v815 = vadd.f32 %v776, %v798
      %v816 = vadd.f32 %v777, %v798
      %v817 = vadd.f32 %v778, %v798
      %v818 = vadd.f32 %v779, %v798
      %v819 = vadd.f32 %v780, %v798
      %v820 = vadd.f32 %v781, %v798
      %v821 = vadd.f32 %v782, %v798
      %v822 = vadd.f32 %v783, %v798
      %v823 = vadd.f32 %v784, %v798
      %v824 = vadd.f32 %v785, %v798
      %v825 = vadd.f32 %v786, %v798
      %v826 = vadd.f32 %v787, %v798
      %v827 = vadd.f32 %v788, %v798
      %v828 = vadd.f32 %v789, %v798
      %v829 = vadd.f32 %v790, %v798
      %v830 = vadd.f32 %v791, %v798
      %v831 = vadd.f32 %v792, %v798
      %v832 = vmax.f32 %v800, 0.0
      %v833 = vmax.f32 %v801, 0.0
      %v834 = vmax.f32 %v802, 0.0
      %v835 = vmax.f32 %v803, 0.0
      %v836 = vmax.f32 %v804, 0.0
      %v837 = vmax.f32 %v805, 0.0
      %v838 = vmax.f32 %v806, 0.0
      %v839 = vmax.f32 %v807, 0.0
      %v840 = vmax.f32 %v808, 0.0
      %v841 = vmax.f32 %v809, 0.0
      %v842 = vmax.f32 %v810, 0.0
      %v843 = vmax.f32 %v811, 0.0
      %v844 = vmax.f32 %v812, 0.0
      %v845 = vmax.f32 %v813, 0.0
      %v846 = vmax.f32 %v814, 0.0
      %v847 = vmax.f32 %v815, 0.0
      %v848 = vmax.f32 %v816, 0.0
      %v849 = vmax.f32 %v817, 0.0
      %v850 = vmax.f32 %v818, 0.0
      %v851 = vmax.f32 %v819, 0.0
      %v852 = vmax.f32 %v820, 0.0
      %v853 = vmax.f32 %v821, 0.0
      %v854 = vmax.f32 %v822, 0.0
      %v855 = vmax.f32 %v823, 0.0
      %v856 = vmax.f32 %v824, 0.0
      %v857 = vmax.f32 %v825, 0.0
      %v858 = vmax.f32 %v826, 0.0
      %v859 = vmax.f32 %v827, 0.0
      %v860 = vmax.f32 %v828, 0.0
      %v861 = vmax.f32 %v829, 0.0
      %v862 = vmax.f32 %v830, 0.0
      %v863 = vmax.f32 %v831, 0.0
      %v864 = vpack.c.bf16 %v833, %v832
      %v865 = vpack.c.bf16 %v835, %v834
      %v866 = vpack.c.bf16 %v837, %v836
      %v867 = vpack.c.bf16 %v839, %v838
      %v868 = vpack.c.bf16 %v841, %v840
      %v869 = vpack.c.bf16 %v843, %v842
      %v870 = vpack.c.bf16 %v845, %v844
      %v871 = vpack.c.bf16 %v847, %v846
      %v872 = vpack.c.bf16 %v849, %v848
      %v873 = vpack.c.bf16 %v851, %v850
      %v874 = vpack.c.bf16 %v853, %v852
      %v875 = vpack.c.bf16 %v855, %v854
      %v876 = vpack.c.bf16 %v857, %v856
      %v877 = vpack.c.bf16 %v859, %v858
      %v878 = vpack.c.bf16 %v861, %v860
      %v879 = vpack.c.bf16 %v863, %v862
      %v880 = vlaneseq
      %v881 = vshrl.u32 %v880, 7
      %v882 = vadd.s32 %v881, 8
      %v883 = vadd.s32 %v881, 16
      %v884 = vadd.s32 %v881, 24
      %v885 = vadd.s32 %v881, 32
      %v886 = vadd.s32 %v881, 40
      %v887 = vadd.s32 %v881, 48
      %v888 = vadd.s32 %v881, 56
      %v889 = vadd.s32 %v881, 64
      %v890 = vadd.s32 %v881, 72
      %v891 = vadd.s32 %v881, 80
      %v892 = vadd.s32 %v881, 88
      %v893 = vadd.s32 %v881, 96
      %v894 = vadd.s32 %v881, 104
      %v895 = vadd.s32 %v881, 112
      %v896 = vadd.s32 %v881, 120
      %v897 = vadd.s32 %v881, 128
      %v898 = vadd.s32 %v881, 136
      %v899 = vadd.s32 %v881, 144
      %v900 = vadd.s32 %v881, 152
      %v901 = vadd.s32 %v881, 160
      %v902 = vadd.s32 %v881, 168
      %v903 = vadd.s32 %v881, 176
      %v904 = vadd.s32 %v881, 184
      %v905 = vadd.s32 %v881, 192
      %v906 = vadd.s32 %v881, 200
      %v907 = vadd.s32 %v881, 208
      %v908 = vadd.s32 %v881, 216
      %v909 = vadd.s32 %v881, 224
      %v910 = vadd.s32 %v881, 232
      %v911 = vadd.s32 %v881, 240
      %v912 = vadd.s32 %v881, 248
      %vm913 = vcmp.lt.s32.totalorder %v881, 0
      %v914 = vsub.s32 0, %v881
      %v915 = vsel %vm913, %v914, %v881
      %v916 = vshrl.u32 %v915, 8
      %v917 = vand.u32 %v915, 255
      %v918 = vsub.s32 0, %v917
      %v919 = vsel %vm913, %v918, %v917
      %vm920 = vcmp.lt.s32.totalorder %v882, 0
      %v921 = vsub.s32 0, %v882
      %v922 = vsel %vm920, %v921, %v882
      %v923 = vshrl.u32 %v922, 8
      %v924 = vand.u32 %v922, 255
      %v925 = vsub.s32 0, %v924
      %v926 = vsel %vm920, %v925, %v924
      %vm927 = vcmp.lt.s32.totalorder %v883, 0
      %v928 = vsub.s32 0, %v883
      %v929 = vsel %vm927, %v928, %v883
      %v930 = vshrl.u32 %v929, 8
      %v931 = vand.u32 %v929, 255
      %v932 = vsub.s32 0, %v931
      %v933 = vsel %vm927, %v932, %v931
      %vm934 = vcmp.lt.s32.totalorder %v884, 0
      %v935 = vsub.s32 0, %v884
      %v936 = vsel %vm934, %v935, %v884
      %v937 = vshrl.u32 %v936, 8
      %v938 = vand.u32 %v936, 255
      %v939 = vsub.s32 0, %v938
      %v940 = vsel %vm934, %v939, %v938
      %vm941 = vcmp.lt.s32.totalorder %v885, 0
      %v942 = vsub.s32 0, %v885
      %v943 = vsel %vm941, %v942, %v885
      %v944 = vshrl.u32 %v943, 8
      %v945 = vand.u32 %v943, 255
      %v946 = vsub.s32 0, %v945
      %v947 = vsel %vm941, %v946, %v945
      %vm948 = vcmp.lt.s32.totalorder %v886, 0
      %v949 = vsub.s32 0, %v886
      %v950 = vsel %vm948, %v949, %v886
      %v951 = vshrl.u32 %v950, 8
      %v952 = vand.u32 %v950, 255
      %v953 = vsub.s32 0, %v952
      %v954 = vsel %vm948, %v953, %v952
      %vm955 = vcmp.lt.s32.totalorder %v887, 0
      %v956 = vsub.s32 0, %v887
      %v957 = vsel %vm955, %v956, %v887
      %v958 = vshrl.u32 %v957, 8
      %v959 = vand.u32 %v957, 255
      %v960 = vsub.s32 0, %v959
      %v961 = vsel %vm955, %v960, %v959
      %vm962 = vcmp.lt.s32.totalorder %v888, 0
      %v963 = vsub.s32 0, %v888
      %v964 = vsel %vm962, %v963, %v888
      %v965 = vshrl.u32 %v964, 8
      %v966 = vand.u32 %v964, 255
      %v967 = vsub.s32 0, %v966
      %v968 = vsel %vm962, %v967, %v966
      %vm969 = vcmp.lt.s32.totalorder %v889, 0
      %v970 = vsub.s32 0, %v889
      %v971 = vsel %vm969, %v970, %v889
      %v972 = vshrl.u32 %v971, 8
      %v973 = vand.u32 %v971, 255
      %v974 = vsub.s32 0, %v973
      %v975 = vsel %vm969, %v974, %v973
      %vm976 = vcmp.lt.s32.totalorder %v890, 0
      %v977 = vsub.s32 0, %v890
      %v978 = vsel %vm976, %v977, %v890
      %v979 = vshrl.u32 %v978, 8
      %v980 = vand.u32 %v978, 255
      %v981 = vsub.s32 0, %v980
      %v982 = vsel %vm976, %v981, %v980
      %vm983 = vcmp.lt.s32.totalorder %v891, 0
      %v984 = vsub.s32 0, %v891
      %v985 = vsel %vm983, %v984, %v891
      %v986 = vshrl.u32 %v985, 8
      %v987 = vand.u32 %v985, 255
      %v988 = vsub.s32 0, %v987
      %v989 = vsel %vm983, %v988, %v987
      %vm990 = vcmp.lt.s32.totalorder %v892, 0
      %v991 = vsub.s32 0, %v892
      %v992 = vsel %vm990, %v991, %v892
      %v993 = vshrl.u32 %v992, 8
      %v994 = vand.u32 %v992, 255
      %v995 = vsub.s32 0, %v994
      %v996 = vsel %vm990, %v995, %v994
      %vm997 = vcmp.lt.s32.totalorder %v893, 0
      %v998 = vsub.s32 0, %v893
      %v999 = vsel %vm997, %v998, %v893
      %v1000 = vshrl.u32 %v999, 8
      %v1001 = vand.u32 %v999, 255
      %v1002 = vsub.s32 0, %v1001
      %v1003 = vsel %vm997, %v1002, %v1001
      %vm1004 = vcmp.lt.s32.totalorder %v894, 0
      %v1005 = vsub.s32 0, %v894
      %v1006 = vsel %vm1004, %v1005, %v894
      %v1007 = vshrl.u32 %v1006, 8
      %v1008 = vand.u32 %v1006, 255
      %v1009 = vsub.s32 0, %v1008
      %v1010 = vsel %vm1004, %v1009, %v1008
      %vm1011 = vcmp.lt.s32.totalorder %v895, 0
      %v1012 = vsub.s32 0, %v895
      %v1013 = vsel %vm1011, %v1012, %v895
      %v1014 = vshrl.u32 %v1013, 8
      %v1015 = vand.u32 %v1013, 255
      %v1016 = vsub.s32 0, %v1015
      %v1017 = vsel %vm1011, %v1016, %v1015
      %vm1018 = vcmp.lt.s32.totalorder %v896, 0
      %v1019 = vsub.s32 0, %v896
      %v1020 = vsel %vm1018, %v1019, %v896
      %v1021 = vshrl.u32 %v1020, 8
      %v1022 = vand.u32 %v1020, 255
      %v1023 = vsub.s32 0, %v1022
      %v1024 = vsel %vm1018, %v1023, %v1022
      %vm1025 = vcmp.lt.s32.totalorder %v897, 0
      %v1026 = vsub.s32 0, %v897
      %v1027 = vsel %vm1025, %v1026, %v897
      %v1028 = vshrl.u32 %v1027, 8
      %v1029 = vand.u32 %v1027, 255
      %v1030 = vsub.s32 0, %v1029
      %v1031 = vsel %vm1025, %v1030, %v1029
      %vm1032 = vcmp.lt.s32.totalorder %v898, 0
      %v1033 = vsub.s32 0, %v898
      %v1034 = vsel %vm1032, %v1033, %v898
      %v1035 = vshrl.u32 %v1034, 8
      %v1036 = vand.u32 %v1034, 255
      %v1037 = vsub.s32 0, %v1036
      %v1038 = vsel %vm1032, %v1037, %v1036
      %vm1039 = vcmp.lt.s32.totalorder %v899, 0
      %v1040 = vsub.s32 0, %v899
      %v1041 = vsel %vm1039, %v1040, %v899
      %v1042 = vshrl.u32 %v1041, 8
      %v1043 = vand.u32 %v1041, 255
      %v1044 = vsub.s32 0, %v1043
      %v1045 = vsel %vm1039, %v1044, %v1043
      %vm1046 = vcmp.lt.s32.totalorder %v900, 0
      %v1047 = vsub.s32 0, %v900
      %v1048 = vsel %vm1046, %v1047, %v900
      %v1049 = vshrl.u32 %v1048, 8
      %v1050 = vand.u32 %v1048, 255
      %v1051 = vsub.s32 0, %v1050
      %v1052 = vsel %vm1046, %v1051, %v1050
      %vm1053 = vcmp.lt.s32.totalorder %v901, 0
      %v1054 = vsub.s32 0, %v901
      %v1055 = vsel %vm1053, %v1054, %v901
      %v1056 = vshrl.u32 %v1055, 8
      %v1057 = vand.u32 %v1055, 255
      %v1058 = vsub.s32 0, %v1057
      %v1059 = vsel %vm1053, %v1058, %v1057
      %vm1060 = vcmp.lt.s32.totalorder %v902, 0
      %v1061 = vsub.s32 0, %v902
      %v1062 = vsel %vm1060, %v1061, %v902
      %v1063 = vshrl.u32 %v1062, 8
      %v1064 = vand.u32 %v1062, 255
      %v1065 = vsub.s32 0, %v1064
      %v1066 = vsel %vm1060, %v1065, %v1064
      %vm1067 = vcmp.lt.s32.totalorder %v903, 0
      %v1068 = vsub.s32 0, %v903
      %v1069 = vsel %vm1067, %v1068, %v903
      %v1070 = vshrl.u32 %v1069, 8
      %v1071 = vand.u32 %v1069, 255
      %v1072 = vsub.s32 0, %v1071
      %v1073 = vsel %vm1067, %v1072, %v1071
      %vm1074 = vcmp.lt.s32.totalorder %v904, 0
      %v1075 = vsub.s32 0, %v904
      %v1076 = vsel %vm1074, %v1075, %v904
      %v1077 = vshrl.u32 %v1076, 8
      %v1078 = vand.u32 %v1076, 255
      %v1079 = vsub.s32 0, %v1078
      %v1080 = vsel %vm1074, %v1079, %v1078
      %vm1081 = vcmp.lt.s32.totalorder %v905, 0
      %v1082 = vsub.s32 0, %v905
      %v1083 = vsel %vm1081, %v1082, %v905
      %v1084 = vshrl.u32 %v1083, 8
      %v1085 = vand.u32 %v1083, 255
      %v1086 = vsub.s32 0, %v1085
      %v1087 = vsel %vm1081, %v1086, %v1085
      %vm1088 = vcmp.lt.s32.totalorder %v906, 0
      %v1089 = vsub.s32 0, %v906
      %v1090 = vsel %vm1088, %v1089, %v906
      %v1091 = vshrl.u32 %v1090, 8
      %v1092 = vand.u32 %v1090, 255
      %v1093 = vsub.s32 0, %v1092
      %v1094 = vsel %vm1088, %v1093, %v1092
      %vm1095 = vcmp.lt.s32.totalorder %v907, 0
      %v1096 = vsub.s32 0, %v907
      %v1097 = vsel %vm1095, %v1096, %v907
      %v1098 = vshrl.u32 %v1097, 8
      %v1099 = vand.u32 %v1097, 255
      %v1100 = vsub.s32 0, %v1099
      %v1101 = vsel %vm1095, %v1100, %v1099
      %vm1102 = vcmp.lt.s32.totalorder %v908, 0
      %v1103 = vsub.s32 0, %v908
      %v1104 = vsel %vm1102, %v1103, %v908
      %v1105 = vshrl.u32 %v1104, 8
      %v1106 = vand.u32 %v1104, 255
      %v1107 = vsub.s32 0, %v1106
      %v1108 = vsel %vm1102, %v1107, %v1106
      %vm1109 = vcmp.lt.s32.totalorder %v909, 0
      %v1110 = vsub.s32 0, %v909
      %v1111 = vsel %vm1109, %v1110, %v909
      %v1112 = vshrl.u32 %v1111, 8
      %v1113 = vand.u32 %v1111, 255
      %v1114 = vsub.s32 0, %v1113
      %v1115 = vsel %vm1109, %v1114, %v1113
      %vm1116 = vcmp.lt.s32.totalorder %v910, 0
      %v1117 = vsub.s32 0, %v910
      %v1118 = vsel %vm1116, %v1117, %v910
      %v1119 = vshrl.u32 %v1118, 8
      %v1120 = vand.u32 %v1118, 255
      %v1121 = vsub.s32 0, %v1120
      %v1122 = vsel %vm1116, %v1121, %v1120
      %vm1123 = vcmp.lt.s32.totalorder %v911, 0
      %v1124 = vsub.s32 0, %v911
      %v1125 = vsel %vm1123, %v1124, %v911
      %v1126 = vshrl.u32 %v1125, 8
      %v1127 = vand.u32 %v1125, 255
      %v1128 = vsub.s32 0, %v1127
      %v1129 = vsel %vm1123, %v1128, %v1127
      %vm1130 = vcmp.lt.s32.totalorder %v912, 0
      %v1131 = vsub.s32 0, %v912
      %v1132 = vsel %vm1130, %v1131, %v912
      %v1133 = vshrl.u32 %v1132, 8
      %v1134 = vand.u32 %v1132, 255
      %v1135 = vsub.s32 0, %v1134
      %v1136 = vsel %vm1130, %v1135, %v1134
      %vm1137 = vcmp.ne.s32.totalorder %v919, 0
      %vm1138 = vcmp.ne.s32.totalorder %v926, 0
      %vm1139 = vcmp.ne.s32.totalorder %v933, 0
      %vm1140 = vcmp.ne.s32.totalorder %v940, 0
      %vm1141 = vcmp.ne.s32.totalorder %v947, 0
      %vm1142 = vcmp.ne.s32.totalorder %v954, 0
      %vm1143 = vcmp.ne.s32.totalorder %v961, 0
      %vm1144 = vcmp.ne.s32.totalorder %v968, 0
      %vm1145 = vcmp.ne.s32.totalorder %v975, 0
      %vm1146 = vcmp.ne.s32.totalorder %v982, 0
      %vm1147 = vcmp.ne.s32.totalorder %v989, 0
      %vm1148 = vcmp.ne.s32.totalorder %v996, 0
      %vm1149 = vcmp.ne.s32.totalorder %v1003, 0
      %vm1150 = vcmp.ne.s32.totalorder %v1010, 0
      %vm1151 = vcmp.ne.s32.totalorder %v1017, 0
      %vm1152 = vcmp.ne.s32.totalorder %v1024, 0
      %vm1153 = vcmp.ne.s32.totalorder %v1031, 0
      %vm1154 = vcmp.ne.s32.totalorder %v1038, 0
      %vm1155 = vcmp.ne.s32.totalorder %v1045, 0
      %vm1156 = vcmp.ne.s32.totalorder %v1052, 0
      %vm1157 = vcmp.ne.s32.totalorder %v1059, 0
      %vm1158 = vcmp.ne.s32.totalorder %v1066, 0
      %vm1159 = vcmp.ne.s32.totalorder %v1073, 0
      %vm1160 = vcmp.ne.s32.totalorder %v1080, 0
      %vm1161 = vcmp.ne.s32.totalorder %v1087, 0
      %vm1162 = vcmp.ne.s32.totalorder %v1094, 0
      %vm1163 = vcmp.ne.s32.totalorder %v1101, 0
      %vm1164 = vcmp.ne.s32.totalorder %v1108, 0
      %vm1165 = vcmp.ne.s32.totalorder %v1115, 0
      %vm1166 = vcmp.ne.s32.totalorder %v1122, 0
      %vm1167 = vcmp.ne.s32.totalorder %v1129, 0
      %vm1168 = vcmp.ne.s32.totalorder %v1136, 0
      %vm1169 = vcmp.lt.s32.totalorder %v919, 0
      %vm1170 = vcmp.lt.s32.totalorder %v926, 0
      %vm1171 = vcmp.lt.s32.totalorder %v933, 0
      %vm1172 = vcmp.lt.s32.totalorder %v940, 0
      %vm1173 = vcmp.lt.s32.totalorder %v947, 0
      %vm1174 = vcmp.lt.s32.totalorder %v954, 0
      %vm1175 = vcmp.lt.s32.totalorder %v961, 0
      %vm1176 = vcmp.lt.s32.totalorder %v968, 0
      %vm1177 = vcmp.lt.s32.totalorder %v975, 0
      %vm1178 = vcmp.lt.s32.totalorder %v982, 0
      %vm1179 = vcmp.lt.s32.totalorder %v989, 0
      %vm1180 = vcmp.lt.s32.totalorder %v996, 0
      %vm1181 = vcmp.lt.s32.totalorder %v1003, 0
      %vm1182 = vcmp.lt.s32.totalorder %v1010, 0
      %vm1183 = vcmp.lt.s32.totalorder %v1017, 0
      %vm1184 = vcmp.lt.s32.totalorder %v1024, 0
      %vm1185 = vcmp.lt.s32.totalorder %v1031, 0
      %vm1186 = vcmp.lt.s32.totalorder %v1038, 0
      %vm1187 = vcmp.lt.s32.totalorder %v1045, 0
      %vm1188 = vcmp.lt.s32.totalorder %v1052, 0
      %vm1189 = vcmp.lt.s32.totalorder %v1059, 0
      %vm1190 = vcmp.lt.s32.totalorder %v1066, 0
      %vm1191 = vcmp.lt.s32.totalorder %v1073, 0
      %vm1192 = vcmp.lt.s32.totalorder %v1080, 0
      %vm1193 = vcmp.lt.s32.totalorder %v1087, 0
      %vm1194 = vcmp.lt.s32.totalorder %v1094, 0
      %vm1195 = vcmp.lt.s32.totalorder %v1101, 0
      %vm1196 = vcmp.lt.s32.totalorder %v1108, 0
      %vm1197 = vcmp.lt.s32.totalorder %v1115, 0
      %vm1198 = vcmp.lt.s32.totalorder %v1122, 0
      %vm1199 = vcmp.lt.s32.totalorder %v1129, 0
      %vm1200 = vcmp.lt.s32.totalorder %v1136, 0
      %vm1201 = vmand %vm1169, %vm1137
      %vm1202 = vmand %vm1170, %vm1138
      %vm1203 = vmand %vm1171, %vm1139
      %vm1204 = vmand %vm1172, %vm1140
      %vm1205 = vmand %vm1173, %vm1141
      %vm1206 = vmand %vm1174, %vm1142
      %vm1207 = vmand %vm1175, %vm1143
      %vm1208 = vmand %vm1176, %vm1144
      %vm1209 = vmand %vm1177, %vm1145
      %vm1210 = vmand %vm1178, %vm1146
      %vm1211 = vmand %vm1179, %vm1147
      %vm1212 = vmand %vm1180, %vm1148
      %vm1213 = vmand %vm1181, %vm1149
      %vm1214 = vmand %vm1182, %vm1150
      %vm1215 = vmand %vm1183, %vm1151
      %vm1216 = vmand %vm1184, %vm1152
      %vm1217 = vmand %vm1185, %vm1153
      %vm1218 = vmand %vm1186, %vm1154
      %vm1219 = vmand %vm1187, %vm1155
      %vm1220 = vmand %vm1188, %vm1156
      %vm1221 = vmand %vm1189, %vm1157
      %vm1222 = vmand %vm1190, %vm1158
      %vm1223 = vmand %vm1191, %vm1159
      %vm1224 = vmand %vm1192, %vm1160
      %vm1225 = vmand %vm1193, %vm1161
      %vm1226 = vmand %vm1194, %vm1162
      %vm1227 = vmand %vm1195, %vm1163
      %vm1228 = vmand %vm1196, %vm1164
      %vm1229 = vmand %vm1197, %vm1165
      %vm1230 = vmand %vm1198, %vm1166
      %vm1231 = vmand %vm1199, %vm1167
      %vm1232 = vmand %vm1200, %vm1168
      %v1233 = vadd.s32 %v919, 256
      %v1234 = vadd.s32 %v926, 256
      %v1235 = vadd.s32 %v933, 256
      %v1236 = vadd.s32 %v940, 256
      %v1237 = vadd.s32 %v947, 256
      %v1238 = vadd.s32 %v954, 256
      %v1239 = vadd.s32 %v961, 256
      %v1240 = vadd.s32 %v968, 256
      %v1241 = vadd.s32 %v975, 256
      %v1242 = vadd.s32 %v982, 256
      %v1243 = vadd.s32 %v989, 256
      %v1244 = vadd.s32 %v996, 256
      %v1245 = vadd.s32 %v1003, 256
      %v1246 = vadd.s32 %v1010, 256
      %v1247 = vadd.s32 %v1017, 256
      %v1248 = vadd.s32 %v1024, 256
      %v1249 = vadd.s32 %v1031, 256
      %v1250 = vadd.s32 %v1038, 256
      %v1251 = vadd.s32 %v1045, 256
      %v1252 = vadd.s32 %v1052, 256
      %v1253 = vadd.s32 %v1059, 256
      %v1254 = vadd.s32 %v1066, 256
      %v1255 = vadd.s32 %v1073, 256
      %v1256 = vadd.s32 %v1080, 256
      %v1257 = vadd.s32 %v1087, 256
      %v1258 = vadd.s32 %v1094, 256
      %v1259 = vadd.s32 %v1101, 256
      %v1260 = vadd.s32 %v1108, 256
      %v1261 = vadd.s32 %v1115, 256
      %v1262 = vadd.s32 %v1122, 256
      %v1263 = vadd.s32 %v1129, 256
      %v1264 = vadd.s32 %v1136, 256
      %v1265 = vsel %vm1201, %v1233, %v919
      %v1266 = vsel %vm1202, %v1234, %v926
      %v1267 = vsel %vm1203, %v1235, %v933
      %v1268 = vsel %vm1204, %v1236, %v940
      %v1269 = vsel %vm1205, %v1237, %v947
      %v1270 = vsel %vm1206, %v1238, %v954
      %v1271 = vsel %vm1207, %v1239, %v961
      %v1272 = vsel %vm1208, %v1240, %v968
      %v1273 = vsel %vm1209, %v1241, %v975
      %v1274 = vsel %vm1210, %v1242, %v982
      %v1275 = vsel %vm1211, %v1243, %v989
      %v1276 = vsel %vm1212, %v1244, %v996
      %v1277 = vsel %vm1213, %v1245, %v1003
      %v1278 = vsel %vm1214, %v1246, %v1010
      %v1279 = vsel %vm1215, %v1247, %v1017
      %v1280 = vsel %vm1216, %v1248, %v1024
      %v1281 = vsel %vm1217, %v1249, %v1031
      %v1282 = vsel %vm1218, %v1250, %v1038
      %v1283 = vsel %vm1219, %v1251, %v1045
      %v1284 = vsel %vm1220, %v1252, %v1052
      %v1285 = vsel %vm1221, %v1253, %v1059
      %v1286 = vsel %vm1222, %v1254, %v1066
      %v1287 = vsel %vm1223, %v1255, %v1073
      %v1288 = vsel %vm1224, %v1256, %v1080
      %v1289 = vsel %vm1225, %v1257, %v1087
      %v1290 = vsel %vm1226, %v1258, %v1094
      %v1291 = vsel %vm1227, %v1259, %v1101
      %v1292 = vsel %vm1228, %v1260, %v1108
      %v1293 = vsel %vm1229, %v1261, %v1115
      %v1294 = vsel %vm1230, %v1262, %v1122
      %v1295 = vsel %vm1231, %v1263, %v1129
      %v1296 = vsel %vm1232, %v1264, %v1136
      %vm1297 = vcmp.lt.s32.totalorder %v881, 0
      %v1298 = vsub.s32 0, %v881
      %v1299 = vsel %vm1297, %v1298, %v881
      %v1300 = vshrl.u32 %v1299, 4
      %v1301 = vand.u32 %v1299, 15
      %v1302 = vsub.s32 0, %v1301
      %v1303 = vsel %vm1297, %v1302, %v1301
      %vm1304 = vcmp.lt.s32.totalorder %v882, 0
      %v1305 = vsub.s32 0, %v882
      %v1306 = vsel %vm1304, %v1305, %v882
      %v1307 = vshrl.u32 %v1306, 4
      %v1308 = vand.u32 %v1306, 15
      %v1309 = vsub.s32 0, %v1308
      %v1310 = vsel %vm1304, %v1309, %v1308
      %vm1311 = vcmp.lt.s32.totalorder %v883, 0
      %v1312 = vsub.s32 0, %v883
      %v1313 = vsel %vm1311, %v1312, %v883
      %v1314 = vshrl.u32 %v1313, 4
      %v1315 = vand.u32 %v1313, 15
      %v1316 = vsub.s32 0, %v1315
      %v1317 = vsel %vm1311, %v1316, %v1315
      %vm1318 = vcmp.lt.s32.totalorder %v884, 0
      %v1319 = vsub.s32 0, %v884
      %v1320 = vsel %vm1318, %v1319, %v884
      %v1321 = vshrl.u32 %v1320, 4
      %v1322 = vand.u32 %v1320, 15
      %v1323 = vsub.s32 0, %v1322
      %v1324 = vsel %vm1318, %v1323, %v1322
      %vm1325 = vcmp.lt.s32.totalorder %v885, 0
      %v1326 = vsub.s32 0, %v885
      %v1327 = vsel %vm1325, %v1326, %v885
      %v1328 = vshrl.u32 %v1327, 4
      %v1329 = vand.u32 %v1327, 15
      %v1330 = vsub.s32 0, %v1329
      %v1331 = vsel %vm1325, %v1330, %v1329
      %vm1332 = vcmp.lt.s32.totalorder %v886, 0
      %v1333 = vsub.s32 0, %v886
      %v1334 = vsel %vm1332, %v1333, %v886
      %v1335 = vshrl.u32 %v1334, 4
      %v1336 = vand.u32 %v1334, 15
      %v1337 = vsub.s32 0, %v1336
      %v1338 = vsel %vm1332, %v1337, %v1336
      %vm1339 = vcmp.lt.s32.totalorder %v887, 0
      %v1340 = vsub.s32 0, %v887
      %v1341 = vsel %vm1339, %v1340, %v887
      %v1342 = vshrl.u32 %v1341, 4
      %v1343 = vand.u32 %v1341, 15
      %v1344 = vsub.s32 0, %v1343
      %v1345 = vsel %vm1339, %v1344, %v1343
      %vm1346 = vcmp.lt.s32.totalorder %v888, 0
      %v1347 = vsub.s32 0, %v888
      %v1348 = vsel %vm1346, %v1347, %v888
      %v1349 = vshrl.u32 %v1348, 4
      %v1350 = vand.u32 %v1348, 15
      %v1351 = vsub.s32 0, %v1350
      %v1352 = vsel %vm1346, %v1351, %v1350
      %vm1353 = vcmp.lt.s32.totalorder %v889, 0
      %v1354 = vsub.s32 0, %v889
      %v1355 = vsel %vm1353, %v1354, %v889
      %v1356 = vshrl.u32 %v1355, 4
      %v1357 = vand.u32 %v1355, 15
      %v1358 = vsub.s32 0, %v1357
      %v1359 = vsel %vm1353, %v1358, %v1357
      %vm1360 = vcmp.lt.s32.totalorder %v890, 0
      %v1361 = vsub.s32 0, %v890
      %v1362 = vsel %vm1360, %v1361, %v890
      %v1363 = vshrl.u32 %v1362, 4
      %v1364 = vand.u32 %v1362, 15
      %v1365 = vsub.s32 0, %v1364
      %v1366 = vsel %vm1360, %v1365, %v1364
      %vm1367 = vcmp.lt.s32.totalorder %v891, 0
      %v1368 = vsub.s32 0, %v891
      %v1369 = vsel %vm1367, %v1368, %v891
      %v1370 = vshrl.u32 %v1369, 4
      %v1371 = vand.u32 %v1369, 15
      %v1372 = vsub.s32 0, %v1371
      %v1373 = vsel %vm1367, %v1372, %v1371
      %vm1374 = vcmp.lt.s32.totalorder %v892, 0
      %v1375 = vsub.s32 0, %v892
      %v1376 = vsel %vm1374, %v1375, %v892
      %v1377 = vshrl.u32 %v1376, 4
      %v1378 = vand.u32 %v1376, 15
      %v1379 = vsub.s32 0, %v1378
      %v1380 = vsel %vm1374, %v1379, %v1378
      %vm1381 = vcmp.lt.s32.totalorder %v893, 0
      %v1382 = vsub.s32 0, %v893
      %v1383 = vsel %vm1381, %v1382, %v893
      %v1384 = vshrl.u32 %v1383, 4
      %v1385 = vand.u32 %v1383, 15
      %v1386 = vsub.s32 0, %v1385
      %v1387 = vsel %vm1381, %v1386, %v1385
      %vm1388 = vcmp.lt.s32.totalorder %v894, 0
      %v1389 = vsub.s32 0, %v894
      %v1390 = vsel %vm1388, %v1389, %v894
      %v1391 = vshrl.u32 %v1390, 4
      %v1392 = vand.u32 %v1390, 15
      %v1393 = vsub.s32 0, %v1392
      %v1394 = vsel %vm1388, %v1393, %v1392
      %vm1395 = vcmp.lt.s32.totalorder %v895, 0
      %v1396 = vsub.s32 0, %v895
      %v1397 = vsel %vm1395, %v1396, %v895
      %v1398 = vshrl.u32 %v1397, 4
      %v1399 = vand.u32 %v1397, 15
      %v1400 = vsub.s32 0, %v1399
      %v1401 = vsel %vm1395, %v1400, %v1399
      %vm1402 = vcmp.lt.s32.totalorder %v896, 0
      %v1403 = vsub.s32 0, %v896
      %v1404 = vsel %vm1402, %v1403, %v896
      %v1405 = vshrl.u32 %v1404, 4
      %v1406 = vand.u32 %v1404, 15
      %v1407 = vsub.s32 0, %v1406
      %v1408 = vsel %vm1402, %v1407, %v1406
      %vm1409 = vcmp.lt.s32.totalorder %v897, 0
      %v1410 = vsub.s32 0, %v897
      %v1411 = vsel %vm1409, %v1410, %v897
      %v1412 = vshrl.u32 %v1411, 4
      %v1413 = vand.u32 %v1411, 15
      %v1414 = vsub.s32 0, %v1413
      %v1415 = vsel %vm1409, %v1414, %v1413
      %vm1416 = vcmp.lt.s32.totalorder %v898, 0
      %v1417 = vsub.s32 0, %v898
      %v1418 = vsel %vm1416, %v1417, %v898
      %v1419 = vshrl.u32 %v1418, 4
      %v1420 = vand.u32 %v1418, 15
      %v1421 = vsub.s32 0, %v1420
      %v1422 = vsel %vm1416, %v1421, %v1420
      %vm1423 = vcmp.lt.s32.totalorder %v899, 0
      %v1424 = vsub.s32 0, %v899
      %v1425 = vsel %vm1423, %v1424, %v899
      %v1426 = vshrl.u32 %v1425, 4
      %v1427 = vand.u32 %v1425, 15
      %v1428 = vsub.s32 0, %v1427
      %v1429 = vsel %vm1423, %v1428, %v1427
      %vm1430 = vcmp.lt.s32.totalorder %v900, 0
      %v1431 = vsub.s32 0, %v900
      %v1432 = vsel %vm1430, %v1431, %v900
      %v1433 = vshrl.u32 %v1432, 4
      %v1434 = vand.u32 %v1432, 15
      %v1435 = vsub.s32 0, %v1434
      %v1436 = vsel %vm1430, %v1435, %v1434
      %vm1437 = vcmp.lt.s32.totalorder %v901, 0
      %v1438 = vsub.s32 0, %v901
      %v1439 = vsel %vm1437, %v1438, %v901
      %v1440 = vshrl.u32 %v1439, 4
      %v1441 = vand.u32 %v1439, 15
      %v1442 = vsub.s32 0, %v1441
      %v1443 = vsel %vm1437, %v1442, %v1441
      %vm1444 = vcmp.lt.s32.totalorder %v902, 0
      %v1445 = vsub.s32 0, %v902
      %v1446 = vsel %vm1444, %v1445, %v902
      %v1447 = vshrl.u32 %v1446, 4
      %v1448 = vand.u32 %v1446, 15
      %v1449 = vsub.s32 0, %v1448
      %v1450 = vsel %vm1444, %v1449, %v1448
      %vm1451 = vcmp.lt.s32.totalorder %v903, 0
      %v1452 = vsub.s32 0, %v903
      %v1453 = vsel %vm1451, %v1452, %v903
      %v1454 = vshrl.u32 %v1453, 4
      %v1455 = vand.u32 %v1453, 15
      %v1456 = vsub.s32 0, %v1455
      %v1457 = vsel %vm1451, %v1456, %v1455
      %vm1458 = vcmp.lt.s32.totalorder %v904, 0
      %v1459 = vsub.s32 0, %v904
      %v1460 = vsel %vm1458, %v1459, %v904
      %v1461 = vshrl.u32 %v1460, 4
      %v1462 = vand.u32 %v1460, 15
      %v1463 = vsub.s32 0, %v1462
      %v1464 = vsel %vm1458, %v1463, %v1462
      %vm1465 = vcmp.lt.s32.totalorder %v905, 0
      %v1466 = vsub.s32 0, %v905
      %v1467 = vsel %vm1465, %v1466, %v905
      %v1468 = vshrl.u32 %v1467, 4
      %v1469 = vand.u32 %v1467, 15
      %v1470 = vsub.s32 0, %v1469
      %v1471 = vsel %vm1465, %v1470, %v1469
      %vm1472 = vcmp.lt.s32.totalorder %v906, 0
      %v1473 = vsub.s32 0, %v906
      %v1474 = vsel %vm1472, %v1473, %v906
      %v1475 = vshrl.u32 %v1474, 4
      %v1476 = vand.u32 %v1474, 15
      %v1477 = vsub.s32 0, %v1476
      %v1478 = vsel %vm1472, %v1477, %v1476
      %vm1479 = vcmp.lt.s32.totalorder %v907, 0
      %v1480 = vsub.s32 0, %v907
      %v1481 = vsel %vm1479, %v1480, %v907
      %v1482 = vshrl.u32 %v1481, 4
      %v1483 = vand.u32 %v1481, 15
      %v1484 = vsub.s32 0, %v1483
      %v1485 = vsel %vm1479, %v1484, %v1483
      %vm1486 = vcmp.lt.s32.totalorder %v908, 0
      %v1487 = vsub.s32 0, %v908
      %v1488 = vsel %vm1486, %v1487, %v908
      %v1489 = vshrl.u32 %v1488, 4
      %v1490 = vand.u32 %v1488, 15
      %v1491 = vsub.s32 0, %v1490
      %v1492 = vsel %vm1486, %v1491, %v1490
      %vm1493 = vcmp.lt.s32.totalorder %v909, 0
      %v1494 = vsub.s32 0, %v909
      %v1495 = vsel %vm1493, %v1494, %v909
      %v1496 = vshrl.u32 %v1495, 4
      %v1497 = vand.u32 %v1495, 15
      %v1498 = vsub.s32 0, %v1497
      %v1499 = vsel %vm1493, %v1498, %v1497
      %vm1500 = vcmp.lt.s32.totalorder %v910, 0
      %v1501 = vsub.s32 0, %v910
      %v1502 = vsel %vm1500, %v1501, %v910
      %v1503 = vshrl.u32 %v1502, 4
      %v1504 = vand.u32 %v1502, 15
      %v1505 = vsub.s32 0, %v1504
      %v1506 = vsel %vm1500, %v1505, %v1504
      %vm1507 = vcmp.lt.s32.totalorder %v911, 0
      %v1508 = vsub.s32 0, %v911
      %v1509 = vsel %vm1507, %v1508, %v911
      %v1510 = vshrl.u32 %v1509, 4
      %v1511 = vand.u32 %v1509, 15
      %v1512 = vsub.s32 0, %v1511
      %v1513 = vsel %vm1507, %v1512, %v1511
      %vm1514 = vcmp.lt.s32.totalorder %v912, 0
      %v1515 = vsub.s32 0, %v912
      %v1516 = vsel %vm1514, %v1515, %v912
      %v1517 = vshrl.u32 %v1516, 4
      %v1518 = vand.u32 %v1516, 15
      %v1519 = vsub.s32 0, %v1518
      %v1520 = vsel %vm1514, %v1519, %v1518
      %vm1521 = vcmp.ne.s32.totalorder %v1303, 0
      %vm1522 = vcmp.ne.s32.totalorder %v1310, 0
      %vm1523 = vcmp.ne.s32.totalorder %v1317, 0
      %vm1524 = vcmp.ne.s32.totalorder %v1324, 0
      %vm1525 = vcmp.ne.s32.totalorder %v1331, 0
      %vm1526 = vcmp.ne.s32.totalorder %v1338, 0
      %vm1527 = vcmp.ne.s32.totalorder %v1345, 0
      %vm1528 = vcmp.ne.s32.totalorder %v1352, 0
      %vm1529 = vcmp.ne.s32.totalorder %v1359, 0
      %vm1530 = vcmp.ne.s32.totalorder %v1366, 0
      %vm1531 = vcmp.ne.s32.totalorder %v1373, 0
      %vm1532 = vcmp.ne.s32.totalorder %v1380, 0
      %vm1533 = vcmp.ne.s32.totalorder %v1387, 0
      %vm1534 = vcmp.ne.s32.totalorder %v1394, 0
      %vm1535 = vcmp.ne.s32.totalorder %v1401, 0
      %vm1536 = vcmp.ne.s32.totalorder %v1408, 0
      %vm1537 = vcmp.ne.s32.totalorder %v1415, 0
      %vm1538 = vcmp.ne.s32.totalorder %v1422, 0
      %vm1539 = vcmp.ne.s32.totalorder %v1429, 0
      %vm1540 = vcmp.ne.s32.totalorder %v1436, 0
      %vm1541 = vcmp.ne.s32.totalorder %v1443, 0
      %vm1542 = vcmp.ne.s32.totalorder %v1450, 0
      %vm1543 = vcmp.ne.s32.totalorder %v1457, 0
      %vm1544 = vcmp.ne.s32.totalorder %v1464, 0
      %vm1545 = vcmp.ne.s32.totalorder %v1471, 0
      %vm1546 = vcmp.ne.s32.totalorder %v1478, 0
      %vm1547 = vcmp.ne.s32.totalorder %v1485, 0
      %vm1548 = vcmp.ne.s32.totalorder %v1492, 0
      %vm1549 = vcmp.ne.s32.totalorder %v1499, 0
      %vm1550 = vcmp.ne.s32.totalorder %v1506, 0
      %vm1551 = vcmp.ne.s32.totalorder %v1513, 0
      %vm1552 = vcmp.ne.s32.totalorder %v1520, 0
      %vm1553 = vcmp.lt.s32.totalorder %v1303, 0
      %vm1554 = vcmp.lt.s32.totalorder %v1310, 0
      %vm1555 = vcmp.lt.s32.totalorder %v1317, 0
      %vm1556 = vcmp.lt.s32.totalorder %v1324, 0
      %vm1557 = vcmp.lt.s32.totalorder %v1331, 0
      %vm1558 = vcmp.lt.s32.totalorder %v1338, 0
      %vm1559 = vcmp.lt.s32.totalorder %v1345, 0
      %vm1560 = vcmp.lt.s32.totalorder %v1352, 0
      %vm1561 = vcmp.lt.s32.totalorder %v1359, 0
      %vm1562 = vcmp.lt.s32.totalorder %v1366, 0
      %vm1563 = vcmp.lt.s32.totalorder %v1373, 0
      %vm1564 = vcmp.lt.s32.totalorder %v1380, 0
      %vm1565 = vcmp.lt.s32.totalorder %v1387, 0
      %vm1566 = vcmp.lt.s32.totalorder %v1394, 0
      %vm1567 = vcmp.lt.s32.totalorder %v1401, 0
      %vm1568 = vcmp.lt.s32.totalorder %v1408, 0
      %vm1569 = vcmp.lt.s32.totalorder %v1415, 0
      %vm1570 = vcmp.lt.s32.totalorder %v1422, 0
      %vm1571 = vcmp.lt.s32.totalorder %v1429, 0
      %vm1572 = vcmp.lt.s32.totalorder %v1436, 0
      %vm1573 = vcmp.lt.s32.totalorder %v1443, 0
      %vm1574 = vcmp.lt.s32.totalorder %v1450, 0
      %vm1575 = vcmp.lt.s32.totalorder %v1457, 0
      %vm1576 = vcmp.lt.s32.totalorder %v1464, 0
      %vm1577 = vcmp.lt.s32.totalorder %v1471, 0
      %vm1578 = vcmp.lt.s32.totalorder %v1478, 0
      %vm1579 = vcmp.lt.s32.totalorder %v1485, 0
      %vm1580 = vcmp.lt.s32.totalorder %v1492, 0
      %vm1581 = vcmp.lt.s32.totalorder %v1499, 0
      %vm1582 = vcmp.lt.s32.totalorder %v1506, 0
      %vm1583 = vcmp.lt.s32.totalorder %v1513, 0
      %vm1584 = vcmp.lt.s32.totalorder %v1520, 0
      %vm1585 = vmand %vm1553, %vm1521
      %vm1586 = vmand %vm1554, %vm1522
      %vm1587 = vmand %vm1555, %vm1523
      %vm1588 = vmand %vm1556, %vm1524
      %vm1589 = vmand %vm1557, %vm1525
      %vm1590 = vmand %vm1558, %vm1526
      %vm1591 = vmand %vm1559, %vm1527
      %vm1592 = vmand %vm1560, %vm1528
      %vm1593 = vmand %vm1561, %vm1529
      %vm1594 = vmand %vm1562, %vm1530
      %vm1595 = vmand %vm1563, %vm1531
      %vm1596 = vmand %vm1564, %vm1532
      %vm1597 = vmand %vm1565, %vm1533
      %vm1598 = vmand %vm1566, %vm1534
      %vm1599 = vmand %vm1567, %vm1535
      %vm1600 = vmand %vm1568, %vm1536
      %vm1601 = vmand %vm1569, %vm1537
      %vm1602 = vmand %vm1570, %vm1538
      %vm1603 = vmand %vm1571, %vm1539
      %vm1604 = vmand %vm1572, %vm1540
      %vm1605 = vmand %vm1573, %vm1541
      %vm1606 = vmand %vm1574, %vm1542
      %vm1607 = vmand %vm1575, %vm1543
      %vm1608 = vmand %vm1576, %vm1544
      %vm1609 = vmand %vm1577, %vm1545
      %vm1610 = vmand %vm1578, %vm1546
      %vm1611 = vmand %vm1579, %vm1547
      %vm1612 = vmand %vm1580, %vm1548
      %vm1613 = vmand %vm1581, %vm1549
      %vm1614 = vmand %vm1582, %vm1550
      %vm1615 = vmand %vm1583, %vm1551
      %vm1616 = vmand %vm1584, %vm1552
      %v1617 = vadd.s32 %v1303, 16
      %v1618 = vadd.s32 %v1310, 16
      %v1619 = vadd.s32 %v1317, 16
      %v1620 = vadd.s32 %v1324, 16
      %v1621 = vadd.s32 %v1331, 16
      %v1622 = vadd.s32 %v1338, 16
      %v1623 = vadd.s32 %v1345, 16
      %v1624 = vadd.s32 %v1352, 16
      %v1625 = vadd.s32 %v1359, 16
      %v1626 = vadd.s32 %v1366, 16
      %v1627 = vadd.s32 %v1373, 16
      %v1628 = vadd.s32 %v1380, 16
      %v1629 = vadd.s32 %v1387, 16
      %v1630 = vadd.s32 %v1394, 16
      %v1631 = vadd.s32 %v1401, 16
      %v1632 = vadd.s32 %v1408, 16
      %v1633 = vadd.s32 %v1415, 16
      %v1634 = vadd.s32 %v1422, 16
      %v1635 = vadd.s32 %v1429, 16
      %v1636 = vadd.s32 %v1436, 16
      %v1637 = vadd.s32 %v1443, 16
      %v1638 = vadd.s32 %v1450, 16
      %v1639 = vadd.s32 %v1457, 16
      %v1640 = vadd.s32 %v1464, 16
      %v1641 = vadd.s32 %v1471, 16
      %v1642 = vadd.s32 %v1478, 16
      %v1643 = vadd.s32 %v1485, 16
      %v1644 = vadd.s32 %v1492, 16
      %v1645 = vadd.s32 %v1499, 16
      %v1646 = vadd.s32 %v1506, 16
      %v1647 = vadd.s32 %v1513, 16
      %v1648 = vadd.s32 %v1520, 16
      %v1649 = vsel %vm1585, %v1617, %v1303
      %v1650 = vsel %vm1586, %v1618, %v1310
      %v1651 = vsel %vm1587, %v1619, %v1317
      %v1652 = vsel %vm1588, %v1620, %v1324
      %v1653 = vsel %vm1589, %v1621, %v1331
      %v1654 = vsel %vm1590, %v1622, %v1338
      %v1655 = vsel %vm1591, %v1623, %v1345
      %v1656 = vsel %vm1592, %v1624, %v1352
      %v1657 = vsel %vm1593, %v1625, %v1359
      %v1658 = vsel %vm1594, %v1626, %v1366
      %v1659 = vsel %vm1595, %v1627, %v1373
      %v1660 = vsel %vm1596, %v1628, %v1380
      %v1661 = vsel %vm1597, %v1629, %v1387
      %v1662 = vsel %vm1598, %v1630, %v1394
      %v1663 = vsel %vm1599, %v1631, %v1401
      %v1664 = vsel %vm1600, %v1632, %v1408
      %v1665 = vsel %vm1601, %v1633, %v1415
      %v1666 = vsel %vm1602, %v1634, %v1422
      %v1667 = vsel %vm1603, %v1635, %v1429
      %v1668 = vsel %vm1604, %v1636, %v1436
      %v1669 = vsel %vm1605, %v1637, %v1443
      %v1670 = vsel %vm1606, %v1638, %v1450
      %v1671 = vsel %vm1607, %v1639, %v1457
      %v1672 = vsel %vm1608, %v1640, %v1464
      %v1673 = vsel %vm1609, %v1641, %v1471
      %v1674 = vsel %vm1610, %v1642, %v1478
      %v1675 = vsel %vm1611, %v1643, %v1485
      %v1676 = vsel %vm1612, %v1644, %v1492
      %v1677 = vsel %vm1613, %v1645, %v1499
      %v1678 = vsel %vm1614, %v1646, %v1506
      %v1679 = vsel %vm1615, %v1647, %v1513
      %v1680 = vsel %vm1616, %v1648, %v1520
      %vm1681 = vcmp.ge.s32.totalorder %v1265, 16
      %vm1682 = vcmp.ge.s32.totalorder %v1266, 16
      %vm1683 = vcmp.ge.s32.totalorder %v1267, 16
      %vm1684 = vcmp.ge.s32.totalorder %v1268, 16
      %vm1685 = vcmp.ge.s32.totalorder %v1269, 16
      %vm1686 = vcmp.ge.s32.totalorder %v1270, 16
      %vm1687 = vcmp.ge.s32.totalorder %v1271, 16
      %vm1688 = vcmp.ge.s32.totalorder %v1272, 16
      %vm1689 = vcmp.ge.s32.totalorder %v1273, 16
      %vm1690 = vcmp.ge.s32.totalorder %v1274, 16
      %vm1691 = vcmp.ge.s32.totalorder %v1275, 16
      %vm1692 = vcmp.ge.s32.totalorder %v1276, 16
      %vm1693 = vcmp.ge.s32.totalorder %v1277, 16
      %vm1694 = vcmp.ge.s32.totalorder %v1278, 16
      %vm1695 = vcmp.ge.s32.totalorder %v1279, 16
      %vm1696 = vcmp.ge.s32.totalorder %v1280, 16
      %vm1697 = vcmp.ge.s32.totalorder %v1281, 16
      %vm1698 = vcmp.ge.s32.totalorder %v1282, 16
      %vm1699 = vcmp.ge.s32.totalorder %v1283, 16
      %vm1700 = vcmp.ge.s32.totalorder %v1284, 16
      %vm1701 = vcmp.ge.s32.totalorder %v1285, 16
      %vm1702 = vcmp.ge.s32.totalorder %v1286, 16
      %vm1703 = vcmp.ge.s32.totalorder %v1287, 16
      %vm1704 = vcmp.ge.s32.totalorder %v1288, 16
      %vm1705 = vcmp.ge.s32.totalorder %v1289, 16
      %vm1706 = vcmp.ge.s32.totalorder %v1290, 16
      %vm1707 = vcmp.ge.s32.totalorder %v1291, 16
      %vm1708 = vcmp.ge.s32.totalorder %v1292, 16
      %vm1709 = vcmp.ge.s32.totalorder %v1293, 16
      %vm1710 = vcmp.ge.s32.totalorder %v1294, 16
      %vm1711 = vcmp.ge.s32.totalorder %v1295, 16
      %vm1712 = vcmp.ge.s32.totalorder %v1296, 16
      %vm1713 = vcmp.lt.s32.totalorder %v1265, 240
      %vm1714 = vcmp.lt.s32.totalorder %v1266, 240
      %vm1715 = vcmp.lt.s32.totalorder %v1267, 240
      %vm1716 = vcmp.lt.s32.totalorder %v1268, 240
      %vm1717 = vcmp.lt.s32.totalorder %v1269, 240
      %vm1718 = vcmp.lt.s32.totalorder %v1270, 240
      %vm1719 = vcmp.lt.s32.totalorder %v1271, 240
      %vm1720 = vcmp.lt.s32.totalorder %v1272, 240
      %vm1721 = vcmp.lt.s32.totalorder %v1273, 240
      %vm1722 = vcmp.lt.s32.totalorder %v1274, 240
      %vm1723 = vcmp.lt.s32.totalorder %v1275, 240
      %vm1724 = vcmp.lt.s32.totalorder %v1276, 240
      %vm1725 = vcmp.lt.s32.totalorder %v1277, 240
      %vm1726 = vcmp.lt.s32.totalorder %v1278, 240
      %vm1727 = vcmp.lt.s32.totalorder %v1279, 240
      %vm1728 = vcmp.lt.s32.totalorder %v1280, 240
      %vm1729 = vcmp.lt.s32.totalorder %v1281, 240
      %vm1730 = vcmp.lt.s32.totalorder %v1282, 240
      %vm1731 = vcmp.lt.s32.totalorder %v1283, 240
      %vm1732 = vcmp.lt.s32.totalorder %v1284, 240
      %vm1733 = vcmp.lt.s32.totalorder %v1285, 240
      %vm1734 = vcmp.lt.s32.totalorder %v1286, 240
      %vm1735 = vcmp.lt.s32.totalorder %v1287, 240
      %vm1736 = vcmp.lt.s32.totalorder %v1288, 240
      %vm1737 = vcmp.lt.s32.totalorder %v1289, 240
      %vm1738 = vcmp.lt.s32.totalorder %v1290, 240
      %vm1739 = vcmp.lt.s32.totalorder %v1291, 240
      %vm1740 = vcmp.lt.s32.totalorder %v1292, 240
      %vm1741 = vcmp.lt.s32.totalorder %v1293, 240
      %vm1742 = vcmp.lt.s32.totalorder %v1294, 240
      %vm1743 = vcmp.lt.s32.totalorder %v1295, 240
      %vm1744 = vcmp.lt.s32.totalorder %v1296, 240
      %vm1745 = vcmp.ge.s32.totalorder %v1649, 1
      %vm1746 = vcmp.ge.s32.totalorder %v1650, 1
      %vm1747 = vcmp.ge.s32.totalorder %v1651, 1
      %vm1748 = vcmp.ge.s32.totalorder %v1652, 1
      %vm1749 = vcmp.ge.s32.totalorder %v1653, 1
      %vm1750 = vcmp.ge.s32.totalorder %v1654, 1
      %vm1751 = vcmp.ge.s32.totalorder %v1655, 1
      %vm1752 = vcmp.ge.s32.totalorder %v1656, 1
      %vm1753 = vcmp.ge.s32.totalorder %v1657, 1
      %vm1754 = vcmp.ge.s32.totalorder %v1658, 1
      %vm1755 = vcmp.ge.s32.totalorder %v1659, 1
      %vm1756 = vcmp.ge.s32.totalorder %v1660, 1
      %vm1757 = vcmp.ge.s32.totalorder %v1661, 1
      %vm1758 = vcmp.ge.s32.totalorder %v1662, 1
      %vm1759 = vcmp.ge.s32.totalorder %v1663, 1
      %vm1760 = vcmp.ge.s32.totalorder %v1664, 1
      %vm1761 = vcmp.ge.s32.totalorder %v1665, 1
      %vm1762 = vcmp.ge.s32.totalorder %v1666, 1
      %vm1763 = vcmp.ge.s32.totalorder %v1667, 1
      %vm1764 = vcmp.ge.s32.totalorder %v1668, 1
      %vm1765 = vcmp.ge.s32.totalorder %v1669, 1
      %vm1766 = vcmp.ge.s32.totalorder %v1670, 1
      %vm1767 = vcmp.ge.s32.totalorder %v1671, 1
      %vm1768 = vcmp.ge.s32.totalorder %v1672, 1
      %vm1769 = vcmp.ge.s32.totalorder %v1673, 1
      %vm1770 = vcmp.ge.s32.totalorder %v1674, 1
      %vm1771 = vcmp.ge.s32.totalorder %v1675, 1
      %vm1772 = vcmp.ge.s32.totalorder %v1676, 1
      %vm1773 = vcmp.ge.s32.totalorder %v1677, 1
      %vm1774 = vcmp.ge.s32.totalorder %v1678, 1
      %vm1775 = vcmp.ge.s32.totalorder %v1679, 1
      %vm1776 = vcmp.ge.s32.totalorder %v1680, 1
      %vm1777 = vcmp.le.s32.totalorder %v1649, 14
      %vm1778 = vcmp.le.s32.totalorder %v1650, 14
      %vm1779 = vcmp.le.s32.totalorder %v1651, 14
      %vm1780 = vcmp.le.s32.totalorder %v1652, 14
      %vm1781 = vcmp.le.s32.totalorder %v1653, 14
      %vm1782 = vcmp.le.s32.totalorder %v1654, 14
      %vm1783 = vcmp.le.s32.totalorder %v1655, 14
      %vm1784 = vcmp.le.s32.totalorder %v1656, 14
      %vm1785 = vcmp.le.s32.totalorder %v1657, 14
      %vm1786 = vcmp.le.s32.totalorder %v1658, 14
      %vm1787 = vcmp.le.s32.totalorder %v1659, 14
      %vm1788 = vcmp.le.s32.totalorder %v1660, 14
      %vm1789 = vcmp.le.s32.totalorder %v1661, 14
      %vm1790 = vcmp.le.s32.totalorder %v1662, 14
      %vm1791 = vcmp.le.s32.totalorder %v1663, 14
      %vm1792 = vcmp.le.s32.totalorder %v1664, 14
      %vm1793 = vcmp.le.s32.totalorder %v1665, 14
      %vm1794 = vcmp.le.s32.totalorder %v1666, 14
      %vm1795 = vcmp.le.s32.totalorder %v1667, 14
      %vm1796 = vcmp.le.s32.totalorder %v1668, 14
      %vm1797 = vcmp.le.s32.totalorder %v1669, 14
      %vm1798 = vcmp.le.s32.totalorder %v1670, 14
      %vm1799 = vcmp.le.s32.totalorder %v1671, 14
      %vm1800 = vcmp.le.s32.totalorder %v1672, 14
      %vm1801 = vcmp.le.s32.totalorder %v1673, 14
      %vm1802 = vcmp.le.s32.totalorder %v1674, 14
      %vm1803 = vcmp.le.s32.totalorder %v1675, 14
      %vm1804 = vcmp.le.s32.totalorder %v1676, 14
      %vm1805 = vcmp.le.s32.totalorder %v1677, 14
      %vm1806 = vcmp.le.s32.totalorder %v1678, 14
      %vm1807 = vcmp.le.s32.totalorder %v1679, 14
      %vm1808 = vcmp.le.s32.totalorder %v1680, 14
      %v1809 = vld [vmem:[%s5] sm:$0xf]
      %v1810 = vld [vmem:[%s5 + $0x4] sm:$0xf]
      %v1811 = vld [vmem:[%s5 + $0x8] sm:$0xf]
      %v1812 = vld [vmem:[%s5 + $0xc] sm:$0xf]
      %v1813 = vld [vmem:[%s5 + $0x10] sm:$0xf]
      %v1814 = vld [vmem:[%s5 + $0x14] sm:$0xf]
      %v1815 = vld [vmem:[%s5 + $0x18] sm:$0xf]
      %v1816 = vld [vmem:[%s5 + $0x1c] sm:$0xf]
      %v1817 = vld [vmem:[%s5 + $0x20] sm:$0xf]
      %v1818 = vld [vmem:[%s5 + $0x24] sm:$0xf]
      %v1819 = vld [vmem:[%s5 + $0x28] sm:$0xf]
      %v1820 = vld [vmem:[%s5 + $0x2c] sm:$0xf]
      %v1821 = vld [vmem:[%s5 + $0x30] sm:$0xf]
      %v1822 = vld [vmem:[%s5 + $0x34] sm:$0xf]
      %v1823 = vld [vmem:[%s5 + $0x38] sm:$0xf]
      %v1824 = vld [vmem:[%s5 + $0x3c] sm:$0xf]
      %v1841 = vunpack.c.l.b16 %v1809
      %v1842 = vunpack.c.l.b16 %v1810
      %v1843 = vunpack.c.l.b16 %v1811
      %v1844 = vunpack.c.l.b16 %v1812
      %v1845 = vunpack.c.l.b16 %v1813
      %v1846 = vunpack.c.l.b16 %v1814
      %v1847 = vunpack.c.l.b16 %v1815
      %v1848 = vunpack.c.l.b16 %v1816
      %v1849 = vunpack.c.l.b16 %v1817
      %v1850 = vunpack.c.l.b16 %v1818
      %v1851 = vunpack.c.l.b16 %v1819
      %v1852 = vunpack.c.l.b16 %v1820
      %v1853 = vunpack.c.l.b16 %v1821
      %v1854 = vunpack.c.l.b16 %v1822
      %v1855 = vunpack.c.l.b16 %v1823
      %v1856 = vunpack.c.l.b16 %v1824
      %v1857 = vpack.c.b16 %v1842, %v1841
      %v1858 = vpack.c.b16 %v1844, %v1843
      %v1859 = vpack.c.b16 %v1846, %v1845
      %v1860 = vpack.c.b16 %v1848, %v1847
      %v1861 = vpack.c.b16 %v1850, %v1849
      %v1862 = vpack.c.b16 %v1852, %v1851
      %v1863 = vpack.c.b16 %v1854, %v1853
      %v1864 = vpack.c.b16 %v1856, %v1855
      %1873 = vmatprep.subr.bf16.mxu0 0
      %1874 = vmatpush1.bf16.msra.mxu0 %v1857
      %1875 = vmatprep.subr.bf16.mxu0 0
      %1876 = vmatpush1.bf16.msra.mxu0 %v1858
      %1877 = vmatprep.subr.bf16.mxu0 0
      %1878 = vmatpush1.bf16.msra.mxu0 %v1859
      %1879 = vmatprep.subr.bf16.mxu0 0
      %1880 = vmatpush1.bf16.msra.mxu0 %v1860
      %1881 = vmatprep.subr.bf16.mxu0 0
      %1882 = vmatpush1.bf16.msra.mxu0 %v1861
      %1883 = vmatprep.subr.bf16.mxu0 0
      %1884 = vmatpush1.bf16.msra.mxu0 %v1862
      %1885 = vmatprep.subr.bf16.mxu0 0
      %1886 = vmatpush1.bf16.msra.mxu0 %v1863
      %1887 = vmatprep.subr.bf16.mxu0 0
      %1888 = vmatpush1.bf16.msra.mxu0 %v1864
      %1889 = vmatprep.subr.bf16.mxu0 0
      %1890 = vmatpush1.bf16.msra.mxu0 0
      %1891 = vmatprep.subr.bf16.mxu0 0
      %1892 = vmatpush1.bf16.msra.mxu0 0
      %1893 = vmatprep.subr.bf16.mxu0 0
      %1894 = vmatpush1.bf16.msra.mxu0 0
      %1895 = vmatprep.subr.bf16.mxu0 0
      %1896 = vmatpush1.bf16.msra.mxu0 0
      %1897 = vmatprep.subr.bf16.mxu0 0
      %1898 = vmatpush1.bf16.msra.mxu0 0
      %1899 = vmatprep.subr.bf16.mxu0 0
      %1900 = vmatpush1.bf16.msra.mxu0 0
      %1901 = vmatprep.subr.bf16.mxu0 0
      %1902 = vmatpush1.bf16.msra.mxu0 0
      %1903 = vmatprep.subr.bf16.mxu0 0
      %1904 = vmatpush1.bf16.msra.mxu0 0
      %1905 = vmatprep.mubr.bf16.mxu0 0
      %1906 = vmatmul.mubr.bf16.gmra.mrb[0].mxu0 %v864
      %v1907 = vpop.f32.mrb[0].mxu0
      %v1908 = vadd.f32 0.0, %v1907
      %v1909 = vpop.f32.mrb[0].mxu0
      %v1910 = vpop.f32.mrb[0].mxu0
      %v1911 = vadd.f32 0.0, %v1910
      %v1912 = vpop.f32.mrb[0].mxu0
      %1913 = vmatprep.mubr.bf16.mxu0 0
      %1914 = vmatmul.mubr.bf16.gmra.mrb[0].mxu0 %v865
      %v1915 = vpop.f32.mrb[0].mxu0
      %v1916 = vadd.f32 0.0, %v1915
      %v1917 = vpop.f32.mrb[0].mxu0
      %v1918 = vpop.f32.mrb[0].mxu0
      %v1919 = vadd.f32 0.0, %v1918
      %v1920 = vpop.f32.mrb[0].mxu0
      %1921 = vmatprep.mubr.bf16.mxu0 0
      %1922 = vmatmul.mubr.bf16.gmra.mrb[0].mxu0 %v866
      %v1923 = vpop.f32.mrb[0].mxu0
      %v1924 = vadd.f32 0.0, %v1923
      %v1925 = vpop.f32.mrb[0].mxu0
      %v1926 = vpop.f32.mrb[0].mxu0
      %v1927 = vadd.f32 0.0, %v1926
      %v1928 = vpop.f32.mrb[0].mxu0
      %1929 = vmatprep.mubr.bf16.mxu0 0
      %1930 = vmatmul.mubr.bf16.gmra.mrb[0].mxu0 %v867
      %v1931 = vpop.f32.mrb[0].mxu0
      %v1932 = vadd.f32 0.0, %v1931
      %v1933 = vpop.f32.mrb[0].mxu0
      %v1934 = vpop.f32.mrb[0].mxu0
      %v1935 = vadd.f32 0.0, %v1934
      %v1936 = vpop.f32.mrb[0].mxu0
      %1937 = vmatprep.mubr.bf16.mxu0 0
      %1938 = vmatmul.mubr.bf16.gmra.mrb[0].mxu0 %v868
      %v1939 = vpop.f32.mrb[0].mxu0
      %v1940 = vadd.f32 0.0, %v1939
      %v1941 = vpop.f32.mrb[0].mxu0
      %v1942 = vpop.f32.mrb[0].mxu0
      %v1943 = vadd.f32 0.0, %v1942
      %v1944 = vpop.f32.mrb[0].mxu0
      %1945 = vmatprep.mubr.bf16.mxu0 0
      %1946 = vmatmul.mubr.bf16.gmra.mrb[0].mxu0 %v869
      %v1947 = vpop.f32.mrb[0].mxu0
      %v1948 = vadd.f32 0.0, %v1947
      %v1949 = vpop.f32.mrb[0].mxu0
      %v1950 = vpop.f32.mrb[0].mxu0
      %v1951 = vadd.f32 0.0, %v1950
      %v1952 = vpop.f32.mrb[0].mxu0
      %1953 = vmatprep.mubr.bf16.mxu0 0
      %1954 = vmatmul.mubr.bf16.gmra.mrb[0].mxu0 %v870
      %v1955 = vpop.f32.mrb[0].mxu0
      %v1956 = vadd.f32 0.0, %v1955
      %v1957 = vpop.f32.mrb[0].mxu0
      %v1958 = vpop.f32.mrb[0].mxu0
      %v1959 = vadd.f32 0.0, %v1958
      %v1960 = vpop.f32.mrb[0].mxu0
      %1961 = vmatprep.mubr.bf16.mxu0 0
      %1962 = vmatmul.mubr.bf16.gmra.mrb[0].mxu0 %v871
      %v1963 = vpop.f32.mrb[0].mxu0
      %v1964 = vadd.f32 0.0, %v1963
      %v1965 = vpop.f32.mrb[0].mxu0
      %v1966 = vpop.f32.mrb[0].mxu0
      %v1967 = vadd.f32 0.0, %v1966
      %v1968 = vpop.f32.mrb[0].mxu0
      %1969 = vmatprep.mubr.bf16.mxu0 0
      %1970 = vmatmul.mubr.bf16.gmra.mrb[0].mxu0 %v872
      %v1971 = vpop.f32.mrb[0].mxu0
      %v1972 = vadd.f32 0.0, %v1971
      %v1973 = vpop.f32.mrb[0].mxu0
      %v1974 = vpop.f32.mrb[0].mxu0
      %v1975 = vadd.f32 0.0, %v1974
      %v1976 = vpop.f32.mrb[0].mxu0
      %1977 = vmatprep.mubr.bf16.mxu0 0
      %1978 = vmatmul.mubr.bf16.gmra.mrb[0].mxu0 %v873
      %v1979 = vpop.f32.mrb[0].mxu0
      %v1980 = vadd.f32 0.0, %v1979
      %v1981 = vpop.f32.mrb[0].mxu0
      %v1982 = vpop.f32.mrb[0].mxu0
      %v1983 = vadd.f32 0.0, %v1982
      %v1984 = vpop.f32.mrb[0].mxu0
      %1985 = vmatprep.mubr.bf16.mxu0 0
      %1986 = vmatmul.mubr.bf16.gmra.mrb[0].mxu0 %v874
      %v1987 = vpop.f32.mrb[0].mxu0
      %v1988 = vadd.f32 0.0, %v1987
      %v1989 = vpop.f32.mrb[0].mxu0
      %v1990 = vpop.f32.mrb[0].mxu0
      %v1991 = vadd.f32 0.0, %v1990
      %v1992 = vpop.f32.mrb[0].mxu0
      %1993 = vmatprep.mubr.bf16.mxu0 0
      %1994 = vmatmul.mubr.bf16.gmra.mrb[0].mxu0 %v875
      %v1995 = vpop.f32.mrb[0].mxu0
      %v1996 = vadd.f32 0.0, %v1995
      %v1997 = vpop.f32.mrb[0].mxu0
      %v1998 = vpop.f32.mrb[0].mxu0
      %v1999 = vadd.f32 0.0, %v1998
      %v2000 = vpop.f32.mrb[0].mxu0
      %2001 = vmatprep.mubr.bf16.mxu0 0
      %2002 = vmatmul.mubr.bf16.gmra.mrb[0].mxu0 %v876
      %v2003 = vpop.f32.mrb[0].mxu0
      %v2004 = vadd.f32 0.0, %v2003
      %v2005 = vpop.f32.mrb[0].mxu0
      %v2006 = vpop.f32.mrb[0].mxu0
      %v2007 = vadd.f32 0.0, %v2006
      %v2008 = vpop.f32.mrb[0].mxu0
      %2009 = vmatprep.mubr.bf16.mxu0 0
      %2010 = vmatmul.mubr.bf16.gmra.mrb[0].mxu0 %v877
      %v2011 = vpop.f32.mrb[0].mxu0
      %v2012 = vadd.f32 0.0, %v2011
      %v2013 = vpop.f32.mrb[0].mxu0
      %v2014 = vpop.f32.mrb[0].mxu0
      %v2015 = vadd.f32 0.0, %v2014
      %v2016 = vpop.f32.mrb[0].mxu0
      %2017 = vmatprep.mubr.bf16.mxu0 0
      %2018 = vmatmul.mubr.bf16.gmra.mrb[0].mxu0 %v878
      %v2019 = vpop.f32.mrb[0].mxu0
      %v2020 = vadd.f32 0.0, %v2019
      %v2021 = vpop.f32.mrb[0].mxu0
      %v2022 = vpop.f32.mrb[0].mxu0
      %v2023 = vadd.f32 0.0, %v2022
      %v2024 = vpop.f32.mrb[0].mxu0
      %2025 = vmatprep.mubr.bf16.mxu0 0
      %2026 = vmatmul.mubr.bf16.gmra.mrb[0].mxu0 %v879
      %v2027 = vpop.f32.mrb[0].mxu0
      %v2028 = vadd.f32 0.0, %v2027
      %v2029 = vpop.f32.mrb[0].mxu0
      %v2030 = vpop.f32.mrb[0].mxu0
      %v2031 = vadd.f32 0.0, %v2030
      %v2032 = vpop.f32.mrb[0].mxu0
      %2033 = vdwg.mxu0
      %vm2037 = vcmask 1040384
      %v2038 = vrot.slane %v2023, 7
      %v2039 = vrot.slane %v2028, 7
      %v2040 = vsel %vm2037, %v2038, %v2039
      %v2041 = vrot.slane %v2031, 7
      %v2042 = vsel %vm2037, %v2039, %v2041
      %v2075 = vrot.slane %v1908, 7
      %v2076 = vrot.slane %v1911, 7
      %v2077 = vsel %vm2037, %v2075, %v2076
      %v2078 = vrot.slane %v1916, 7
      %v2079 = vsel %vm2037, %v2076, %v2078
      %v2080 = vrot.slane %v1919, 7
      %v2081 = vsel %vm2037, %v2078, %v2080
      %v2082 = vrot.slane %v1924, 7
      %v2083 = vsel %vm2037, %v2080, %v2082
      %v2084 = vrot.slane %v1927, 7
      %v2085 = vsel %vm2037, %v2082, %v2084
      %v2086 = vrot.slane %v1932, 7
      %v2087 = vsel %vm2037, %v2084, %v2086
      %v2088 = vrot.slane %v1935, 7
      %v2089 = vsel %vm2037, %v2086, %v2088
      %v2090 = vrot.slane %v1940, 7
      %v2091 = vsel %vm2037, %v2088, %v2090
      %v2092 = vrot.slane %v1943, 7
      %v2093 = vsel %vm2037, %v2090, %v2092
      %v2094 = vrot.slane %v1948, 7
      %v2095 = vsel %vm2037, %v2092, %v2094
      %v2096 = vrot.slane %v1951, 7
      %v2097 = vsel %vm2037, %v2094, %v2096
      %v2098 = vrot.slane %v1956, 7
      %v2099 = vsel %vm2037, %v2096, %v2098
      %v2100 = vrot.slane %v1959, 7
      %v2101 = vsel %vm2037, %v2098, %v2100
      %v2102 = vrot.slane %v1964, 7
      %v2103 = vsel %vm2037, %v2100, %v2102
      %v2104 = vrot.slane %v1967, 7
      %v2105 = vsel %vm2037, %v2102, %v2104
      %v2106 = vrot.slane %v1972, 7
      %v2107 = vsel %vm2037, %v2104, %v2106
      %v2108 = vrot.slane %v1975, 7
      %v2109 = vsel %vm2037, %v2106, %v2108
      %v2110 = vrot.slane %v1980, 7
      %v2111 = vsel %vm2037, %v2108, %v2110
      %v2112 = vrot.slane %v1983, 7
      %v2113 = vsel %vm2037, %v2110, %v2112
      %v2114 = vrot.slane %v1988, 7
      %v2115 = vsel %vm2037, %v2112, %v2114
      %v2116 = vrot.slane %v1991, 7
      %v2117 = vsel %vm2037, %v2114, %v2116
      %v2118 = vrot.slane %v1996, 7
      %v2119 = vsel %vm2037, %v2116, %v2118
      %v2120 = vrot.slane %v1999, 7
      %v2121 = vsel %vm2037, %v2118, %v2120
      %v2122 = vrot.slane %v2004, 7
      %v2123 = vsel %vm2037, %v2120, %v2122
      %v2124 = vrot.slane %v2007, 7
      %v2125 = vsel %vm2037, %v2122, %v2124
      %v2126 = vrot.slane %v2012, 7
      %v2127 = vsel %vm2037, %v2124, %v2126
      %v2128 = vrot.slane %v2015, 7
      %v2129 = vsel %vm2037, %v2126, %v2128
      %v2130 = vrot.slane %v2020, 7
      %v2131 = vsel %vm2037, %v2128, %v2130
      %v2132 = vsel %vm2037, %v2130, %v2038
      %v2163 = vsel %vm2037, %v2041, %v2075
      %vm2164 = vmand %vm1681, %vm1745
      %vm2165 = vmand %vm1682, %vm1746
      %vm2166 = vmand %vm1683, %vm1747
      %vm2167 = vmand %vm1684, %vm1748
      %vm2168 = vmand %vm1685, %vm1749
      %vm2169 = vmand %vm1686, %vm1750
      %vm2170 = vmand %vm1687, %vm1751
      %vm2171 = vmand %vm1688, %vm1752
      %vm2172 = vmand %vm1689, %vm1753
      %vm2173 = vmand %vm1690, %vm1754
      %vm2174 = vmand %vm1691, %vm1755
      %vm2175 = vmand %vm1692, %vm1756
      %vm2176 = vmand %vm1693, %vm1757
      %vm2177 = vmand %vm1694, %vm1758
      %vm2178 = vmand %vm1695, %vm1759
      %vm2179 = vmand %vm1696, %vm1760
      %vm2180 = vmand %vm1697, %vm1761
      %vm2181 = vmand %vm1698, %vm1762
      %vm2182 = vmand %vm1699, %vm1763
      %vm2183 = vmand %vm1700, %vm1764
      %vm2184 = vmand %vm1701, %vm1765
      %vm2185 = vmand %vm1702, %vm1766
      %vm2186 = vmand %vm1703, %vm1767
      %vm2187 = vmand %vm1704, %vm1768
      %vm2188 = vmand %vm1705, %vm1769
      %vm2189 = vmand %vm1706, %vm1770
      %vm2190 = vmand %vm1707, %vm1771
      %vm2191 = vmand %vm1708, %vm1772
      %vm2192 = vmand %vm1709, %vm1773
      %vm2193 = vmand %vm1710, %vm1774
      %vm2194 = vmand %vm1711, %vm1775
      %vm2195 = vmand %vm1712, %vm1776
      %v2196 = vsel %vm2164, 1, 0
      %v2197 = vsel %vm2165, 1, 0
      %v2198 = vsel %vm2166, 1, 0
      %v2199 = vsel %vm2167, 1, 0
      %v2200 = vsel %vm2168, 1, 0
      %v2201 = vsel %vm2169, 1, 0
      %v2202 = vsel %vm2170, 1, 0
      %v2203 = vsel %vm2171, 1, 0
      %v2204 = vsel %vm2172, 1, 0
      %v2205 = vsel %vm2173, 1, 0
      %v2206 = vsel %vm2174, 1, 0
      %v2207 = vsel %vm2175, 1, 0
      %v2208 = vsel %vm2176, 1, 0
      %v2209 = vsel %vm2177, 1, 0
      %v2210 = vsel %vm2178, 1, 0
      %v2211 = vsel %vm2179, 1, 0
      %v2212 = vsel %vm2180, 1, 0
      %v2213 = vsel %vm2181, 1, 0
      %v2214 = vsel %vm2182, 1, 0
      %v2215 = vsel %vm2183, 1, 0
      %v2216 = vsel %vm2184, 1, 0
      %v2217 = vsel %vm2185, 1, 0
      %v2218 = vsel %vm2186, 1, 0
      %v2219 = vsel %vm2187, 1, 0
      %v2220 = vsel %vm2188, 1, 0
      %v2221 = vsel %vm2189, 1, 0
      %v2222 = vsel %vm2190, 1, 0
      %v2223 = vsel %vm2191, 1, 0
      %v2224 = vsel %vm2192, 1, 0
      %v2225 = vsel %vm2193, 1, 0
      %v2226 = vsel %vm2194, 1, 0
      %v2227 = vsel %vm2195, 1, 0
      %vm2228 = vcmp.eq.s32.totalorder %v2196, 1
      %vm2229 = vcmp.eq.s32.totalorder %v2197, 1
      %vm2230 = vcmp.eq.s32.totalorder %v2198, 1
      %vm2231 = vcmp.eq.s32.totalorder %v2199, 1
      %vm2232 = vcmp.eq.s32.totalorder %v2200, 1
      %vm2233 = vcmp.eq.s32.totalorder %v2201, 1
      %vm2234 = vcmp.eq.s32.totalorder %v2202, 1
      %vm2235 = vcmp.eq.s32.totalorder %v2203, 1
      %vm2236 = vcmp.eq.s32.totalorder %v2204, 1
      %vm2237 = vcmp.eq.s32.totalorder %v2205, 1
      %vm2238 = vcmp.eq.s32.totalorder %v2206, 1
      %vm2239 = vcmp.eq.s32.totalorder %v2207, 1
      %vm2240 = vcmp.eq.s32.totalorder %v2208, 1
      %vm2241 = vcmp.eq.s32.totalorder %v2209, 1
      %vm2242 = vcmp.eq.s32.totalorder %v2210, 1
      %vm2243 = vcmp.eq.s32.totalorder %v2211, 1
      %vm2244 = vcmp.eq.s32.totalorder %v2212, 1
      %vm2245 = vcmp.eq.s32.totalorder %v2213, 1
      %vm2246 = vcmp.eq.s32.totalorder %v2214, 1
      %vm2247 = vcmp.eq.s32.totalorder %v2215, 1
      %vm2248 = vcmp.eq.s32.totalorder %v2216, 1
      %vm2249 = vcmp.eq.s32.totalorder %v2217, 1
      %vm2250 = vcmp.eq.s32.totalorder %v2218, 1
      %vm2251 = vcmp.eq.s32.totalorder %v2219, 1
      %vm2252 = vcmp.eq.s32.totalorder %v2220, 1
      %vm2253 = vcmp.eq.s32.totalorder %v2221, 1
      %vm2254 = vcmp.eq.s32.totalorder %v2222, 1
      %vm2255 = vcmp.eq.s32.totalorder %v2223, 1
      %vm2256 = vcmp.eq.s32.totalorder %v2224, 1
      %vm2257 = vcmp.eq.s32.totalorder %v2225, 1
      %vm2258 = vcmp.eq.s32.totalorder %v2226, 1
      %vm2259 = vcmp.eq.s32.totalorder %v2227, 1
      %v2260 = vsel %vm2228, %v2040, 0.0
      %v2261 = vsel %vm2229, %v2042, 0.0
      %v2262 = vsel %vm2230, %v2163, 0.0
      %v2263 = vsel %vm2231, %v2077, 0.0
      %v2264 = vsel %vm2232, %v2079, 0.0
      %v2265 = vsel %vm2233, %v2081, 0.0
      %v2266 = vsel %vm2234, %v2083, 0.0
      %v2267 = vsel %vm2235, %v2085, 0.0
      %v2268 = vsel %vm2236, %v2087, 0.0
      %v2269 = vsel %vm2237, %v2089, 0.0
      %v2270 = vsel %vm2238, %v2091, 0.0
      %v2271 = vsel %vm2239, %v2093, 0.0
      %v2272 = vsel %vm2240, %v2095, 0.0
      %v2273 = vsel %vm2241, %v2097, 0.0
      %v2274 = vsel %vm2242, %v2099, 0.0
      %v2275 = vsel %vm2243, %v2101, 0.0
      %v2276 = vsel %vm2244, %v2103, 0.0
      %v2277 = vsel %vm2245, %v2105, 0.0
      %v2278 = vsel %vm2246, %v2107, 0.0
      %v2279 = vsel %vm2247, %v2109, 0.0
      %v2280 = vsel %vm2248, %v2111, 0.0
      %v2281 = vsel %vm2249, %v2113, 0.0
      %v2282 = vsel %vm2250, %v2115, 0.0
      %v2283 = vsel %vm2251, %v2117, 0.0
      %v2284 = vsel %vm2252, %v2119, 0.0
      %v2285 = vsel %vm2253, %v2121, 0.0
      %v2286 = vsel %vm2254, %v2123, 0.0
      %v2287 = vsel %vm2255, %v2125, 0.0
      %v2288 = vsel %vm2256, %v2127, 0.0
      %v2289 = vsel %vm2257, %v2129, 0.0
      %v2290 = vsel %vm2258, %v2131, 0.0
      %v2291 = vsel %vm2259, %v2132, 0.0
      %v2292 = vadd.f32 %v2260, 0.0
      %v2293 = vadd.f32 %v2261, 0.0
      %v2294 = vadd.f32 %v2262, 0.0
      %v2295 = vadd.f32 %v2263, 0.0
      %v2296 = vadd.f32 %v2264, 0.0
      %v2297 = vadd.f32 %v2265, 0.0
      %v2298 = vadd.f32 %v2266, 0.0
      %v2299 = vadd.f32 %v2267, 0.0
      %v2300 = vadd.f32 %v2268, 0.0
      %v2301 = vadd.f32 %v2269, 0.0
      %v2302 = vadd.f32 %v2270, 0.0
      %v2303 = vadd.f32 %v2271, 0.0
      %v2304 = vadd.f32 %v2272, 0.0
      %v2305 = vadd.f32 %v2273, 0.0
      %v2306 = vadd.f32 %v2274, 0.0
      %v2307 = vadd.f32 %v2275, 0.0
      %v2308 = vadd.f32 %v2276, 0.0
      %v2309 = vadd.f32 %v2277, 0.0
      %v2310 = vadd.f32 %v2278, 0.0
      %v2311 = vadd.f32 %v2279, 0.0
      %v2312 = vadd.f32 %v2280, 0.0
      %v2313 = vadd.f32 %v2281, 0.0
      %v2314 = vadd.f32 %v2282, 0.0
      %v2315 = vadd.f32 %v2283, 0.0
      %v2316 = vadd.f32 %v2284, 0.0
      %v2317 = vadd.f32 %v2285, 0.0
      %v2318 = vadd.f32 %v2286, 0.0
      %v2319 = vadd.f32 %v2287, 0.0
      %v2320 = vadd.f32 %v2288, 0.0
      %v2321 = vadd.f32 %v2289, 0.0
      %v2322 = vadd.f32 %v2290, 0.0
      %v2323 = vadd.f32 %v2291, 0.0
      %s2324 = scalar_lea.vmem %s5, 64
      %v2325 = vld [vmem:[%s2324] sm:$0xf]
      %v2326 = vld [vmem:[%s2324 + $0x4] sm:$0xf]
      %v2327 = vld [vmem:[%s2324 + $0x8] sm:$0xf]
      %v2328 = vld [vmem:[%s2324 + $0xc] sm:$0xf]
      %v2329 = vld [vmem:[%s2324 + $0x10] sm:$0xf]
      %v2330 = vld [vmem:[%s2324 + $0x14] sm:$0xf]
      %v2331 = vld [vmem:[%s2324 + $0x18] sm:$0xf]
      %v2332 = vld [vmem:[%s2324 + $0x1c] sm:$0xf]
      %v2333 = vld [vmem:[%s2324 + $0x20] sm:$0xf]
      %v2334 = vld [vmem:[%s2324 + $0x24] sm:$0xf]
      %v2335 = vld [vmem:[%s2324 + $0x28] sm:$0xf]
      %v2336 = vld [vmem:[%s2324 + $0x2c] sm:$0xf]
      %v2337 = vld [vmem:[%s2324 + $0x30] sm:$0xf]
      %v2338 = vld [vmem:[%s2324 + $0x34] sm:$0xf]
      %v2339 = vld [vmem:[%s2324 + $0x38] sm:$0xf]
      %v2340 = vld [vmem:[%s2324 + $0x3c] sm:$0xf]
      %v2357 = vunpack.c.l.b16 %v2325
      %v2358 = vunpack.c.l.b16 %v2326
      %v2359 = vunpack.c.l.b16 %v2327
      %v2360 = vunpack.c.l.b16 %v2328
      %v2361 = vunpack.c.l.b16 %v2329
      %v2362 = vunpack.c.l.b16 %v2330
      %v2363 = vunpack.c.l.b16 %v2331
      %v2364 = vunpack.c.l.b16 %v2332
      %v2365 = vunpack.c.l.b16 %v2333
      %v2366 = vunpack.c.l.b16 %v2334
      %v2367 = vunpack.c.l.b16 %v2335
      %v2368 = vunpack.c.l.b16 %v2336
      %v2369 = vunpack.c.l.b16 %v2337
      %v2370 = vunpack.c.l.b16 %v2338
      %v2371 = vunpack.c.l.b16 %v2339
      %v2372 = vunpack.c.l.b16 %v2340
      %v2373 = vpack.c.b16 %v2358, %v2357
      %v2374 = vpack.c.b16 %v2360, %v2359
      %v2375 = vpack.c.b16 %v2362, %v2361
      %v2376 = vpack.c.b16 %v2364, %v2363
      %v2377 = vpack.c.b16 %v2366, %v2365
      %v2378 = vpack.c.b16 %v2368, %v2367
      %v2379 = vpack.c.b16 %v2370, %v2369
      %v2380 = vpack.c.b16 %v2372, %v2371
      %2389 = vmatprep.subr.bf16.mxu0 0
      %2390 = vmatpush1.bf16.msra.mxu0 %v2373
      %2391 = vmatprep.subr.bf16.mxu0 0
      %2392 = vmatpush1.bf16.msra.mxu0 %v2374
      %2393 = vmatprep.subr.bf16.mxu0 0
      %2394 = vmatpush1.bf16.msra.mxu0 %v2375
      %2395 = vmatprep.subr.bf16.mxu0 0
      %2396 = vmatpush1.bf16.msra.mxu0 %v2376
      %2397 = vmatprep.subr.bf16.mxu0 0
      %2398 = vmatpush1.bf16.msra.mxu0 %v2377
      %2399 = vmatprep.subr.bf16.mxu0 0
      %2400 = vmatpush1.bf16.msra.mxu0 %v2378
      %2401 = vmatprep.subr.bf16.mxu0 0
      %2402 = vmatpush1.bf16.msra.mxu0 %v2379
      %2403 = vmatprep.subr.bf16.mxu0 0
      %2404 = vmatpush1.bf16.msra.mxu0 %v2380
      %2405 = vmatprep.subr.bf16.mxu0 0
      %2406 = vmatpush1.bf16.msra.mxu0 0
      %2407 = vmatprep.subr.bf16.mxu0 0
      %2408 = vmatpush1.bf16.msra.mxu0 0
      %2409 = vmatprep.subr.bf16.mxu0 0
      %2410 = vmatpush1.bf16.msra.mxu0 0
      %2411 = vmatprep.subr.bf16.mxu0 0
      %2412 = vmatpush1.bf16.msra.mxu0 0
      %2413 = vmatprep.subr.bf16.mxu0 0
      %2414 = vmatpush1.bf16.msra.mxu0 0
      %2415 = vmatprep.subr.bf16.mxu0 0
      %2416 = vmatpush1.bf16.msra.mxu0 0
      %2417 = vmatprep.subr.bf16.mxu0 0
      %2418 = vmatpush1.bf16.msra.mxu0 0
      %2419 = vmatprep.subr.bf16.mxu0 0
      %2420 = vmatpush1.bf16.msra.mxu0 0
      %2421 = vmatprep.mubr.bf16.mxu0 0
      %2422 = vmatmul.mubr.bf16.gmra.mrb[0].mxu0 %v864
      %v2423 = vpop.f32.mrb[0].mxu0
      %v2424 = vadd.f32 0.0, %v2423
      %v2425 = vpop.f32.mrb[0].mxu0
      %v2426 = vpop.f32.mrb[0].mxu0
      %v2427 = vadd.f32 0.0, %v2426
      %v2428 = vpop.f32.mrb[0].mxu0
      %2429 = vmatprep.mubr.bf16.mxu0 0
      %2430 = vmatmul.mubr.bf16.gmra.mrb[0].mxu0 %v865
      %v2431 = vpop.f32.mrb[0].mxu0
      %v2432 = vadd.f32 0.0, %v2431
      %v2433 = vpop.f32.mrb[0].mxu0
      %v2434 = vpop.f32.mrb[0].mxu0
      %v2435 = vadd.f32 0.0, %v2434
      %v2436 = vpop.f32.mrb[0].mxu0
      %2437 = vmatprep.mubr.bf16.mxu0 0
      %2438 = vmatmul.mubr.bf16.gmra.mrb[0].mxu0 %v866
      %v2439 = vpop.f32.mrb[0].mxu0
      %v2440 = vadd.f32 0.0, %v2439
      %v2441 = vpop.f32.mrb[0].mxu0
      %v2442 = vpop.f32.mrb[0].mxu0
      %v2443 = vadd.f32 0.0, %v2442
      %v2444 = vpop.f32.mrb[0].mxu0
      %2445 = vmatprep.mubr.bf16.mxu0 0
      %2446 = vmatmul.mubr.bf16.gmra.mrb[0].mxu0 %v867
      %v2447 = vpop.f32.mrb[0].mxu0
      %v2448 = vadd.f32 0.0, %v2447
      %v2449 = vpop.f32.mrb[0].mxu0
      %v2450 = vpop.f32.mrb[0].mxu0
      %v2451 = vadd.f32 0.0, %v2450
      %v2452 = vpop.f32.mrb[0].mxu0
      %2453 = vmatprep.mubr.bf16.mxu0 0
      %2454 = vmatmul.mubr.bf16.gmra.mrb[0].mxu0 %v868
      %v2455 = vpop.f32.mrb[0].mxu0
      %v2456 = vadd.f32 0.0, %v2455
      %v2457 = vpop.f32.mrb[0].mxu0
      %v2458 = vpop.f32.mrb[0].mxu0
      %v2459 = vadd.f32 0.0, %v2458
      %v2460 = vpop.f32.mrb[0].mxu0
      %2461 = vmatprep.mubr.bf16.mxu0 0
      %2462 = vmatmul.mubr.bf16.gmra.mrb[0].mxu0 %v869
      %v2463 = vpop.f32.mrb[0].mxu0
      %v2464 = vadd.f32 0.0, %v2463
      %v2465 = vpop.f32.mrb[0].mxu0
      %v2466 = vpop.f32.mrb[0].mxu0
      %v2467 = vadd.f32 0.0, %v2466
      %v2468 = vpop.f32.mrb[0].mxu0
      %2469 = vmatprep.mubr.bf16.mxu0 0
      %2470 = vmatmul.mubr.bf16.gmra.mrb[0].mxu0 %v870
      %v2471 = vpop.f32.mrb[0].mxu0
      %v2472 = vadd.f32 0.0, %v2471
      %v2473 = vpop.f32.mrb[0].mxu0
      %v2474 = vpop.f32.mrb[0].mxu0
      %v2475 = vadd.f32 0.0, %v2474
      %v2476 = vpop.f32.mrb[0].mxu0
      %2477 = vmatprep.mubr.bf16.mxu0 0
      %2478 = vmatmul.mubr.bf16.gmra.mrb[0].mxu0 %v871
      %v2479 = vpop.f32.mrb[0].mxu0
      %v2480 = vadd.f32 0.0, %v2479
      %v2481 = vpop.f32.mrb[0].mxu0
      %v2482 = vpop.f32.mrb[0].mxu0
      %v2483 = vadd.f32 0.0, %v2482
      %v2484 = vpop.f32.mrb[0].mxu0
      %2485 = vmatprep.mubr.bf16.mxu0 0
      %2486 = vmatmul.mubr.bf16.gmra.mrb[0].mxu0 %v872
      %v2487 = vpop.f32.mrb[0].mxu0
      %v2488 = vadd.f32 0.0, %v2487
      %v2489 = vpop.f32.mrb[0].mxu0
      %v2490 = vpop.f32.mrb[0].mxu0
      %v2491 = vadd.f32 0.0, %v2490
      %v2492 = vpop.f32.mrb[0].mxu0
      %2493 = vmatprep.mubr.bf16.mxu0 0
      %2494 = vmatmul.mubr.bf16.gmra.mrb[0].mxu0 %v873
      %v2495 = vpop.f32.mrb[0].mxu0
      %v2496 = vadd.f32 0.0, %v2495
      %v2497 = vpop.f32.mrb[0].mxu0
      %v2498 = vpop.f32.mrb[0].mxu0
      %v2499 = vadd.f32 0.0, %v2498
      %v2500 = vpop.f32.mrb[0].mxu0
      %2501 = vmatprep.mubr.bf16.mxu0 0
      %2502 = vmatmul.mubr.bf16.gmra.mrb[0].mxu0 %v874
      %v2503 = vpop.f32.mrb[0].mxu0
      %v2504 = vadd.f32 0.0, %v2503
      %v2505 = vpop.f32.mrb[0].mxu0
      %v2506 = vpop.f32.mrb[0].mxu0
      %v2507 = vadd.f32 0.0, %v2506
      %v2508 = vpop.f32.mrb[0].mxu0
      %2509 = vmatprep.mubr.bf16.mxu0 0
      %2510 = vmatmul.mubr.bf16.gmra.mrb[0].mxu0 %v875
      %v2511 = vpop.f32.mrb[0].mxu0
      %v2512 = vadd.f32 0.0, %v2511
      %v2513 = vpop.f32.mrb[0].mxu0
      %v2514 = vpop.f32.mrb[0].mxu0
      %v2515 = vadd.f32 0.0, %v2514
      %v2516 = vpop.f32.mrb[0].mxu0
      %2517 = vmatprep.mubr.bf16.mxu0 0
      %2518 = vmatmul.mubr.bf16.gmra.mrb[0].mxu0 %v876
      %v2519 = vpop.f32.mrb[0].mxu0
      %v2520 = vadd.f32 0.0, %v2519
      %v2521 = vpop.f32.mrb[0].mxu0
      %v2522 = vpop.f32.mrb[0].mxu0
      %v2523 = vadd.f32 0.0, %v2522
      %v2524 = vpop.f32.mrb[0].mxu0
      %2525 = vmatprep.mubr.bf16.mxu0 0
      %2526 = vmatmul.mubr.bf16.gmra.mrb[0].mxu0 %v877
      %v2527 = vpop.f32.mrb[0].mxu0
      %v2528 = vadd.f32 0.0, %v2527
      %v2529 = vpop.f32.mrb[0].mxu0
      %v2530 = vpop.f32.mrb[0].mxu0
      %v2531 = vadd.f32 0.0, %v2530
      %v2532 = vpop.f32.mrb[0].mxu0
      %2533 = vmatprep.mubr.bf16.mxu0 0
      %2534 = vmatmul.mubr.bf16.gmra.mrb[0].mxu0 %v878
      %v2535 = vpop.f32.mrb[0].mxu0
      %v2536 = vadd.f32 0.0, %v2535
      %v2537 = vpop.f32.mrb[0].mxu0
      %v2538 = vpop.f32.mrb[0].mxu0
      %v2539 = vadd.f32 0.0, %v2538
      %v2540 = vpop.f32.mrb[0].mxu0
      %2541 = vmatprep.mubr.bf16.mxu0 0
      %2542 = vmatmul.mubr.bf16.gmra.mrb[0].mxu0 %v879
      %v2543 = vpop.f32.mrb[0].mxu0
      %v2544 = vadd.f32 0.0, %v2543
      %v2545 = vpop.f32.mrb[0].mxu0
      %v2546 = vpop.f32.mrb[0].mxu0
      %v2547 = vadd.f32 0.0, %v2546
      %v2548 = vpop.f32.mrb[0].mxu0
      %2549 = vdwg.mxu0
      %v2550 = vsel %vm1681, 1, 0
      %v2551 = vsel %vm1682, 1, 0
      %v2552 = vsel %vm1683, 1, 0
      %v2553 = vsel %vm1684, 1, 0
      %v2554 = vsel %vm1685, 1, 0
      %v2555 = vsel %vm1686, 1, 0
      %v2556 = vsel %vm1687, 1, 0
      %v2557 = vsel %vm1688, 1, 0
      %v2558 = vsel %vm1689, 1, 0
      %v2559 = vsel %vm1690, 1, 0
      %v2560 = vsel %vm1691, 1, 0
      %v2561 = vsel %vm1692, 1, 0
      %v2562 = vsel %vm1693, 1, 0
      %v2563 = vsel %vm1694, 1, 0
      %v2564 = vsel %vm1695, 1, 0
      %v2565 = vsel %vm1696, 1, 0
      %v2566 = vsel %vm1697, 1, 0
      %v2567 = vsel %vm1698, 1, 0
      %v2568 = vsel %vm1699, 1, 0
      %v2569 = vsel %vm1700, 1, 0
      %v2570 = vsel %vm1701, 1, 0
      %v2571 = vsel %vm1702, 1, 0
      %v2572 = vsel %vm1703, 1, 0
      %v2573 = vsel %vm1704, 1, 0
      %v2574 = vsel %vm1705, 1, 0
      %v2575 = vsel %vm1706, 1, 0
      %v2576 = vsel %vm1707, 1, 0
      %v2577 = vsel %vm1708, 1, 0
      %v2578 = vsel %vm1709, 1, 0
      %v2579 = vsel %vm1710, 1, 0
      %v2580 = vsel %vm1711, 1, 0
      %v2581 = vsel %vm1712, 1, 0
      %vm2582 = vcmp.eq.s32.totalorder %v2550, 1
      %vm2583 = vcmp.eq.s32.totalorder %v2551, 1
      %vm2584 = vcmp.eq.s32.totalorder %v2552, 1
      %vm2585 = vcmp.eq.s32.totalorder %v2553, 1
      %vm2586 = vcmp.eq.s32.totalorder %v2554, 1
      %vm2587 = vcmp.eq.s32.totalorder %v2555, 1
      %vm2588 = vcmp.eq.s32.totalorder %v2556, 1
      %vm2589 = vcmp.eq.s32.totalorder %v2557, 1
      %vm2590 = vcmp.eq.s32.totalorder %v2558, 1
      %vm2591 = vcmp.eq.s32.totalorder %v2559, 1
      %vm2592 = vcmp.eq.s32.totalorder %v2560, 1
      %vm2593 = vcmp.eq.s32.totalorder %v2561, 1
      %vm2594 = vcmp.eq.s32.totalorder %v2562, 1
      %vm2595 = vcmp.eq.s32.totalorder %v2563, 1
      %vm2596 = vcmp.eq.s32.totalorder %v2564, 1
      %vm2597 = vcmp.eq.s32.totalorder %v2565, 1
      %vm2598 = vcmp.eq.s32.totalorder %v2566, 1
      %vm2599 = vcmp.eq.s32.totalorder %v2567, 1
      %vm2600 = vcmp.eq.s32.totalorder %v2568, 1
      %vm2601 = vcmp.eq.s32.totalorder %v2569, 1
      %vm2602 = vcmp.eq.s32.totalorder %v2570, 1
      %vm2603 = vcmp.eq.s32.totalorder %v2571, 1
      %vm2604 = vcmp.eq.s32.totalorder %v2572, 1
      %vm2605 = vcmp.eq.s32.totalorder %v2573, 1
      %vm2606 = vcmp.eq.s32.totalorder %v2574, 1
      %vm2607 = vcmp.eq.s32.totalorder %v2575, 1
      %vm2608 = vcmp.eq.s32.totalorder %v2576, 1
      %vm2609 = vcmp.eq.s32.totalorder %v2577, 1
      %vm2610 = vcmp.eq.s32.totalorder %v2578, 1
      %vm2611 = vcmp.eq.s32.totalorder %v2579, 1
      %vm2612 = vcmp.eq.s32.totalorder %v2580, 1
      %vm2613 = vcmp.eq.s32.totalorder %v2581, 1
      %v2614 = vsel %vm2582, %v2544, 0.0
      %v2615 = vsel %vm2583, %v2547, 0.0
      %v2616 = vsel %vm2584, %v2424, 0.0
      %v2617 = vsel %vm2585, %v2427, 0.0
      %v2618 = vsel %vm2586, %v2432, 0.0
      %v2619 = vsel %vm2587, %v2435, 0.0
      %v2620 = vsel %vm2588, %v2440, 0.0
      %v2621 = vsel %vm2589, %v2443, 0.0
      %v2622 = vsel %vm2590, %v2448, 0.0
      %v2623 = vsel %vm2591, %v2451, 0.0
      %v2624 = vsel %vm2592, %v2456, 0.0
      %v2625 = vsel %vm2593, %v2459, 0.0
      %v2626 = vsel %vm2594, %v2464, 0.0
      %v2627 = vsel %vm2595, %v2467, 0.0
      %v2628 = vsel %vm2596, %v2472, 0.0
      %v2629 = vsel %vm2597, %v2475, 0.0
      %v2630 = vsel %vm2598, %v2480, 0.0
      %v2631 = vsel %vm2599, %v2483, 0.0
      %v2632 = vsel %vm2600, %v2488, 0.0
      %v2633 = vsel %vm2601, %v2491, 0.0
      %v2634 = vsel %vm2602, %v2496, 0.0
      %v2635 = vsel %vm2603, %v2499, 0.0
      %v2636 = vsel %vm2604, %v2504, 0.0
      %v2637 = vsel %vm2605, %v2507, 0.0
      %v2638 = vsel %vm2606, %v2512, 0.0
      %v2639 = vsel %vm2607, %v2515, 0.0
      %v2640 = vsel %vm2608, %v2520, 0.0
      %v2641 = vsel %vm2609, %v2523, 0.0
      %v2642 = vsel %vm2610, %v2528, 0.0
      %v2643 = vsel %vm2611, %v2531, 0.0
      %v2644 = vsel %vm2612, %v2536, 0.0
      %v2645 = vsel %vm2613, %v2539, 0.0
      %v2646 = vadd.f32 %v2292, %v2614
      %v2647 = vadd.f32 %v2293, %v2615
      %v2648 = vadd.f32 %v2294, %v2616
      %v2649 = vadd.f32 %v2295, %v2617
      %v2650 = vadd.f32 %v2296, %v2618
      %v2651 = vadd.f32 %v2297, %v2619
      %v2652 = vadd.f32 %v2298, %v2620
      %v2653 = vadd.f32 %v2299, %v2621
      %v2654 = vadd.f32 %v2300, %v2622
      %v2655 = vadd.f32 %v2301, %v2623
      %v2656 = vadd.f32 %v2302, %v2624
      %v2657 = vadd.f32 %v2303, %v2625
      %v2658 = vadd.f32 %v2304, %v2626
      %v2659 = vadd.f32 %v2305, %v2627
      %v2660 = vadd.f32 %v2306, %v2628
      %v2661 = vadd.f32 %v2307, %v2629
      %v2662 = vadd.f32 %v2308, %v2630
      %v2663 = vadd.f32 %v2309, %v2631
      %v2664 = vadd.f32 %v2310, %v2632
      %v2665 = vadd.f32 %v2311, %v2633
      %v2666 = vadd.f32 %v2312, %v2634
      %v2667 = vadd.f32 %v2313, %v2635
      %v2668 = vadd.f32 %v2314, %v2636
      %v2669 = vadd.f32 %v2315, %v2637
      %v2670 = vadd.f32 %v2316, %v2638
      %v2671 = vadd.f32 %v2317, %v2639
      %v2672 = vadd.f32 %v2318, %v2640
      %v2673 = vadd.f32 %v2319, %v2641
      %v2674 = vadd.f32 %v2320, %v2642
      %v2675 = vadd.f32 %v2321, %v2643
      %v2676 = vadd.f32 %v2322, %v2644
      %v2677 = vadd.f32 %v2323, %v2645
      %s2678 = scalar_lea.vmem %s5, 128
      %v2679 = vld [vmem:[%s2678] sm:$0xf]
      %v2680 = vld [vmem:[%s2678 + $0x4] sm:$0xf]
      %v2681 = vld [vmem:[%s2678 + $0x8] sm:$0xf]
      %v2682 = vld [vmem:[%s2678 + $0xc] sm:$0xf]
      %v2683 = vld [vmem:[%s2678 + $0x10] sm:$0xf]
      %v2684 = vld [vmem:[%s2678 + $0x14] sm:$0xf]
      %v2685 = vld [vmem:[%s2678 + $0x18] sm:$0xf]
      %v2686 = vld [vmem:[%s2678 + $0x1c] sm:$0xf]
      %v2687 = vld [vmem:[%s2678 + $0x20] sm:$0xf]
      %v2688 = vld [vmem:[%s2678 + $0x24] sm:$0xf]
      %v2689 = vld [vmem:[%s2678 + $0x28] sm:$0xf]
      %v2690 = vld [vmem:[%s2678 + $0x2c] sm:$0xf]
      %v2691 = vld [vmem:[%s2678 + $0x30] sm:$0xf]
      %v2692 = vld [vmem:[%s2678 + $0x34] sm:$0xf]
      %v2693 = vld [vmem:[%s2678 + $0x38] sm:$0xf]
      %v2694 = vld [vmem:[%s2678 + $0x3c] sm:$0xf]
      %v2711 = vunpack.c.l.b16 %v2679
      %v2712 = vunpack.c.l.b16 %v2680
      %v2713 = vunpack.c.l.b16 %v2681
      %v2714 = vunpack.c.l.b16 %v2682
      %v2715 = vunpack.c.l.b16 %v2683
      %v2716 = vunpack.c.l.b16 %v2684
      %v2717 = vunpack.c.l.b16 %v2685
      %v2718 = vunpack.c.l.b16 %v2686
      %v2719 = vunpack.c.l.b16 %v2687
      %v2720 = vunpack.c.l.b16 %v2688
      %v2721 = vunpack.c.l.b16 %v2689
      %v2722 = vunpack.c.l.b16 %v2690
      %v2723 = vunpack.c.l.b16 %v2691
      %v2724 = vunpack.c.l.b16 %v2692
      %v2725 = vunpack.c.l.b16 %v2693
      %v2726 = vunpack.c.l.b16 %v2694
      %v2727 = vpack.c.b16 %v2712, %v2711
      %v2728 = vpack.c.b16 %v2714, %v2713
      %v2729 = vpack.c.b16 %v2716, %v2715
      %v2730 = vpack.c.b16 %v2718, %v2717
      %v2731 = vpack.c.b16 %v2720, %v2719
      %v2732 = vpack.c.b16 %v2722, %v2721
      %v2733 = vpack.c.b16 %v2724, %v2723
      %v2734 = vpack.c.b16 %v2726, %v2725
      %2743 = vmatprep.subr.bf16.mxu0 0
      %2744 = vmatpush1.bf16.msra.mxu0 %v2727
      %2745 = vmatprep.subr.bf16.mxu0 0
      %2746 = vmatpush1.bf16.msra.mxu0 %v2728
      %2747 = vmatprep.subr.bf16.mxu0 0
      %2748 = vmatpush1.bf16.msra.mxu0 %v2729
      %2749 = vmatprep.subr.bf16.mxu0 0
      %2750 = vmatpush1.bf16.msra.mxu0 %v2730
      %2751 = vmatprep.subr.bf16.mxu0 0
      %2752 = vmatpush1.bf16.msra.mxu0 %v2731
      %2753 = vmatprep.subr.bf16.mxu0 0
      %2754 = vmatpush1.bf16.msra.mxu0 %v2732
      %2755 = vmatprep.subr.bf16.mxu0 0
      %2756 = vmatpush1.bf16.msra.mxu0 %v2733
      %2757 = vmatprep.subr.bf16.mxu0 0
      %2758 = vmatpush1.bf16.msra.mxu0 %v2734
      %2759 = vmatprep.subr.bf16.mxu0 0
      %2760 = vmatpush1.bf16.msra.mxu0 0
      %2761 = vmatprep.subr.bf16.mxu0 0
      %2762 = vmatpush1.bf16.msra.mxu0 0
      %2763 = vmatprep.subr.bf16.mxu0 0
      %2764 = vmatpush1.bf16.msra.mxu0 0
      %2765 = vmatprep.subr.bf16.mxu0 0
      %2766 = vmatpush1.bf16.msra.mxu0 0
      %2767 = vmatprep.subr.bf16.mxu0 0
      %2768 = vmatpush1.bf16.msra.mxu0 0
      %2769 = vmatprep.subr.bf16.mxu0 0
      %2770 = vmatpush1.bf16.msra.mxu0 0
      %2771 = vmatprep.subr.bf16.mxu0 0
      %2772 = vmatpush1.bf16.msra.mxu0 0
      %2773 = vmatprep.subr.bf16.mxu0 0
      %2774 = vmatpush1.bf16.msra.mxu0 0
      %2775 = vmatprep.mubr.bf16.mxu0 0
      %2776 = vmatmul.mubr.bf16.gmra.mrb[0].mxu0 %v864
      %v2777 = vpop.f32.mrb[0].mxu0
      %v2778 = vadd.f32 0.0, %v2777
      %v2779 = vpop.f32.mrb[0].mxu0
      %v2780 = vpop.f32.mrb[0].mxu0
      %v2781 = vadd.f32 0.0, %v2780
      %v2782 = vpop.f32.mrb[0].mxu0
      %2783 = vmatprep.mubr.bf16.mxu0 0
      %2784 = vmatmul.mubr.bf16.gmra.mrb[0].mxu0 %v865
      %v2785 = vpop.f32.mrb[0].mxu0
      %v2786 = vadd.f32 0.0, %v2785
      %v2787 = vpop.f32.mrb[0].mxu0
      %v2788 = vpop.f32.mrb[0].mxu0
      %v2789 = vadd.f32 0.0, %v2788
      %v2790 = vpop.f32.mrb[0].mxu0
      %2791 = vmatprep.mubr.bf16.mxu0 0
      %2792 = vmatmul.mubr.bf16.gmra.mrb[0].mxu0 %v866
      %v2793 = vpop.f32.mrb[0].mxu0
      %v2794 = vadd.f32 0.0, %v2793
      %v2795 = vpop.f32.mrb[0].mxu0
      %v2796 = vpop.f32.mrb[0].mxu0
      %v2797 = vadd.f32 0.0, %v2796
      %v2798 = vpop.f32.mrb[0].mxu0
      %2799 = vmatprep.mubr.bf16.mxu0 0
      %2800 = vmatmul.mubr.bf16.gmra.mrb[0].mxu0 %v867
      %v2801 = vpop.f32.mrb[0].mxu0
      %v2802 = vadd.f32 0.0, %v2801
      %v2803 = vpop.f32.mrb[0].mxu0
      %v2804 = vpop.f32.mrb[0].mxu0
      %v2805 = vadd.f32 0.0, %v2804
      %v2806 = vpop.f32.mrb[0].mxu0
      %2807 = vmatprep.mubr.bf16.mxu0 0
      %2808 = vmatmul.mubr.bf16.gmra.mrb[0].mxu0 %v868
      %v2809 = vpop.f32.mrb[0].mxu0
      %v2810 = vadd.f32 0.0, %v2809
      %v2811 = vpop.f32.mrb[0].mxu0
      %v2812 = vpop.f32.mrb[0].mxu0
      %v2813 = vadd.f32 0.0, %v2812
      %v2814 = vpop.f32.mrb[0].mxu0
      %2815 = vmatprep.mubr.bf16.mxu0 0
      %2816 = vmatmul.mubr.bf16.gmra.mrb[0].mxu0 %v869
      %v2817 = vpop.f32.mrb[0].mxu0
      %v2818 = vadd.f32 0.0, %v2817
      %v2819 = vpop.f32.mrb[0].mxu0
      %v2820 = vpop.f32.mrb[0].mxu0
      %v2821 = vadd.f32 0.0, %v2820
      %v2822 = vpop.f32.mrb[0].mxu0
      %2823 = vmatprep.mubr.bf16.mxu0 0
      %2824 = vmatmul.mubr.bf16.gmra.mrb[0].mxu0 %v870
      %v2825 = vpop.f32.mrb[0].mxu0
      %v2826 = vadd.f32 0.0, %v2825
      %v2827 = vpop.f32.mrb[0].mxu0
      %v2828 = vpop.f32.mrb[0].mxu0
      %v2829 = vadd.f32 0.0, %v2828
      %v2830 = vpop.f32.mrb[0].mxu0
      %2831 = vmatprep.mubr.bf16.mxu0 0
      %2832 = vmatmul.mubr.bf16.gmra.mrb[0].mxu0 %v871
      %v2833 = vpop.f32.mrb[0].mxu0
      %v2834 = vadd.f32 0.0, %v2833
      %v2835 = vpop.f32.mrb[0].mxu0
      %v2836 = vpop.f32.mrb[0].mxu0
      %v2837 = vadd.f32 0.0, %v2836
      %v2838 = vpop.f32.mrb[0].mxu0
      %2839 = vmatprep.mubr.bf16.mxu0 0
      %2840 = vmatmul.mubr.bf16.gmra.mrb[0].mxu0 %v872
      %v2841 = vpop.f32.mrb[0].mxu0
      %v2842 = vadd.f32 0.0, %v2841
      %v2843 = vpop.f32.mrb[0].mxu0
      %v2844 = vpop.f32.mrb[0].mxu0
      %v2845 = vadd.f32 0.0, %v2844
      %v2846 = vpop.f32.mrb[0].mxu0
      %2847 = vmatprep.mubr.bf16.mxu0 0
      %2848 = vmatmul.mubr.bf16.gmra.mrb[0].mxu0 %v873
      %v2849 = vpop.f32.mrb[0].mxu0
      %v2850 = vadd.f32 0.0, %v2849
      %v2851 = vpop.f32.mrb[0].mxu0
      %v2852 = vpop.f32.mrb[0].mxu0
      %v2853 = vadd.f32 0.0, %v2852
      %v2854 = vpop.f32.mrb[0].mxu0
      %2855 = vmatprep.mubr.bf16.mxu0 0
      %2856 = vmatmul.mubr.bf16.gmra.mrb[0].mxu0 %v874
      %v2857 = vpop.f32.mrb[0].mxu0
      %v2858 = vadd.f32 0.0, %v2857
      %v2859 = vpop.f32.mrb[0].mxu0
      %v2860 = vpop.f32.mrb[0].mxu0
      %v2861 = vadd.f32 0.0, %v2860
      %v2862 = vpop.f32.mrb[0].mxu0
      %2863 = vmatprep.mubr.bf16.mxu0 0
      %2864 = vmatmul.mubr.bf16.gmra.mrb[0].mxu0 %v875
      %v2865 = vpop.f32.mrb[0].mxu0
      %v2866 = vadd.f32 0.0, %v2865
      %v2867 = vpop.f32.mrb[0].mxu0
      %v2868 = vpop.f32.mrb[0].mxu0
      %v2869 = vadd.f32 0.0, %v2868
      %v2870 = vpop.f32.mrb[0].mxu0
      %2871 = vmatprep.mubr.bf16.mxu0 0
      %2872 = vmatmul.mubr.bf16.gmra.mrb[0].mxu0 %v876
      %v2873 = vpop.f32.mrb[0].mxu0
      %v2874 = vadd.f32 0.0, %v2873
      %v2875 = vpop.f32.mrb[0].mxu0
      %v2876 = vpop.f32.mrb[0].mxu0
      %v2877 = vadd.f32 0.0, %v2876
      %v2878 = vpop.f32.mrb[0].mxu0
      %2879 = vmatprep.mubr.bf16.mxu0 0
      %2880 = vmatmul.mubr.bf16.gmra.mrb[0].mxu0 %v877
      %v2881 = vpop.f32.mrb[0].mxu0
      %v2882 = vadd.f32 0.0, %v2881
      %v2883 = vpop.f32.mrb[0].mxu0
      %v2884 = vpop.f32.mrb[0].mxu0
      %v2885 = vadd.f32 0.0, %v2884
      %v2886 = vpop.f32.mrb[0].mxu0
      %2887 = vmatprep.mubr.bf16.mxu0 0
      %2888 = vmatmul.mubr.bf16.gmra.mrb[0].mxu0 %v878
      %v2889 = vpop.f32.mrb[0].mxu0
      %v2890 = vadd.f32 0.0, %v2889
      %v2891 = vpop.f32.mrb[0].mxu0
      %v2892 = vpop.f32.mrb[0].mxu0
      %v2893 = vadd.f32 0.0, %v2892
      %v2894 = vpop.f32.mrb[0].mxu0
      %2895 = vmatprep.mubr.bf16.mxu0 0
      %2896 = vmatmul.mubr.bf16.gmra.mrb[0].mxu0 %v879
      %v2897 = vpop.f32.mrb[0].mxu0
      %v2898 = vadd.f32 0.0, %v2897
      %v2899 = vpop.f32.mrb[0].mxu0
      %v2900 = vpop.f32.mrb[0].mxu0
      %v2901 = vadd.f32 0.0, %v2900
      %v2902 = vpop.f32.mrb[0].mxu0
      %2903 = vdwg.mxu0
      %vm2906 = vcmask 1046528
      %v2907 = vrot.slane %v2898, 1
      %v2908 = vrot.slane %v2901, 1
      %v2909 = vsel %vm2906, %v2907, %v2908
      %v2942 = vrot.slane %v2778, 1
      %v2943 = vrot.slane %v2781, 1
      %v2944 = vsel %vm2906, %v2942, %v2943
      %v2945 = vrot.slane %v2786, 1
      %v2946 = vsel %vm2906, %v2943, %v2945
      %v2947 = vrot.slane %v2789, 1
      %v2948 = vsel %vm2906, %v2945, %v2947
      %v2949 = vrot.slane %v2794, 1
      %v2950 = vsel %vm2906, %v2947, %v2949
      %v2951 = vrot.slane %v2797, 1
      %v2952 = vsel %vm2906, %v2949, %v2951
      %v2953 = vrot.slane %v2802, 1
      %v2954 = vsel %vm2906, %v2951, %v2953
      %v2955 = vrot.slane %v2805, 1
      %v2956 = vsel %vm2906, %v2953, %v2955
      %v2957 = vrot.slane %v2810, 1
      %v2958 = vsel %vm2906, %v2955, %v2957
      %v2959 = vrot.slane %v2813, 1
      %v2960 = vsel %vm2906, %v2957, %v2959
      %v2961 = vrot.slane %v2818, 1
      %v2962 = vsel %vm2906, %v2959, %v2961
      %v2963 = vrot.slane %v2821, 1
      %v2964 = vsel %vm2906, %v2961, %v2963
      %v2965 = vrot.slane %v2826, 1
      %v2966 = vsel %vm2906, %v2963, %v2965
      %v2967 = vrot.slane %v2829, 1
      %v2968 = vsel %vm2906, %v2965, %v2967
      %v2969 = vrot.slane %v2834, 1
      %v2970 = vsel %vm2906, %v2967, %v2969
      %v2971 = vrot.slane %v2837, 1
      %v2972 = vsel %vm2906, %v2969, %v2971
      %v2973 = vrot.slane %v2842, 1
      %v2974 = vsel %vm2906, %v2971, %v2973
      %v2975 = vrot.slane %v2845, 1
      %v2976 = vsel %vm2906, %v2973, %v2975
      %v2977 = vrot.slane %v2850, 1
      %v2978 = vsel %vm2906, %v2975, %v2977
      %v2979 = vrot.slane %v2853, 1
      %v2980 = vsel %vm2906, %v2977, %v2979
      %v2981 = vrot.slane %v2858, 1
      %v2982 = vsel %vm2906, %v2979, %v2981
      %v2983 = vrot.slane %v2861, 1
      %v2984 = vsel %vm2906, %v2981, %v2983
      %v2985 = vrot.slane %v2866, 1
      %v2986 = vsel %vm2906, %v2983, %v2985
      %v2987 = vrot.slane %v2869, 1
      %v2988 = vsel %vm2906, %v2985, %v2987
      %v2989 = vrot.slane %v2874, 1
      %v2990 = vsel %vm2906, %v2987, %v2989
      %v2991 = vrot.slane %v2877, 1
      %v2992 = vsel %vm2906, %v2989, %v2991
      %v2993 = vrot.slane %v2882, 1
      %v2994 = vsel %vm2906, %v2991, %v2993
      %v2995 = vrot.slane %v2885, 1
      %v2996 = vsel %vm2906, %v2993, %v2995
      %v2997 = vrot.slane %v2890, 1
      %v2998 = vsel %vm2906, %v2995, %v2997
      %v2999 = vrot.slane %v2893, 1
      %v3000 = vsel %vm2906, %v2997, %v2999
      %v3001 = vsel %vm2906, %v2999, %v2907
      %v3033 = vsel %vm2906, %v2908, %v2942
      %vm3034 = vmand %vm1681, %vm1777
      %vm3035 = vmand %vm1682, %vm1778
      %vm3036 = vmand %vm1683, %vm1779
      %vm3037 = vmand %vm1684, %vm1780
      %vm3038 = vmand %vm1685, %vm1781
      %vm3039 = vmand %vm1686, %vm1782
      %vm3040 = vmand %vm1687, %vm1783
      %vm3041 = vmand %vm1688, %vm1784
      %vm3042 = vmand %vm1689, %vm1785
      %vm3043 = vmand %vm1690, %vm1786
      %vm3044 = vmand %vm1691, %vm1787
      %vm3045 = vmand %vm1692, %vm1788
      %vm3046 = vmand %vm1693, %vm1789
      %vm3047 = vmand %vm1694, %vm1790
      %vm3048 = vmand %vm1695, %vm1791
      %vm3049 = vmand %vm1696, %vm1792
      %vm3050 = vmand %vm1697, %vm1793
      %vm3051 = vmand %vm1698, %vm1794
      %vm3052 = vmand %vm1699, %vm1795
      %vm3053 = vmand %vm1700, %vm1796
      %vm3054 = vmand %vm1701, %vm1797
      %vm3055 = vmand %vm1702, %vm1798
      %vm3056 = vmand %vm1703, %vm1799
      %vm3057 = vmand %vm1704, %vm1800
      %vm3058 = vmand %vm1705, %vm1801
      %vm3059 = vmand %vm1706, %vm1802
      %vm3060 = vmand %vm1707, %vm1803
      %vm3061 = vmand %vm1708, %vm1804
      %vm3062 = vmand %vm1709, %vm1805
      %vm3063 = vmand %vm1710, %vm1806
      %vm3064 = vmand %vm1711, %vm1807
      %vm3065 = vmand %vm1712, %vm1808
      %v3066 = vsel %vm3034, 1, 0
      %v3067 = vsel %vm3035, 1, 0
      %v3068 = vsel %vm3036, 1, 0
      %v3069 = vsel %vm3037, 1, 0
      %v3070 = vsel %vm3038, 1, 0
      %v3071 = vsel %vm3039, 1, 0
      %v3072 = vsel %vm3040, 1, 0
      %v3073 = vsel %vm3041, 1, 0
      %v3074 = vsel %vm3042, 1, 0
      %v3075 = vsel %vm3043, 1, 0
      %v3076 = vsel %vm3044, 1, 0
      %v3077 = vsel %vm3045, 1, 0
      %v3078 = vsel %vm3046, 1, 0
      %v3079 = vsel %vm3047, 1, 0
      %v3080 = vsel %vm3048, 1, 0
      %v3081 = vsel %vm3049, 1, 0
      %v3082 = vsel %vm3050, 1, 0
      %v3083 = vsel %vm3051, 1, 0
      %v3084 = vsel %vm3052, 1, 0
      %v3085 = vsel %vm3053, 1, 0
      %v3086 = vsel %vm3054, 1, 0
      %v3087 = vsel %vm3055, 1, 0
      %v3088 = vsel %vm3056, 1, 0
      %v3089 = vsel %vm3057, 1, 0
      %v3090 = vsel %vm3058, 1, 0
      %v3091 = vsel %vm3059, 1, 0
      %v3092 = vsel %vm3060, 1, 0
      %v3093 = vsel %vm3061, 1, 0
      %v3094 = vsel %vm3062, 1, 0
      %v3095 = vsel %vm3063, 1, 0
      %v3096 = vsel %vm3064, 1, 0
      %v3097 = vsel %vm3065, 1, 0
      %vm3098 = vcmp.eq.s32.totalorder %v3066, 1
      %vm3099 = vcmp.eq.s32.totalorder %v3067, 1
      %vm3100 = vcmp.eq.s32.totalorder %v3068, 1
      %vm3101 = vcmp.eq.s32.totalorder %v3069, 1
      %vm3102 = vcmp.eq.s32.totalorder %v3070, 1
      %vm3103 = vcmp.eq.s32.totalorder %v3071, 1
      %vm3104 = vcmp.eq.s32.totalorder %v3072, 1
      %vm3105 = vcmp.eq.s32.totalorder %v3073, 1
      %vm3106 = vcmp.eq.s32.totalorder %v3074, 1
      %vm3107 = vcmp.eq.s32.totalorder %v3075, 1
      %vm3108 = vcmp.eq.s32.totalorder %v3076, 1
      %vm3109 = vcmp.eq.s32.totalorder %v3077, 1
      %vm3110 = vcmp.eq.s32.totalorder %v3078, 1
      %vm3111 = vcmp.eq.s32.totalorder %v3079, 1
      %vm3112 = vcmp.eq.s32.totalorder %v3080, 1
      %vm3113 = vcmp.eq.s32.totalorder %v3081, 1
      %vm3114 = vcmp.eq.s32.totalorder %v3082, 1
      %vm3115 = vcmp.eq.s32.totalorder %v3083, 1
      %vm3116 = vcmp.eq.s32.totalorder %v3084, 1
      %vm3117 = vcmp.eq.s32.totalorder %v3085, 1
      %vm3118 = vcmp.eq.s32.totalorder %v3086, 1
      %vm3119 = vcmp.eq.s32.totalorder %v3087, 1
      %vm3120 = vcmp.eq.s32.totalorder %v3088, 1
      %vm3121 = vcmp.eq.s32.totalorder %v3089, 1
      %vm3122 = vcmp.eq.s32.totalorder %v3090, 1
      %vm3123 = vcmp.eq.s32.totalorder %v3091, 1
      %vm3124 = vcmp.eq.s32.totalorder %v3092, 1
      %vm3125 = vcmp.eq.s32.totalorder %v3093, 1
      %vm3126 = vcmp.eq.s32.totalorder %v3094, 1
      %vm3127 = vcmp.eq.s32.totalorder %v3095, 1
      %vm3128 = vcmp.eq.s32.totalorder %v3096, 1
      %vm3129 = vcmp.eq.s32.totalorder %v3097, 1
      %v3130 = vsel %vm3098, %v2909, 0.0
      %v3131 = vsel %vm3099, %v3033, 0.0
      %v3132 = vsel %vm3100, %v2944, 0.0
      %v3133 = vsel %vm3101, %v2946, 0.0
      %v3134 = vsel %vm3102, %v2948, 0.0
      %v3135 = vsel %vm3103, %v2950, 0.0
      %v3136 = vsel %vm3104, %v2952, 0.0
      %v3137 = vsel %vm3105, %v2954, 0.0
      %v3138 = vsel %vm3106, %v2956, 0.0
      %v3139 = vsel %vm3107, %v2958, 0.0
      %v3140 = vsel %vm3108, %v2960, 0.0
      %v3141 = vsel %vm3109, %v2962, 0.0
      %v3142 = vsel %vm3110, %v2964, 0.0
      %v3143 = vsel %vm3111, %v2966, 0.0
      %v3144 = vsel %vm3112, %v2968, 0.0
      %v3145 = vsel %vm3113, %v2970, 0.0
      %v3146 = vsel %vm3114, %v2972, 0.0
      %v3147 = vsel %vm3115, %v2974, 0.0
      %v3148 = vsel %vm3116, %v2976, 0.0
      %v3149 = vsel %vm3117, %v2978, 0.0
      %v3150 = vsel %vm3118, %v2980, 0.0
      %v3151 = vsel %vm3119, %v2982, 0.0
      %v3152 = vsel %vm3120, %v2984, 0.0
      %v3153 = vsel %vm3121, %v2986, 0.0
      %v3154 = vsel %vm3122, %v2988, 0.0
      %v3155 = vsel %vm3123, %v2990, 0.0
      %v3156 = vsel %vm3124, %v2992, 0.0
      %v3157 = vsel %vm3125, %v2994, 0.0
      %v3158 = vsel %vm3126, %v2996, 0.0
      %v3159 = vsel %vm3127, %v2998, 0.0
      %v3160 = vsel %vm3128, %v3000, 0.0
      %v3161 = vsel %vm3129, %v3001, 0.0
      %v3162 = vadd.f32 %v2646, %v3130
      %v3163 = vadd.f32 %v2647, %v3131
      %v3164 = vadd.f32 %v2648, %v3132
      %v3165 = vadd.f32 %v2649, %v3133
      %v3166 = vadd.f32 %v2650, %v3134
      %v3167 = vadd.f32 %v2651, %v3135
      %v3168 = vadd.f32 %v2652, %v3136
      %v3169 = vadd.f32 %v2653, %v3137
      %v3170 = vadd.f32 %v2654, %v3138
      %v3171 = vadd.f32 %v2655, %v3139
      %v3172 = vadd.f32 %v2656, %v3140
      %v3173 = vadd.f32 %v2657, %v3141
      %v3174 = vadd.f32 %v2658, %v3142
      %v3175 = vadd.f32 %v2659, %v3143
      %v3176 = vadd.f32 %v2660, %v3144
      %v3177 = vadd.f32 %v2661, %v3145
      %v3178 = vadd.f32 %v2662, %v3146
      %v3179 = vadd.f32 %v2663, %v3147
      %v3180 = vadd.f32 %v2664, %v3148
      %v3181 = vadd.f32 %v2665, %v3149
      %v3182 = vadd.f32 %v2666, %v3150
      %v3183 = vadd.f32 %v2667, %v3151
      %v3184 = vadd.f32 %v2668, %v3152
      %v3185 = vadd.f32 %v2669, %v3153
      %v3186 = vadd.f32 %v2670, %v3154
      %v3187 = vadd.f32 %v2671, %v3155
      %v3188 = vadd.f32 %v2672, %v3156
      %v3189 = vadd.f32 %v2673, %v3157
      %v3190 = vadd.f32 %v2674, %v3158
      %v3191 = vadd.f32 %v2675, %v3159
      %v3192 = vadd.f32 %v2676, %v3160
      %v3193 = vadd.f32 %v2677, %v3161
      %s3194 = scalar_lea.vmem %s5, 192
      %v3195 = vld [vmem:[%s3194] sm:$0xf]
      %v3196 = vld [vmem:[%s3194 + $0x4] sm:$0xf]
      %v3197 = vld [vmem:[%s3194 + $0x8] sm:$0xf]
      %v3198 = vld [vmem:[%s3194 + $0xc] sm:$0xf]
      %v3199 = vld [vmem:[%s3194 + $0x10] sm:$0xf]
      %v3200 = vld [vmem:[%s3194 + $0x14] sm:$0xf]
      %v3201 = vld [vmem:[%s3194 + $0x18] sm:$0xf]
      %v3202 = vld [vmem:[%s3194 + $0x1c] sm:$0xf]
      %v3203 = vld [vmem:[%s3194 + $0x20] sm:$0xf]
      %v3204 = vld [vmem:[%s3194 + $0x24] sm:$0xf]
      %v3205 = vld [vmem:[%s3194 + $0x28] sm:$0xf]
      %v3206 = vld [vmem:[%s3194 + $0x2c] sm:$0xf]
      %v3207 = vld [vmem:[%s3194 + $0x30] sm:$0xf]
      %v3208 = vld [vmem:[%s3194 + $0x34] sm:$0xf]
      %v3209 = vld [vmem:[%s3194 + $0x38] sm:$0xf]
      %v3210 = vld [vmem:[%s3194 + $0x3c] sm:$0xf]
      %v3227 = vunpack.c.l.b16 %v3195
      %v3228 = vunpack.c.l.b16 %v3196
      %v3229 = vunpack.c.l.b16 %v3197
      %v3230 = vunpack.c.l.b16 %v3198
      %v3231 = vunpack.c.l.b16 %v3199
      %v3232 = vunpack.c.l.b16 %v3200
      %v3233 = vunpack.c.l.b16 %v3201
      %v3234 = vunpack.c.l.b16 %v3202
      %v3235 = vunpack.c.l.b16 %v3203
      %v3236 = vunpack.c.l.b16 %v3204
      %v3237 = vunpack.c.l.b16 %v3205
      %v3238 = vunpack.c.l.b16 %v3206
      %v3239 = vunpack.c.l.b16 %v3207
      %v3240 = vunpack.c.l.b16 %v3208
      %v3241 = vunpack.c.l.b16 %v3209
      %v3242 = vunpack.c.l.b16 %v3210
      %v3243 = vpack.c.b16 %v3228, %v3227
      %v3244 = vpack.c.b16 %v3230, %v3229
      %v3245 = vpack.c.b16 %v3232, %v3231
      %v3246 = vpack.c.b16 %v3234, %v3233
      %v3247 = vpack.c.b16 %v3236, %v3235
      %v3248 = vpack.c.b16 %v3238, %v3237
      %v3249 = vpack.c.b16 %v3240, %v3239
      %v3250 = vpack.c.b16 %v3242, %v3241
      %3259 = vmatprep.subr.bf16.mxu0 0
      %3260 = vmatpush1.bf16.msra.mxu0 %v3243
      %3261 = vmatprep.subr.bf16.mxu0 0
      %3262 = vmatpush1.bf16.msra.mxu0 %v3244
      %3263 = vmatprep.subr.bf16.mxu0 0
      %3264 = vmatpush1.bf16.msra.mxu0 %v3245
      %3265 = vmatprep.subr.bf16.mxu0 0
      %3266 = vmatpush1.bf16.msra.mxu0 %v3246
      %3267 = vmatprep.subr.bf16.mxu0 0
      %3268 = vmatpush1.bf16.msra.mxu0 %v3247
      %3269 = vmatprep.subr.bf16.mxu0 0
      %3270 = vmatpush1.bf16.msra.mxu0 %v3248
      %3271 = vmatprep.subr.bf16.mxu0 0
      %3272 = vmatpush1.bf16.msra.mxu0 %v3249
      %3273 = vmatprep.subr.bf16.mxu0 0
      %3274 = vmatpush1.bf16.msra.mxu0 %v3250
      %3275 = vmatprep.subr.bf16.mxu0 0
      %3276 = vmatpush1.bf16.msra.mxu0 0
      %3277 = vmatprep.subr.bf16.mxu0 0
      %3278 = vmatpush1.bf16.msra.mxu0 0
      %3279 = vmatprep.subr.bf16.mxu0 0
      %3280 = vmatpush1.bf16.msra.mxu0 0
      %3281 = vmatprep.subr.bf16.mxu0 0
      %3282 = vmatpush1.bf16.msra.mxu0 0
      %3283 = vmatprep.subr.bf16.mxu0 0
      %3284 = vmatpush1.bf16.msra.mxu0 0
      %3285 = vmatprep.subr.bf16.mxu0 0
      %3286 = vmatpush1.bf16.msra.mxu0 0
      %3287 = vmatprep.subr.bf16.mxu0 0
      %3288 = vmatpush1.bf16.msra.mxu0 0
      %3289 = vmatprep.subr.bf16.mxu0 0
      %3290 = vmatpush1.bf16.msra.mxu0 0
      %3291 = vmatprep.mubr.bf16.mxu0 0
      %3292 = vmatmul.mubr.bf16.gmra.mrb[0].mxu0 %v864
      %v3293 = vpop.f32.mrb[0].mxu0
      %v3294 = vadd.f32 0.0, %v3293
      %v3295 = vpop.f32.mrb[0].mxu0
      %v3296 = vpop.f32.mrb[0].mxu0
      %v3297 = vadd.f32 0.0, %v3296
      %v3298 = vpop.f32.mrb[0].mxu0
      %3299 = vmatprep.mubr.bf16.mxu0 0
      %3300 = vmatmul.mubr.bf16.gmra.mrb[0].mxu0 %v865
      %v3301 = vpop.f32.mrb[0].mxu0
      %v3302 = vadd.f32 0.0, %v3301
      %v3303 = vpop.f32.mrb[0].mxu0
      %v3304 = vpop.f32.mrb[0].mxu0
      %v3305 = vadd.f32 0.0, %v3304
      %v3306 = vpop.f32.mrb[0].mxu0
      %3307 = vmatprep.mubr.bf16.mxu0 0
      %3308 = vmatmul.mubr.bf16.gmra.mrb[0].mxu0 %v866
      %v3309 = vpop.f32.mrb[0].mxu0
      %v3310 = vadd.f32 0.0, %v3309
      %v3311 = vpop.f32.mrb[0].mxu0
      %v3312 = vpop.f32.mrb[0].mxu0
      %v3313 = vadd.f32 0.0, %v3312
      %v3314 = vpop.f32.mrb[0].mxu0
      %3315 = vmatprep.mubr.bf16.mxu0 0
      %3316 = vmatmul.mubr.bf16.gmra.mrb[0].mxu0 %v867
      %v3317 = vpop.f32.mrb[0].mxu0
      %v3318 = vadd.f32 0.0, %v3317
      %v3319 = vpop.f32.mrb[0].mxu0
      %v3320 = vpop.f32.mrb[0].mxu0
      %v3321 = vadd.f32 0.0, %v3320
      %v3322 = vpop.f32.mrb[0].mxu0
      %3323 = vmatprep.mubr.bf16.mxu0 0
      %3324 = vmatmul.mubr.bf16.gmra.mrb[0].mxu0 %v868
      %v3325 = vpop.f32.mrb[0].mxu0
      %v3326 = vadd.f32 0.0, %v3325
      %v3327 = vpop.f32.mrb[0].mxu0
      %v3328 = vpop.f32.mrb[0].mxu0
      %v3329 = vadd.f32 0.0, %v3328
      %v3330 = vpop.f32.mrb[0].mxu0
      %3331 = vmatprep.mubr.bf16.mxu0 0
      %3332 = vmatmul.mubr.bf16.gmra.mrb[0].mxu0 %v869
      %v3333 = vpop.f32.mrb[0].mxu0
      %v3334 = vadd.f32 0.0, %v3333
      %v3335 = vpop.f32.mrb[0].mxu0
      %v3336 = vpop.f32.mrb[0].mxu0
      %v3337 = vadd.f32 0.0, %v3336
      %v3338 = vpop.f32.mrb[0].mxu0
      %3339 = vmatprep.mubr.bf16.mxu0 0
      %3340 = vmatmul.mubr.bf16.gmra.mrb[0].mxu0 %v870
      %v3341 = vpop.f32.mrb[0].mxu0
      %v3342 = vadd.f32 0.0, %v3341
      %v3343 = vpop.f32.mrb[0].mxu0
      %v3344 = vpop.f32.mrb[0].mxu0
      %v3345 = vadd.f32 0.0, %v3344
      %v3346 = vpop.f32.mrb[0].mxu0
      %3347 = vmatprep.mubr.bf16.mxu0 0
      %3348 = vmatmul.mubr.bf16.gmra.mrb[0].mxu0 %v871
      %v3349 = vpop.f32.mrb[0].mxu0
      %v3350 = vadd.f32 0.0, %v3349
      %v3351 = vpop.f32.mrb[0].mxu0
      %v3352 = vpop.f32.mrb[0].mxu0
      %v3353 = vadd.f32 0.0, %v3352
      %v3354 = vpop.f32.mrb[0].mxu0
      %3355 = vmatprep.mubr.bf16.mxu0 0
      %3356 = vmatmul.mubr.bf16.gmra.mrb[0].mxu0 %v872
      %v3357 = vpop.f32.mrb[0].mxu0
      %v3358 = vadd.f32 0.0, %v3357
      %v3359 = vpop.f32.mrb[0].mxu0
      %v3360 = vpop.f32.mrb[0].mxu0
      %v3361 = vadd.f32 0.0, %v3360
      %v3362 = vpop.f32.mrb[0].mxu0
      %3363 = vmatprep.mubr.bf16.mxu0 0
      %3364 = vmatmul.mubr.bf16.gmra.mrb[0].mxu0 %v873
      %v3365 = vpop.f32.mrb[0].mxu0
      %v3366 = vadd.f32 0.0, %v3365
      %v3367 = vpop.f32.mrb[0].mxu0
      %v3368 = vpop.f32.mrb[0].mxu0
      %v3369 = vadd.f32 0.0, %v3368
      %v3370 = vpop.f32.mrb[0].mxu0
      %3371 = vmatprep.mubr.bf16.mxu0 0
      %3372 = vmatmul.mubr.bf16.gmra.mrb[0].mxu0 %v874
      %v3373 = vpop.f32.mrb[0].mxu0
      %v3374 = vadd.f32 0.0, %v3373
      %v3375 = vpop.f32.mrb[0].mxu0
      %v3376 = vpop.f32.mrb[0].mxu0
      %v3377 = vadd.f32 0.0, %v3376
      %v3378 = vpop.f32.mrb[0].mxu0
      %3379 = vmatprep.mubr.bf16.mxu0 0
      %3380 = vmatmul.mubr.bf16.gmra.mrb[0].mxu0 %v875
      %v3381 = vpop.f32.mrb[0].mxu0
      %v3382 = vadd.f32 0.0, %v3381
      %v3383 = vpop.f32.mrb[0].mxu0
      %v3384 = vpop.f32.mrb[0].mxu0
      %v3385 = vadd.f32 0.0, %v3384
      %v3386 = vpop.f32.mrb[0].mxu0
      %3387 = vmatprep.mubr.bf16.mxu0 0
      %3388 = vmatmul.mubr.bf16.gmra.mrb[0].mxu0 %v876
      %v3389 = vpop.f32.mrb[0].mxu0
      %v3390 = vadd.f32 0.0, %v3389
      %v3391 = vpop.f32.mrb[0].mxu0
      %v3392 = vpop.f32.mrb[0].mxu0
      %v3393 = vadd.f32 0.0, %v3392
      %v3394 = vpop.f32.mrb[0].mxu0
      %3395 = vmatprep.mubr.bf16.mxu0 0
      %3396 = vmatmul.mubr.bf16.gmra.mrb[0].mxu0 %v877
      %v3397 = vpop.f32.mrb[0].mxu0
      %v3398 = vadd.f32 0.0, %v3397
      %v3399 = vpop.f32.mrb[0].mxu0
      %v3400 = vpop.f32.mrb[0].mxu0
      %v3401 = vadd.f32 0.0, %v3400
      %v3402 = vpop.f32.mrb[0].mxu0
      %3403 = vmatprep.mubr.bf16.mxu0 0
      %3404 = vmatmul.mubr.bf16.gmra.mrb[0].mxu0 %v878
      %v3405 = vpop.f32.mrb[0].mxu0
      %v3406 = vadd.f32 0.0, %v3405
      %v3407 = vpop.f32.mrb[0].mxu0
      %v3408 = vpop.f32.mrb[0].mxu0
      %v3409 = vadd.f32 0.0, %v3408
      %v3410 = vpop.f32.mrb[0].mxu0
      %3411 = vmatprep.mubr.bf16.mxu0 0
      %3412 = vmatmul.mubr.bf16.gmra.mrb[0].mxu0 %v879
      %v3413 = vpop.f32.mrb[0].mxu0
      %v3414 = vadd.f32 0.0, %v3413
      %v3415 = vpop.f32.mrb[0].mxu0
      %v3416 = vpop.f32.mrb[0].mxu0
      %v3417 = vadd.f32 0.0, %v3416
      %v3418 = vpop.f32.mrb[0].mxu0
      %3419 = vdwg.mxu0
      %v3421 = vrot.slane %v3417, 7
      %v3454 = vrot.slane %v3294, 7
      %v3455 = vrot.slane %v3297, 7
      %v3456 = vsel %vm2037, %v3454, %v3455
      %v3457 = vrot.slane %v3302, 7
      %v3458 = vsel %vm2037, %v3455, %v3457
      %v3459 = vrot.slane %v3305, 7
      %v3460 = vsel %vm2037, %v3457, %v3459
      %v3461 = vrot.slane %v3310, 7
      %v3462 = vsel %vm2037, %v3459, %v3461
      %v3463 = vrot.slane %v3313, 7
      %v3464 = vsel %vm2037, %v3461, %v3463
      %v3465 = vrot.slane %v3318, 7
      %v3466 = vsel %vm2037, %v3463, %v3465
      %v3467 = vrot.slane %v3321, 7
      %v3468 = vsel %vm2037, %v3465, %v3467
      %v3469 = vrot.slane %v3326, 7
      %v3470 = vsel %vm2037, %v3467, %v3469
      %v3471 = vrot.slane %v3329, 7
      %v3472 = vsel %vm2037, %v3469, %v3471
      %v3473 = vrot.slane %v3334, 7
      %v3474 = vsel %vm2037, %v3471, %v3473
      %v3475 = vrot.slane %v3337, 7
      %v3476 = vsel %vm2037, %v3473, %v3475
      %v3477 = vrot.slane %v3342, 7
      %v3478 = vsel %vm2037, %v3475, %v3477
      %v3479 = vrot.slane %v3345, 7
      %v3480 = vsel %vm2037, %v3477, %v3479
      %v3481 = vrot.slane %v3350, 7
      %v3482 = vsel %vm2037, %v3479, %v3481
      %v3483 = vrot.slane %v3353, 7
      %v3484 = vsel %vm2037, %v3481, %v3483
      %v3485 = vrot.slane %v3358, 7
      %v3486 = vsel %vm2037, %v3483, %v3485
      %v3487 = vrot.slane %v3361, 7
      %v3488 = vsel %vm2037, %v3485, %v3487
      %v3489 = vrot.slane %v3366, 7
      %v3490 = vsel %vm2037, %v3487, %v3489
      %v3491 = vrot.slane %v3369, 7
      %v3492 = vsel %vm2037, %v3489, %v3491
      %v3493 = vrot.slane %v3374, 7
      %v3494 = vsel %vm2037, %v3491, %v3493
      %v3495 = vrot.slane %v3377, 7
      %v3496 = vsel %vm2037, %v3493, %v3495
      %v3497 = vrot.slane %v3382, 7
      %v3498 = vsel %vm2037, %v3495, %v3497
      %v3499 = vrot.slane %v3385, 7
      %v3500 = vsel %vm2037, %v3497, %v3499
      %v3501 = vrot.slane %v3390, 7
      %v3502 = vsel %vm2037, %v3499, %v3501
      %v3503 = vrot.slane %v3393, 7
      %v3504 = vsel %vm2037, %v3501, %v3503
      %v3505 = vrot.slane %v3398, 7
      %v3506 = vsel %vm2037, %v3503, %v3505
      %v3507 = vrot.slane %v3401, 7
      %v3508 = vsel %vm2037, %v3505, %v3507
      %v3509 = vrot.slane %v3406, 7
      %v3510 = vsel %vm2037, %v3507, %v3509
      %v3511 = vrot.slane %v3409, 7
      %v3512 = vsel %vm2037, %v3509, %v3511
      %v3513 = vrot.slane %v3414, 7
      %v3514 = vsel %vm2037, %v3511, %v3513
      %v3515 = vsel %vm2037, %v3513, %v3421
      %v3548 = vsel %vm2037, %v3421, %v3454
      %v3549 = vsel %vm1745, 1, 0
      %v3550 = vsel %vm1746, 1, 0
      %v3551 = vsel %vm1747, 1, 0
      %v3552 = vsel %vm1748, 1, 0
      %v3553 = vsel %vm1749, 1, 0
      %v3554 = vsel %vm1750, 1, 0
      %v3555 = vsel %vm1751, 1, 0
      %v3556 = vsel %vm1752, 1, 0
      %v3557 = vsel %vm1753, 1, 0
      %v3558 = vsel %vm1754, 1, 0
      %v3559 = vsel %vm1755, 1, 0
      %v3560 = vsel %vm1756, 1, 0
      %v3561 = vsel %vm1757, 1, 0
      %v3562 = vsel %vm1758, 1, 0
      %v3563 = vsel %vm1759, 1, 0
      %v3564 = vsel %vm1760, 1, 0
      %v3565 = vsel %vm1761, 1, 0
      %v3566 = vsel %vm1762, 1, 0
      %v3567 = vsel %vm1763, 1, 0
      %v3568 = vsel %vm1764, 1, 0
      %v3569 = vsel %vm1765, 1, 0
      %v3570 = vsel %vm1766, 1, 0
      %v3571 = vsel %vm1767, 1, 0
      %v3572 = vsel %vm1768, 1, 0
      %v3573 = vsel %vm1769, 1, 0
      %v3574 = vsel %vm1770, 1, 0
      %v3575 = vsel %vm1771, 1, 0
      %v3576 = vsel %vm1772, 1, 0
      %v3577 = vsel %vm1773, 1, 0
      %v3578 = vsel %vm1774, 1, 0
      %v3579 = vsel %vm1775, 1, 0
      %v3580 = vsel %vm1776, 1, 0
      %vm3581 = vcmp.eq.s32.totalorder %v3549, 1
      %vm3582 = vcmp.eq.s32.totalorder %v3550, 1
      %vm3583 = vcmp.eq.s32.totalorder %v3551, 1
      %vm3584 = vcmp.eq.s32.totalorder %v3552, 1
      %vm3585 = vcmp.eq.s32.totalorder %v3553, 1
      %vm3586 = vcmp.eq.s32.totalorder %v3554, 1
      %vm3587 = vcmp.eq.s32.totalorder %v3555, 1
      %vm3588 = vcmp.eq.s32.totalorder %v3556, 1
      %vm3589 = vcmp.eq.s32.totalorder %v3557, 1
      %vm3590 = vcmp.eq.s32.totalorder %v3558, 1
      %vm3591 = vcmp.eq.s32.totalorder %v3559, 1
      %vm3592 = vcmp.eq.s32.totalorder %v3560, 1
      %vm3593 = vcmp.eq.s32.totalorder %v3561, 1
      %vm3594 = vcmp.eq.s32.totalorder %v3562, 1
      %vm3595 = vcmp.eq.s32.totalorder %v3563, 1
      %vm3596 = vcmp.eq.s32.totalorder %v3564, 1
      %vm3597 = vcmp.eq.s32.totalorder %v3565, 1
      %vm3598 = vcmp.eq.s32.totalorder %v3566, 1
      %vm3599 = vcmp.eq.s32.totalorder %v3567, 1
      %vm3600 = vcmp.eq.s32.totalorder %v3568, 1
      %vm3601 = vcmp.eq.s32.totalorder %v3569, 1
      %vm3602 = vcmp.eq.s32.totalorder %v3570, 1
      %vm3603 = vcmp.eq.s32.totalorder %v3571, 1
      %vm3604 = vcmp.eq.s32.totalorder %v3572, 1
      %vm3605 = vcmp.eq.s32.totalorder %v3573, 1
      %vm3606 = vcmp.eq.s32.totalorder %v3574, 1
      %vm3607 = vcmp.eq.s32.totalorder %v3575, 1
      %vm3608 = vcmp.eq.s32.totalorder %v3576, 1
      %vm3609 = vcmp.eq.s32.totalorder %v3577, 1
      %vm3610 = vcmp.eq.s32.totalorder %v3578, 1
      %vm3611 = vcmp.eq.s32.totalorder %v3579, 1
      %vm3612 = vcmp.eq.s32.totalorder %v3580, 1
      %v3613 = vsel %vm3581, %v3548, 0.0
      %v3614 = vsel %vm3582, %v3456, 0.0
      %v3615 = vsel %vm3583, %v3458, 0.0
      %v3616 = vsel %vm3584, %v3460, 0.0
      %v3617 = vsel %vm3585, %v3462, 0.0
      %v3618 = vsel %vm3586, %v3464, 0.0
      %v3619 = vsel %vm3587, %v3466, 0.0
      %v3620 = vsel %vm3588, %v3468, 0.0
      %v3621 = vsel %vm3589, %v3470, 0.0
      %v3622 = vsel %vm3590, %v3472, 0.0
      %v3623 = vsel %vm3591, %v3474, 0.0
      %v3624 = vsel %vm3592, %v3476, 0.0
      %v3625 = vsel %vm3593, %v3478, 0.0
      %v3626 = vsel %vm3594, %v3480, 0.0
      %v3627 = vsel %vm3595, %v3482, 0.0
      %v3628 = vsel %vm3596, %v3484, 0.0
      %v3629 = vsel %vm3597, %v3486, 0.0
      %v3630 = vsel %vm3598, %v3488, 0.0
      %v3631 = vsel %vm3599, %v3490, 0.0
      %v3632 = vsel %vm3600, %v3492, 0.0
      %v3633 = vsel %vm3601, %v3494, 0.0
      %v3634 = vsel %vm3602, %v3496, 0.0
      %v3635 = vsel %vm3603, %v3498, 0.0
      %v3636 = vsel %vm3604, %v3500, 0.0
      %v3637 = vsel %vm3605, %v3502, 0.0
      %v3638 = vsel %vm3606, %v3504, 0.0
      %v3639 = vsel %vm3607, %v3506, 0.0
      %v3640 = vsel %vm3608, %v3508, 0.0
      %v3641 = vsel %vm3609, %v3510, 0.0
      %v3642 = vsel %vm3610, %v3512, 0.0
      %v3643 = vsel %vm3611, %v3514, 0.0
      %v3644 = vsel %vm3612, %v3515, 0.0
      %v3645 = vadd.f32 %v3162, %v3613
      %v3646 = vadd.f32 %v3163, %v3614
      %v3647 = vadd.f32 %v3164, %v3615
      %v3648 = vadd.f32 %v3165, %v3616
      %v3649 = vadd.f32 %v3166, %v3617
      %v3650 = vadd.f32 %v3167, %v3618
      %v3651 = vadd.f32 %v3168, %v3619
      %v3652 = vadd.f32 %v3169, %v3620
      %v3653 = vadd.f32 %v3170, %v3621
      %v3654 = vadd.f32 %v3171, %v3622
      %v3655 = vadd.f32 %v3172, %v3623
      %v3656 = vadd.f32 %v3173, %v3624
      %v3657 = vadd.f32 %v3174, %v3625
      %v3658 = vadd.f32 %v3175, %v3626
      %v3659 = vadd.f32 %v3176, %v3627
      %v3660 = vadd.f32 %v3177, %v3628
      %v3661 = vadd.f32 %v3178, %v3629
      %v3662 = vadd.f32 %v3179, %v3630
      %v3663 = vadd.f32 %v3180, %v3631
      %v3664 = vadd.f32 %v3181, %v3632
      %v3665 = vadd.f32 %v3182, %v3633
      %v3666 = vadd.f32 %v3183, %v3634
      %v3667 = vadd.f32 %v3184, %v3635
      %v3668 = vadd.f32 %v3185, %v3636
      %v3669 = vadd.f32 %v3186, %v3637
      %v3670 = vadd.f32 %v3187, %v3638
      %v3671 = vadd.f32 %v3188, %v3639
      %v3672 = vadd.f32 %v3189, %v3640
      %v3673 = vadd.f32 %v3190, %v3641
      %v3674 = vadd.f32 %v3191, %v3642
      %v3675 = vadd.f32 %v3192, %v3643
      %v3676 = vadd.f32 %v3193, %v3644
      %s3677 = scalar_lea.vmem %s5, 256
      %v3678 = vld [vmem:[%s3677] sm:$0xf]
      %v3679 = vld [vmem:[%s3677 + $0x4] sm:$0xf]
      %v3680 = vld [vmem:[%s3677 + $0x8] sm:$0xf]
      %v3681 = vld [vmem:[%s3677 + $0xc] sm:$0xf]
      %v3682 = vld [vmem:[%s3677 + $0x10] sm:$0xf]
      %v3683 = vld [vmem:[%s3677 + $0x14] sm:$0xf]
      %v3684 = vld [vmem:[%s3677 + $0x18] sm:$0xf]
      %v3685 = vld [vmem:[%s3677 + $0x1c] sm:$0xf]
      %v3686 = vld [vmem:[%s3677 + $0x20] sm:$0xf]
      %v3687 = vld [vmem:[%s3677 + $0x24] sm:$0xf]
      %v3688 = vld [vmem:[%s3677 + $0x28] sm:$0xf]
      %v3689 = vld [vmem:[%s3677 + $0x2c] sm:$0xf]
      %v3690 = vld [vmem:[%s3677 + $0x30] sm:$0xf]
      %v3691 = vld [vmem:[%s3677 + $0x34] sm:$0xf]
      %v3692 = vld [vmem:[%s3677 + $0x38] sm:$0xf]
      %v3693 = vld [vmem:[%s3677 + $0x3c] sm:$0xf]
      %v3710 = vunpack.c.l.b16 %v3678
      %v3711 = vunpack.c.l.b16 %v3679
      %v3712 = vunpack.c.l.b16 %v3680
      %v3713 = vunpack.c.l.b16 %v3681
      %v3714 = vunpack.c.l.b16 %v3682
      %v3715 = vunpack.c.l.b16 %v3683
      %v3716 = vunpack.c.l.b16 %v3684
      %v3717 = vunpack.c.l.b16 %v3685
      %v3718 = vunpack.c.l.b16 %v3686
      %v3719 = vunpack.c.l.b16 %v3687
      %v3720 = vunpack.c.l.b16 %v3688
      %v3721 = vunpack.c.l.b16 %v3689
      %v3722 = vunpack.c.l.b16 %v3690
      %v3723 = vunpack.c.l.b16 %v3691
      %v3724 = vunpack.c.l.b16 %v3692
      %v3725 = vunpack.c.l.b16 %v3693
      %v3726 = vpack.c.b16 %v3711, %v3710
      %v3727 = vpack.c.b16 %v3713, %v3712
      %v3728 = vpack.c.b16 %v3715, %v3714
      %v3729 = vpack.c.b16 %v3717, %v3716
      %v3730 = vpack.c.b16 %v3719, %v3718
      %v3731 = vpack.c.b16 %v3721, %v3720
      %v3732 = vpack.c.b16 %v3723, %v3722
      %v3733 = vpack.c.b16 %v3725, %v3724
      %3742 = vmatprep.subr.bf16.mxu0 0
      %3743 = vmatpush1.bf16.msra.mxu0 %v3726
      %3744 = vmatprep.subr.bf16.mxu0 0
      %3745 = vmatpush1.bf16.msra.mxu0 %v3727
      %3746 = vmatprep.subr.bf16.mxu0 0
      %3747 = vmatpush1.bf16.msra.mxu0 %v3728
      %3748 = vmatprep.subr.bf16.mxu0 0
      %3749 = vmatpush1.bf16.msra.mxu0 %v3729
      %3750 = vmatprep.subr.bf16.mxu0 0
      %3751 = vmatpush1.bf16.msra.mxu0 %v3730
      %3752 = vmatprep.subr.bf16.mxu0 0
      %3753 = vmatpush1.bf16.msra.mxu0 %v3731
      %3754 = vmatprep.subr.bf16.mxu0 0
      %3755 = vmatpush1.bf16.msra.mxu0 %v3732
      %3756 = vmatprep.subr.bf16.mxu0 0
      %3757 = vmatpush1.bf16.msra.mxu0 %v3733
      %3758 = vmatprep.subr.bf16.mxu0 0
      %3759 = vmatpush1.bf16.msra.mxu0 0
      %3760 = vmatprep.subr.bf16.mxu0 0
      %3761 = vmatpush1.bf16.msra.mxu0 0
      %3762 = vmatprep.subr.bf16.mxu0 0
      %3763 = vmatpush1.bf16.msra.mxu0 0
      %3764 = vmatprep.subr.bf16.mxu0 0
      %3765 = vmatpush1.bf16.msra.mxu0 0
      %3766 = vmatprep.subr.bf16.mxu0 0
      %3767 = vmatpush1.bf16.msra.mxu0 0
      %3768 = vmatprep.subr.bf16.mxu0 0
      %3769 = vmatpush1.bf16.msra.mxu0 0
      %3770 = vmatprep.subr.bf16.mxu0 0
      %3771 = vmatpush1.bf16.msra.mxu0 0
      %3772 = vmatprep.subr.bf16.mxu0 0
      %3773 = vmatpush1.bf16.msra.mxu0 0
      %3774 = vmatprep.mubr.bf16.mxu0 0
      %3775 = vmatmul.mubr.bf16.gmra.mrb[0].mxu0 %v864
      %v3776 = vpop.f32.mrb[0].mxu0
      %v3777 = vadd.f32 0.0, %v3776
      %v3778 = vpop.f32.mrb[0].mxu0
      %v3779 = vpop.f32.mrb[0].mxu0
      %v3780 = vadd.f32 0.0, %v3779
      %v3781 = vpop.f32.mrb[0].mxu0
      %3782 = vmatprep.mubr.bf16.mxu0 0
      %3783 = vmatmul.mubr.bf16.gmra.mrb[0].mxu0 %v865
      %v3784 = vpop.f32.mrb[0].mxu0
      %v3785 = vadd.f32 0.0, %v3784
      %v3786 = vpop.f32.mrb[0].mxu0
      %v3787 = vpop.f32.mrb[0].mxu0
      %v3788 = vadd.f32 0.0, %v3787
      %v3789 = vpop.f32.mrb[0].mxu0
      %3790 = vmatprep.mubr.bf16.mxu0 0
      %3791 = vmatmul.mubr.bf16.gmra.mrb[0].mxu0 %v866
      %v3792 = vpop.f32.mrb[0].mxu0
      %v3793 = vadd.f32 0.0, %v3792
      %v3794 = vpop.f32.mrb[0].mxu0
      %v3795 = vpop.f32.mrb[0].mxu0
      %v3796 = vadd.f32 0.0, %v3795
      %v3797 = vpop.f32.mrb[0].mxu0
      %3798 = vmatprep.mubr.bf16.mxu0 0
      %3799 = vmatmul.mubr.bf16.gmra.mrb[0].mxu0 %v867
      %v3800 = vpop.f32.mrb[0].mxu0
      %v3801 = vadd.f32 0.0, %v3800
      %v3802 = vpop.f32.mrb[0].mxu0
      %v3803 = vpop.f32.mrb[0].mxu0
      %v3804 = vadd.f32 0.0, %v3803
      %v3805 = vpop.f32.mrb[0].mxu0
      %3806 = vmatprep.mubr.bf16.mxu0 0
      %3807 = vmatmul.mubr.bf16.gmra.mrb[0].mxu0 %v868
      %v3808 = vpop.f32.mrb[0].mxu0
      %v3809 = vadd.f32 0.0, %v3808
      %v3810 = vpop.f32.mrb[0].mxu0
      %v3811 = vpop.f32.mrb[0].mxu0
      %v3812 = vadd.f32 0.0, %v3811
      %v3813 = vpop.f32.mrb[0].mxu0
      %3814 = vmatprep.mubr.bf16.mxu0 0
      %3815 = vmatmul.mubr.bf16.gmra.mrb[0].mxu0 %v869
      %v3816 = vpop.f32.mrb[0].mxu0
      %v3817 = vadd.f32 0.0, %v3816
      %v3818 = vpop.f32.mrb[0].mxu0
      %v3819 = vpop.f32.mrb[0].mxu0
      %v3820 = vadd.f32 0.0, %v3819
      %v3821 = vpop.f32.mrb[0].mxu0
      %3822 = vmatprep.mubr.bf16.mxu0 0
      %3823 = vmatmul.mubr.bf16.gmra.mrb[0].mxu0 %v870
      %v3824 = vpop.f32.mrb[0].mxu0
      %v3825 = vadd.f32 0.0, %v3824
      %v3826 = vpop.f32.mrb[0].mxu0
      %v3827 = vpop.f32.mrb[0].mxu0
      %v3828 = vadd.f32 0.0, %v3827
      %v3829 = vpop.f32.mrb[0].mxu0
      %3830 = vmatprep.mubr.bf16.mxu0 0
      %3831 = vmatmul.mubr.bf16.gmra.mrb[0].mxu0 %v871
      %v3832 = vpop.f32.mrb[0].mxu0
      %v3833 = vadd.f32 0.0, %v3832
      %v3834 = vpop.f32.mrb[0].mxu0
      %v3835 = vpop.f32.mrb[0].mxu0
      %v3836 = vadd.f32 0.0, %v3835
      %v3837 = vpop.f32.mrb[0].mxu0
      %3838 = vmatprep.mubr.bf16.mxu0 0
      %3839 = vmatmul.mubr.bf16.gmra.mrb[0].mxu0 %v872
      %v3840 = vpop.f32.mrb[0].mxu0
      %v3841 = vadd.f32 0.0, %v3840
      %v3842 = vpop.f32.mrb[0].mxu0
      %v3843 = vpop.f32.mrb[0].mxu0
      %v3844 = vadd.f32 0.0, %v3843
      %v3845 = vpop.f32.mrb[0].mxu0
      %3846 = vmatprep.mubr.bf16.mxu0 0
      %3847 = vmatmul.mubr.bf16.gmra.mrb[0].mxu0 %v873
      %v3848 = vpop.f32.mrb[0].mxu0
      %v3849 = vadd.f32 0.0, %v3848
      %v3850 = vpop.f32.mrb[0].mxu0
      %v3851 = vpop.f32.mrb[0].mxu0
      %v3852 = vadd.f32 0.0, %v3851
      %v3853 = vpop.f32.mrb[0].mxu0
      %3854 = vmatprep.mubr.bf16.mxu0 0
      %3855 = vmatmul.mubr.bf16.gmra.mrb[0].mxu0 %v874
      %v3856 = vpop.f32.mrb[0].mxu0
      %v3857 = vadd.f32 0.0, %v3856
      %v3858 = vpop.f32.mrb[0].mxu0
      %v3859 = vpop.f32.mrb[0].mxu0
      %v3860 = vadd.f32 0.0, %v3859
      %v3861 = vpop.f32.mrb[0].mxu0
      %3862 = vmatprep.mubr.bf16.mxu0 0
      %3863 = vmatmul.mubr.bf16.gmra.mrb[0].mxu0 %v875
      %v3864 = vpop.f32.mrb[0].mxu0
      %v3865 = vadd.f32 0.0, %v3864
      %v3866 = vpop.f32.mrb[0].mxu0
      %v3867 = vpop.f32.mrb[0].mxu0
      %v3868 = vadd.f32 0.0, %v3867
      %v3869 = vpop.f32.mrb[0].mxu0
      %3870 = vmatprep.mubr.bf16.mxu0 0
      %3871 = vmatmul.mubr.bf16.gmra.mrb[0].mxu0 %v876
      %v3872 = vpop.f32.mrb[0].mxu0
      %v3873 = vadd.f32 0.0, %v3872
      %v3874 = vpop.f32.mrb[0].mxu0
      %v3875 = vpop.f32.mrb[0].mxu0
      %v3876 = vadd.f32 0.0, %v3875
      %v3877 = vpop.f32.mrb[0].mxu0
      %3878 = vmatprep.mubr.bf16.mxu0 0
      %3879 = vmatmul.mubr.bf16.gmra.mrb[0].mxu0 %v877
      %v3880 = vpop.f32.mrb[0].mxu0
      %v3881 = vadd.f32 0.0, %v3880
      %v3882 = vpop.f32.mrb[0].mxu0
      %v3883 = vpop.f32.mrb[0].mxu0
      %v3884 = vadd.f32 0.0, %v3883
      %v3885 = vpop.f32.mrb[0].mxu0
      %3886 = vmatprep.mubr.bf16.mxu0 0
      %3887 = vmatmul.mubr.bf16.gmra.mrb[0].mxu0 %v878
      %v3888 = vpop.f32.mrb[0].mxu0
      %v3889 = vadd.f32 0.0, %v3888
      %v3890 = vpop.f32.mrb[0].mxu0
      %v3891 = vpop.f32.mrb[0].mxu0
      %v3892 = vadd.f32 0.0, %v3891
      %v3893 = vpop.f32.mrb[0].mxu0
      %3894 = vmatprep.mubr.bf16.mxu0 0
      %3895 = vmatmul.mubr.bf16.gmra.mrb[0].mxu0 %v879
      %v3896 = vpop.f32.mrb[0].mxu0
      %v3897 = vadd.f32 0.0, %v3896
      %v3898 = vpop.f32.mrb[0].mxu0
      %v3899 = vpop.f32.mrb[0].mxu0
      %v3900 = vadd.f32 0.0, %v3899
      %v3901 = vpop.f32.mrb[0].mxu0
      %3902 = vdwg.mxu0
      %v3903 = vadd.f32 %v3645, %v3777
      %v3904 = vadd.f32 %v3646, %v3780
      %v3905 = vadd.f32 %v3647, %v3785
      %v3906 = vadd.f32 %v3648, %v3788
      %v3907 = vadd.f32 %v3649, %v3793
      %v3908 = vadd.f32 %v3650, %v3796
      %v3909 = vadd.f32 %v3651, %v3801
      %v3910 = vadd.f32 %v3652, %v3804
      %v3911 = vadd.f32 %v3653, %v3809
      %v3912 = vadd.f32 %v3654, %v3812
      %v3913 = vadd.f32 %v3655, %v3817
      %v3914 = vadd.f32 %v3656, %v3820
      %v3915 = vadd.f32 %v3657, %v3825
      %v3916 = vadd.f32 %v3658, %v3828
      %v3917 = vadd.f32 %v3659, %v3833
      %v3918 = vadd.f32 %v3660, %v3836
      %v3919 = vadd.f32 %v3661, %v3841
      %v3920 = vadd.f32 %v3662, %v3844
      %v3921 = vadd.f32 %v3663, %v3849
      %v3922 = vadd.f32 %v3664, %v3852
      %v3923 = vadd.f32 %v3665, %v3857
      %v3924 = vadd.f32 %v3666, %v3860
      %v3925 = vadd.f32 %v3667, %v3865
      %v3926 = vadd.f32 %v3668, %v3868
      %v3927 = vadd.f32 %v3669, %v3873
      %v3928 = vadd.f32 %v3670, %v3876
      %v3929 = vadd.f32 %v3671, %v3881
      %v3930 = vadd.f32 %v3672, %v3884
      %v3931 = vadd.f32 %v3673, %v3889
      %v3932 = vadd.f32 %v3674, %v3892
      %v3933 = vadd.f32 %v3675, %v3897
      %v3934 = vadd.f32 %v3676, %v3900
      %s3935 = scalar_lea.vmem %s5, 320
      %v3936 = vld [vmem:[%s3935] sm:$0xf]
      %v3937 = vld [vmem:[%s3935 + $0x4] sm:$0xf]
      %v3938 = vld [vmem:[%s3935 + $0x8] sm:$0xf]
      %v3939 = vld [vmem:[%s3935 + $0xc] sm:$0xf]
      %v3940 = vld [vmem:[%s3935 + $0x10] sm:$0xf]
      %v3941 = vld [vmem:[%s3935 + $0x14] sm:$0xf]
      %v3942 = vld [vmem:[%s3935 + $0x18] sm:$0xf]
      %v3943 = vld [vmem:[%s3935 + $0x1c] sm:$0xf]
      %v3944 = vld [vmem:[%s3935 + $0x20] sm:$0xf]
      %v3945 = vld [vmem:[%s3935 + $0x24] sm:$0xf]
      %v3946 = vld [vmem:[%s3935 + $0x28] sm:$0xf]
      %v3947 = vld [vmem:[%s3935 + $0x2c] sm:$0xf]
      %v3948 = vld [vmem:[%s3935 + $0x30] sm:$0xf]
      %v3949 = vld [vmem:[%s3935 + $0x34] sm:$0xf]
      %v3950 = vld [vmem:[%s3935 + $0x38] sm:$0xf]
      %v3951 = vld [vmem:[%s3935 + $0x3c] sm:$0xf]
      %v3968 = vunpack.c.l.b16 %v3936
      %v3969 = vunpack.c.l.b16 %v3937
      %v3970 = vunpack.c.l.b16 %v3938
      %v3971 = vunpack.c.l.b16 %v3939
      %v3972 = vunpack.c.l.b16 %v3940
      %v3973 = vunpack.c.l.b16 %v3941
      %v3974 = vunpack.c.l.b16 %v3942
      %v3975 = vunpack.c.l.b16 %v3943
      %v3976 = vunpack.c.l.b16 %v3944
      %v3977 = vunpack.c.l.b16 %v3945
      %v3978 = vunpack.c.l.b16 %v3946
      %v3979 = vunpack.c.l.b16 %v3947
      %v3980 = vunpack.c.l.b16 %v3948
      %v3981 = vunpack.c.l.b16 %v3949
      %v3982 = vunpack.c.l.b16 %v3950
      %v3983 = vunpack.c.l.b16 %v3951
      %v3984 = vpack.c.b16 %v3969, %v3968
      %v3985 = vpack.c.b16 %v3971, %v3970
      %v3986 = vpack.c.b16 %v3973, %v3972
      %v3987 = vpack.c.b16 %v3975, %v3974
      %v3988 = vpack.c.b16 %v3977, %v3976
      %v3989 = vpack.c.b16 %v3979, %v3978
      %v3990 = vpack.c.b16 %v3981, %v3980
      %v3991 = vpack.c.b16 %v3983, %v3982
      %4000 = vmatprep.subr.bf16.mxu0 0
      %4001 = vmatpush1.bf16.msra.mxu0 %v3984
      %4002 = vmatprep.subr.bf16.mxu0 0
      %4003 = vmatpush1.bf16.msra.mxu0 %v3985
      %4004 = vmatprep.subr.bf16.mxu0 0
      %4005 = vmatpush1.bf16.msra.mxu0 %v3986
      %4006 = vmatprep.subr.bf16.mxu0 0
      %4007 = vmatpush1.bf16.msra.mxu0 %v3987
      %4008 = vmatprep.subr.bf16.mxu0 0
      %4009 = vmatpush1.bf16.msra.mxu0 %v3988
      %4010 = vmatprep.subr.bf16.mxu0 0
      %4011 = vmatpush1.bf16.msra.mxu0 %v3989
      %4012 = vmatprep.subr.bf16.mxu0 0
      %4013 = vmatpush1.bf16.msra.mxu0 %v3990
      %4014 = vmatprep.subr.bf16.mxu0 0
      %4015 = vmatpush1.bf16.msra.mxu0 %v3991
      %4016 = vmatprep.subr.bf16.mxu0 0
      %4017 = vmatpush1.bf16.msra.mxu0 0
      %4018 = vmatprep.subr.bf16.mxu0 0
      %4019 = vmatpush1.bf16.msra.mxu0 0
      %4020 = vmatprep.subr.bf16.mxu0 0
      %4021 = vmatpush1.bf16.msra.mxu0 0
      %4022 = vmatprep.subr.bf16.mxu0 0
      %4023 = vmatpush1.bf16.msra.mxu0 0
      %4024 = vmatprep.subr.bf16.mxu0 0
      %4025 = vmatpush1.bf16.msra.mxu0 0
      %4026 = vmatprep.subr.bf16.mxu0 0
      %4027 = vmatpush1.bf16.msra.mxu0 0
      %4028 = vmatprep.subr.bf16.mxu0 0
      %4029 = vmatpush1.bf16.msra.mxu0 0
      %4030 = vmatprep.subr.bf16.mxu0 0
      %4031 = vmatpush1.bf16.msra.mxu0 0
      %4032 = vmatprep.mubr.bf16.mxu0 0
      %4033 = vmatmul.mubr.bf16.gmra.mrb[0].mxu0 %v864
      %v4034 = vpop.f32.mrb[0].mxu0
      %v4035 = vadd.f32 0.0, %v4034
      %v4036 = vpop.f32.mrb[0].mxu0
      %v4037 = vpop.f32.mrb[0].mxu0
      %v4038 = vadd.f32 0.0, %v4037
      %v4039 = vpop.f32.mrb[0].mxu0
      %4040 = vmatprep.mubr.bf16.mxu0 0
      %4041 = vmatmul.mubr.bf16.gmra.mrb[0].mxu0 %v865
      %v4042 = vpop.f32.mrb[0].mxu0
      %v4043 = vadd.f32 0.0, %v4042
      %v4044 = vpop.f32.mrb[0].mxu0
      %v4045 = vpop.f32.mrb[0].mxu0
      %v4046 = vadd.f32 0.0, %v4045
      %v4047 = vpop.f32.mrb[0].mxu0
      %4048 = vmatprep.mubr.bf16.mxu0 0
      %4049 = vmatmul.mubr.bf16.gmra.mrb[0].mxu0 %v866
      %v4050 = vpop.f32.mrb[0].mxu0
      %v4051 = vadd.f32 0.0, %v4050
      %v4052 = vpop.f32.mrb[0].mxu0
      %v4053 = vpop.f32.mrb[0].mxu0
      %v4054 = vadd.f32 0.0, %v4053
      %v4055 = vpop.f32.mrb[0].mxu0
      %4056 = vmatprep.mubr.bf16.mxu0 0
      %4057 = vmatmul.mubr.bf16.gmra.mrb[0].mxu0 %v867
      %v4058 = vpop.f32.mrb[0].mxu0
      %v4059 = vadd.f32 0.0, %v4058
      %v4060 = vpop.f32.mrb[0].mxu0
      %v4061 = vpop.f32.mrb[0].mxu0
      %v4062 = vadd.f32 0.0, %v4061
      %v4063 = vpop.f32.mrb[0].mxu0
      %4064 = vmatprep.mubr.bf16.mxu0 0
      %4065 = vmatmul.mubr.bf16.gmra.mrb[0].mxu0 %v868
      %v4066 = vpop.f32.mrb[0].mxu0
      %v4067 = vadd.f32 0.0, %v4066
      %v4068 = vpop.f32.mrb[0].mxu0
      %v4069 = vpop.f32.mrb[0].mxu0
      %v4070 = vadd.f32 0.0, %v4069
      %v4071 = vpop.f32.mrb[0].mxu0
      %4072 = vmatprep.mubr.bf16.mxu0 0
      %4073 = vmatmul.mubr.bf16.gmra.mrb[0].mxu0 %v869
      %v4074 = vpop.f32.mrb[0].mxu0
      %v4075 = vadd.f32 0.0, %v4074
      %v4076 = vpop.f32.mrb[0].mxu0
      %v4077 = vpop.f32.mrb[0].mxu0
      %v4078 = vadd.f32 0.0, %v4077
      %v4079 = vpop.f32.mrb[0].mxu0
      %4080 = vmatprep.mubr.bf16.mxu0 0
      %4081 = vmatmul.mubr.bf16.gmra.mrb[0].mxu0 %v870
      %v4082 = vpop.f32.mrb[0].mxu0
      %v4083 = vadd.f32 0.0, %v4082
      %v4084 = vpop.f32.mrb[0].mxu0
      %v4085 = vpop.f32.mrb[0].mxu0
      %v4086 = vadd.f32 0.0, %v4085
      %v4087 = vpop.f32.mrb[0].mxu0
      %4088 = vmatprep.mubr.bf16.mxu0 0
      %4089 = vmatmul.mubr.bf16.gmra.mrb[0].mxu0 %v871
      %v4090 = vpop.f32.mrb[0].mxu0
      %v4091 = vadd.f32 0.0, %v4090
      %v4092 = vpop.f32.mrb[0].mxu0
      %v4093 = vpop.f32.mrb[0].mxu0
      %v4094 = vadd.f32 0.0, %v4093
      %v4095 = vpop.f32.mrb[0].mxu0
      %4096 = vmatprep.mubr.bf16.mxu0 0
      %4097 = vmatmul.mubr.bf16.gmra.mrb[0].mxu0 %v872
      %v4098 = vpop.f32.mrb[0].mxu0
      %v4099 = vadd.f32 0.0, %v4098
      %v4100 = vpop.f32.mrb[0].mxu0
      %v4101 = vpop.f32.mrb[0].mxu0
      %v4102 = vadd.f32 0.0, %v4101
      %v4103 = vpop.f32.mrb[0].mxu0
      %4104 = vmatprep.mubr.bf16.mxu0 0
      %4105 = vmatmul.mubr.bf16.gmra.mrb[0].mxu0 %v873
      %v4106 = vpop.f32.mrb[0].mxu0
      %v4107 = vadd.f32 0.0, %v4106
      %v4108 = vpop.f32.mrb[0].mxu0
      %v4109 = vpop.f32.mrb[0].mxu0
      %v4110 = vadd.f32 0.0, %v4109
      %v4111 = vpop.f32.mrb[0].mxu0
      %4112 = vmatprep.mubr.bf16.mxu0 0
      %4113 = vmatmul.mubr.bf16.gmra.mrb[0].mxu0 %v874
      %v4114 = vpop.f32.mrb[0].mxu0
      %v4115 = vadd.f32 0.0, %v4114
      %v4116 = vpop.f32.mrb[0].mxu0
      %v4117 = vpop.f32.mrb[0].mxu0
      %v4118 = vadd.f32 0.0, %v4117
      %v4119 = vpop.f32.mrb[0].mxu0
      %4120 = vmatprep.mubr.bf16.mxu0 0
      %4121 = vmatmul.mubr.bf16.gmra.mrb[0].mxu0 %v875
      %v4122 = vpop.f32.mrb[0].mxu0
      %v4123 = vadd.f32 0.0, %v4122
      %v4124 = vpop.f32.mrb[0].mxu0
      %v4125 = vpop.f32.mrb[0].mxu0
      %v4126 = vadd.f32 0.0, %v4125
      %v4127 = vpop.f32.mrb[0].mxu0
      %4128 = vmatprep.mubr.bf16.mxu0 0
      %4129 = vmatmul.mubr.bf16.gmra.mrb[0].mxu0 %v876
      %v4130 = vpop.f32.mrb[0].mxu0
      %v4131 = vadd.f32 0.0, %v4130
      %v4132 = vpop.f32.mrb[0].mxu0
      %v4133 = vpop.f32.mrb[0].mxu0
      %v4134 = vadd.f32 0.0, %v4133
      %v4135 = vpop.f32.mrb[0].mxu0
      %4136 = vmatprep.mubr.bf16.mxu0 0
      %4137 = vmatmul.mubr.bf16.gmra.mrb[0].mxu0 %v877
      %v4138 = vpop.f32.mrb[0].mxu0
      %v4139 = vadd.f32 0.0, %v4138
      %v4140 = vpop.f32.mrb[0].mxu0
      %v4141 = vpop.f32.mrb[0].mxu0
      %v4142 = vadd.f32 0.0, %v4141
      %v4143 = vpop.f32.mrb[0].mxu0
      %4144 = vmatprep.mubr.bf16.mxu0 0
      %4145 = vmatmul.mubr.bf16.gmra.mrb[0].mxu0 %v878
      %v4146 = vpop.f32.mrb[0].mxu0
      %v4147 = vadd.f32 0.0, %v4146
      %v4148 = vpop.f32.mrb[0].mxu0
      %v4149 = vpop.f32.mrb[0].mxu0
      %v4150 = vadd.f32 0.0, %v4149
      %v4151 = vpop.f32.mrb[0].mxu0
      %4152 = vmatprep.mubr.bf16.mxu0 0
      %4153 = vmatmul.mubr.bf16.gmra.mrb[0].mxu0 %v879
      %v4154 = vpop.f32.mrb[0].mxu0
      %v4155 = vadd.f32 0.0, %v4154
      %v4156 = vpop.f32.mrb[0].mxu0
      %v4157 = vpop.f32.mrb[0].mxu0
      %v4158 = vadd.f32 0.0, %v4157
      %v4159 = vpop.f32.mrb[0].mxu0
      %4160 = vdwg.mxu0
      %v4193 = vrot.slane %v4035, 1
      %v4194 = vrot.slane %v4038, 1
      %v4195 = vsel %vm2906, %v4193, %v4194
      %v4196 = vrot.slane %v4043, 1
      %v4197 = vsel %vm2906, %v4194, %v4196
      %v4198 = vrot.slane %v4046, 1
      %v4199 = vsel %vm2906, %v4196, %v4198
      %v4200 = vrot.slane %v4051, 1
      %v4201 = vsel %vm2906, %v4198, %v4200
      %v4202 = vrot.slane %v4054, 1
      %v4203 = vsel %vm2906, %v4200, %v4202
      %v4204 = vrot.slane %v4059, 1
      %v4205 = vsel %vm2906, %v4202, %v4204
      %v4206 = vrot.slane %v4062, 1
      %v4207 = vsel %vm2906, %v4204, %v4206
      %v4208 = vrot.slane %v4067, 1
      %v4209 = vsel %vm2906, %v4206, %v4208
      %v4210 = vrot.slane %v4070, 1
      %v4211 = vsel %vm2906, %v4208, %v4210
      %v4212 = vrot.slane %v4075, 1
      %v4213 = vsel %vm2906, %v4210, %v4212
      %v4214 = vrot.slane %v4078, 1
      %v4215 = vsel %vm2906, %v4212, %v4214
      %v4216 = vrot.slane %v4083, 1
      %v4217 = vsel %vm2906, %v4214, %v4216
      %v4218 = vrot.slane %v4086, 1
      %v4219 = vsel %vm2906, %v4216, %v4218
      %v4220 = vrot.slane %v4091, 1
      %v4221 = vsel %vm2906, %v4218, %v4220
      %v4222 = vrot.slane %v4094, 1
      %v4223 = vsel %vm2906, %v4220, %v4222
      %v4224 = vrot.slane %v4099, 1
      %v4225 = vsel %vm2906, %v4222, %v4224
      %v4226 = vrot.slane %v4102, 1
      %v4227 = vsel %vm2906, %v4224, %v4226
      %v4228 = vrot.slane %v4107, 1
      %v4229 = vsel %vm2906, %v4226, %v4228
      %v4230 = vrot.slane %v4110, 1
      %v4231 = vsel %vm2906, %v4228, %v4230
      %v4232 = vrot.slane %v4115, 1
      %v4233 = vsel %vm2906, %v4230, %v4232
      %v4234 = vrot.slane %v4118, 1
      %v4235 = vsel %vm2906, %v4232, %v4234
      %v4236 = vrot.slane %v4123, 1
      %v4237 = vsel %vm2906, %v4234, %v4236
      %v4238 = vrot.slane %v4126, 1
      %v4239 = vsel %vm2906, %v4236, %v4238
      %v4240 = vrot.slane %v4131, 1
      %v4241 = vsel %vm2906, %v4238, %v4240
      %v4242 = vrot.slane %v4134, 1
      %v4243 = vsel %vm2906, %v4240, %v4242
      %v4244 = vrot.slane %v4139, 1
      %v4245 = vsel %vm2906, %v4242, %v4244
      %v4246 = vrot.slane %v4142, 1
      %v4247 = vsel %vm2906, %v4244, %v4246
      %v4248 = vrot.slane %v4147, 1
      %v4249 = vsel %vm2906, %v4246, %v4248
      %v4250 = vrot.slane %v4150, 1
      %v4251 = vsel %vm2906, %v4248, %v4250
      %v4252 = vrot.slane %v4155, 1
      %v4253 = vsel %vm2906, %v4250, %v4252
      %v4254 = vrot.slane %v4158, 1
      %v4255 = vsel %vm2906, %v4252, %v4254
      %v4289 = vsel %vm2906, %v4254, %v4193
      %v4290 = vsel %vm1777, 1, 0
      %v4291 = vsel %vm1778, 1, 0
      %v4292 = vsel %vm1779, 1, 0
      %v4293 = vsel %vm1780, 1, 0
      %v4294 = vsel %vm1781, 1, 0
      %v4295 = vsel %vm1782, 1, 0
      %v4296 = vsel %vm1783, 1, 0
      %v4297 = vsel %vm1784, 1, 0
      %v4298 = vsel %vm1785, 1, 0
      %v4299 = vsel %vm1786, 1, 0
      %v4300 = vsel %vm1787, 1, 0
      %v4301 = vsel %vm1788, 1, 0
      %v4302 = vsel %vm1789, 1, 0
      %v4303 = vsel %vm1790, 1, 0
      %v4304 = vsel %vm1791, 1, 0
      %v4305 = vsel %vm1792, 1, 0
      %v4306 = vsel %vm1793, 1, 0
      %v4307 = vsel %vm1794, 1, 0
      %v4308 = vsel %vm1795, 1, 0
      %v4309 = vsel %vm1796, 1, 0
      %v4310 = vsel %vm1797, 1, 0
      %v4311 = vsel %vm1798, 1, 0
      %v4312 = vsel %vm1799, 1, 0
      %v4313 = vsel %vm1800, 1, 0
      %v4314 = vsel %vm1801, 1, 0
      %v4315 = vsel %vm1802, 1, 0
      %v4316 = vsel %vm1803, 1, 0
      %v4317 = vsel %vm1804, 1, 0
      %v4318 = vsel %vm1805, 1, 0
      %v4319 = vsel %vm1806, 1, 0
      %v4320 = vsel %vm1807, 1, 0
      %v4321 = vsel %vm1808, 1, 0
      %vm4322 = vcmp.eq.s32.totalorder %v4290, 1
      %vm4323 = vcmp.eq.s32.totalorder %v4291, 1
      %vm4324 = vcmp.eq.s32.totalorder %v4292, 1
      %vm4325 = vcmp.eq.s32.totalorder %v4293, 1
      %vm4326 = vcmp.eq.s32.totalorder %v4294, 1
      %vm4327 = vcmp.eq.s32.totalorder %v4295, 1
      %vm4328 = vcmp.eq.s32.totalorder %v4296, 1
      %vm4329 = vcmp.eq.s32.totalorder %v4297, 1
      %vm4330 = vcmp.eq.s32.totalorder %v4298, 1
      %vm4331 = vcmp.eq.s32.totalorder %v4299, 1
      %vm4332 = vcmp.eq.s32.totalorder %v4300, 1
      %vm4333 = vcmp.eq.s32.totalorder %v4301, 1
      %vm4334 = vcmp.eq.s32.totalorder %v4302, 1
      %vm4335 = vcmp.eq.s32.totalorder %v4303, 1
      %vm4336 = vcmp.eq.s32.totalorder %v4304, 1
      %vm4337 = vcmp.eq.s32.totalorder %v4305, 1
      %vm4338 = vcmp.eq.s32.totalorder %v4306, 1
      %vm4339 = vcmp.eq.s32.totalorder %v4307, 1
      %vm4340 = vcmp.eq.s32.totalorder %v4308, 1
      %vm4341 = vcmp.eq.s32.totalorder %v4309, 1
      %vm4342 = vcmp.eq.s32.totalorder %v4310, 1
      %vm4343 = vcmp.eq.s32.totalorder %v4311, 1
      %vm4344 = vcmp.eq.s32.totalorder %v4312, 1
      %vm4345 = vcmp.eq.s32.totalorder %v4313, 1
      %vm4346 = vcmp.eq.s32.totalorder %v4314, 1
      %vm4347 = vcmp.eq.s32.totalorder %v4315, 1
      %vm4348 = vcmp.eq.s32.totalorder %v4316, 1
      %vm4349 = vcmp.eq.s32.totalorder %v4317, 1
      %vm4350 = vcmp.eq.s32.totalorder %v4318, 1
      %vm4351 = vcmp.eq.s32.totalorder %v4319, 1
      %vm4352 = vcmp.eq.s32.totalorder %v4320, 1
      %vm4353 = vcmp.eq.s32.totalorder %v4321, 1
      %v4354 = vsel %vm4322, %v4195, 0.0
      %v4355 = vsel %vm4323, %v4197, 0.0
      %v4356 = vsel %vm4324, %v4199, 0.0
      %v4357 = vsel %vm4325, %v4201, 0.0
      %v4358 = vsel %vm4326, %v4203, 0.0
      %v4359 = vsel %vm4327, %v4205, 0.0
      %v4360 = vsel %vm4328, %v4207, 0.0
      %v4361 = vsel %vm4329, %v4209, 0.0
      %v4362 = vsel %vm4330, %v4211, 0.0
      %v4363 = vsel %vm4331, %v4213, 0.0
      %v4364 = vsel %vm4332, %v4215, 0.0
      %v4365 = vsel %vm4333, %v4217, 0.0
      %v4366 = vsel %vm4334, %v4219, 0.0
      %v4367 = vsel %vm4335, %v4221, 0.0
      %v4368 = vsel %vm4336, %v4223, 0.0
      %v4369 = vsel %vm4337, %v4225, 0.0
      %v4370 = vsel %vm4338, %v4227, 0.0
      %v4371 = vsel %vm4339, %v4229, 0.0
      %v4372 = vsel %vm4340, %v4231, 0.0
      %v4373 = vsel %vm4341, %v4233, 0.0
      %v4374 = vsel %vm4342, %v4235, 0.0
      %v4375 = vsel %vm4343, %v4237, 0.0
      %v4376 = vsel %vm4344, %v4239, 0.0
      %v4377 = vsel %vm4345, %v4241, 0.0
      %v4378 = vsel %vm4346, %v4243, 0.0
      %v4379 = vsel %vm4347, %v4245, 0.0
      %v4380 = vsel %vm4348, %v4247, 0.0
      %v4381 = vsel %vm4349, %v4249, 0.0
      %v4382 = vsel %vm4350, %v4251, 0.0
      %v4383 = vsel %vm4351, %v4253, 0.0
      %v4384 = vsel %vm4352, %v4255, 0.0
      %v4385 = vsel %vm4353, %v4289, 0.0
      %v4386 = vadd.f32 %v3903, %v4354
      %v4387 = vadd.f32 %v3904, %v4355
      %v4388 = vadd.f32 %v3905, %v4356
      %v4389 = vadd.f32 %v3906, %v4357
      %v4390 = vadd.f32 %v3907, %v4358
      %v4391 = vadd.f32 %v3908, %v4359
      %v4392 = vadd.f32 %v3909, %v4360
      %v4393 = vadd.f32 %v3910, %v4361
      %v4394 = vadd.f32 %v3911, %v4362
      %v4395 = vadd.f32 %v3912, %v4363
      %v4396 = vadd.f32 %v3913, %v4364
      %v4397 = vadd.f32 %v3914, %v4365
      %v4398 = vadd.f32 %v3915, %v4366
      %v4399 = vadd.f32 %v3916, %v4367
      %v4400 = vadd.f32 %v3917, %v4368
      %v4401 = vadd.f32 %v3918, %v4369
      %v4402 = vadd.f32 %v3919, %v4370
      %v4403 = vadd.f32 %v3920, %v4371
      %v4404 = vadd.f32 %v3921, %v4372
      %v4405 = vadd.f32 %v3922, %v4373
      %v4406 = vadd.f32 %v3923, %v4374
      %v4407 = vadd.f32 %v3924, %v4375
      %v4408 = vadd.f32 %v3925, %v4376
      %v4409 = vadd.f32 %v3926, %v4377
      %v4410 = vadd.f32 %v3927, %v4378
      %v4411 = vadd.f32 %v3928, %v4379
      %v4412 = vadd.f32 %v3929, %v4380
      %v4413 = vadd.f32 %v3930, %v4381
      %v4414 = vadd.f32 %v3931, %v4382
      %v4415 = vadd.f32 %v3932, %v4383
      %v4416 = vadd.f32 %v3933, %v4384
      %v4417 = vadd.f32 %v3934, %v4385
      %s4418 = scalar_lea.vmem %s5, 384
      %v4419 = vld [vmem:[%s4418] sm:$0xf]
      %v4420 = vld [vmem:[%s4418 + $0x4] sm:$0xf]
      %v4421 = vld [vmem:[%s4418 + $0x8] sm:$0xf]
      %v4422 = vld [vmem:[%s4418 + $0xc] sm:$0xf]
      %v4423 = vld [vmem:[%s4418 + $0x10] sm:$0xf]
      %v4424 = vld [vmem:[%s4418 + $0x14] sm:$0xf]
      %v4425 = vld [vmem:[%s4418 + $0x18] sm:$0xf]
      %v4426 = vld [vmem:[%s4418 + $0x1c] sm:$0xf]
      %v4427 = vld [vmem:[%s4418 + $0x20] sm:$0xf]
      %v4428 = vld [vmem:[%s4418 + $0x24] sm:$0xf]
      %v4429 = vld [vmem:[%s4418 + $0x28] sm:$0xf]
      %v4430 = vld [vmem:[%s4418 + $0x2c] sm:$0xf]
      %v4431 = vld [vmem:[%s4418 + $0x30] sm:$0xf]
      %v4432 = vld [vmem:[%s4418 + $0x34] sm:$0xf]
      %v4433 = vld [vmem:[%s4418 + $0x38] sm:$0xf]
      %v4434 = vld [vmem:[%s4418 + $0x3c] sm:$0xf]
      %v4451 = vunpack.c.l.b16 %v4419
      %v4452 = vunpack.c.l.b16 %v4420
      %v4453 = vunpack.c.l.b16 %v4421
      %v4454 = vunpack.c.l.b16 %v4422
      %v4455 = vunpack.c.l.b16 %v4423
      %v4456 = vunpack.c.l.b16 %v4424
      %v4457 = vunpack.c.l.b16 %v4425
      %v4458 = vunpack.c.l.b16 %v4426
      %v4459 = vunpack.c.l.b16 %v4427
      %v4460 = vunpack.c.l.b16 %v4428
      %v4461 = vunpack.c.l.b16 %v4429
      %v4462 = vunpack.c.l.b16 %v4430
      %v4463 = vunpack.c.l.b16 %v4431
      %v4464 = vunpack.c.l.b16 %v4432
      %v4465 = vunpack.c.l.b16 %v4433
      %v4466 = vunpack.c.l.b16 %v4434
      %v4467 = vpack.c.b16 %v4452, %v4451
      %v4468 = vpack.c.b16 %v4454, %v4453
      %v4469 = vpack.c.b16 %v4456, %v4455
      %v4470 = vpack.c.b16 %v4458, %v4457
      %v4471 = vpack.c.b16 %v4460, %v4459
      %v4472 = vpack.c.b16 %v4462, %v4461
      %v4473 = vpack.c.b16 %v4464, %v4463
      %v4474 = vpack.c.b16 %v4466, %v4465
      %4483 = vmatprep.subr.bf16.mxu0 0
      %4484 = vmatpush1.bf16.msra.mxu0 %v4467
      %4485 = vmatprep.subr.bf16.mxu0 0
      %4486 = vmatpush1.bf16.msra.mxu0 %v4468
      %4487 = vmatprep.subr.bf16.mxu0 0
      %4488 = vmatpush1.bf16.msra.mxu0 %v4469
      %4489 = vmatprep.subr.bf16.mxu0 0
      %4490 = vmatpush1.bf16.msra.mxu0 %v4470
      %4491 = vmatprep.subr.bf16.mxu0 0
      %4492 = vmatpush1.bf16.msra.mxu0 %v4471
      %4493 = vmatprep.subr.bf16.mxu0 0
      %4494 = vmatpush1.bf16.msra.mxu0 %v4472
      %4495 = vmatprep.subr.bf16.mxu0 0
      %4496 = vmatpush1.bf16.msra.mxu0 %v4473
      %4497 = vmatprep.subr.bf16.mxu0 0
      %4498 = vmatpush1.bf16.msra.mxu0 %v4474
      %4499 = vmatprep.subr.bf16.mxu0 0
      %4500 = vmatpush1.bf16.msra.mxu0 0
      %4501 = vmatprep.subr.bf16.mxu0 0
      %4502 = vmatpush1.bf16.msra.mxu0 0
      %4503 = vmatprep.subr.bf16.mxu0 0
      %4504 = vmatpush1.bf16.msra.mxu0 0
      %4505 = vmatprep.subr.bf16.mxu0 0
      %4506 = vmatpush1.bf16.msra.mxu0 0
      %4507 = vmatprep.subr.bf16.mxu0 0
      %4508 = vmatpush1.bf16.msra.mxu0 0
      %4509 = vmatprep.subr.bf16.mxu0 0
      %4510 = vmatpush1.bf16.msra.mxu0 0
      %4511 = vmatprep.subr.bf16.mxu0 0
      %4512 = vmatpush1.bf16.msra.mxu0 0
      %4513 = vmatprep.subr.bf16.mxu0 0
      %4514 = vmatpush1.bf16.msra.mxu0 0
      %4515 = vmatprep.mubr.bf16.mxu0 0
      %4516 = vmatmul.mubr.bf16.gmra.mrb[0].mxu0 %v864
      %v4517 = vpop.f32.mrb[0].mxu0
      %v4518 = vadd.f32 0.0, %v4517
      %v4519 = vpop.f32.mrb[0].mxu0
      %v4520 = vpop.f32.mrb[0].mxu0
      %v4521 = vadd.f32 0.0, %v4520
      %v4522 = vpop.f32.mrb[0].mxu0
      %4523 = vmatprep.mubr.bf16.mxu0 0
      %4524 = vmatmul.mubr.bf16.gmra.mrb[0].mxu0 %v865
      %v4525 = vpop.f32.mrb[0].mxu0
      %v4526 = vadd.f32 0.0, %v4525
      %v4527 = vpop.f32.mrb[0].mxu0
      %v4528 = vpop.f32.mrb[0].mxu0
      %v4529 = vadd.f32 0.0, %v4528
      %v4530 = vpop.f32.mrb[0].mxu0
      %4531 = vmatprep.mubr.bf16.mxu0 0
      %4532 = vmatmul.mubr.bf16.gmra.mrb[0].mxu0 %v866
      %v4533 = vpop.f32.mrb[0].mxu0
      %v4534 = vadd.f32 0.0, %v4533
      %v4535 = vpop.f32.mrb[0].mxu0
      %v4536 = vpop.f32.mrb[0].mxu0
      %v4537 = vadd.f32 0.0, %v4536
      %v4538 = vpop.f32.mrb[0].mxu0
      %4539 = vmatprep.mubr.bf16.mxu0 0
      %4540 = vmatmul.mubr.bf16.gmra.mrb[0].mxu0 %v867
      %v4541 = vpop.f32.mrb[0].mxu0
      %v4542 = vadd.f32 0.0, %v4541
      %v4543 = vpop.f32.mrb[0].mxu0
      %v4544 = vpop.f32.mrb[0].mxu0
      %v4545 = vadd.f32 0.0, %v4544
      %v4546 = vpop.f32.mrb[0].mxu0
      %4547 = vmatprep.mubr.bf16.mxu0 0
      %4548 = vmatmul.mubr.bf16.gmra.mrb[0].mxu0 %v868
      %v4549 = vpop.f32.mrb[0].mxu0
      %v4550 = vadd.f32 0.0, %v4549
      %v4551 = vpop.f32.mrb[0].mxu0
      %v4552 = vpop.f32.mrb[0].mxu0
      %v4553 = vadd.f32 0.0, %v4552
      %v4554 = vpop.f32.mrb[0].mxu0
      %4555 = vmatprep.mubr.bf16.mxu0 0
      %4556 = vmatmul.mubr.bf16.gmra.mrb[0].mxu0 %v869
      %v4557 = vpop.f32.mrb[0].mxu0
      %v4558 = vadd.f32 0.0, %v4557
      %v4559 = vpop.f32.mrb[0].mxu0
      %v4560 = vpop.f32.mrb[0].mxu0
      %v4561 = vadd.f32 0.0, %v4560
      %v4562 = vpop.f32.mrb[0].mxu0
      %4563 = vmatprep.mubr.bf16.mxu0 0
      %4564 = vmatmul.mubr.bf16.gmra.mrb[0].mxu0 %v870
      %v4565 = vpop.f32.mrb[0].mxu0
      %v4566 = vadd.f32 0.0, %v4565
      %v4567 = vpop.f32.mrb[0].mxu0
      %v4568 = vpop.f32.mrb[0].mxu0
      %v4569 = vadd.f32 0.0, %v4568
      %v4570 = vpop.f32.mrb[0].mxu0
      %4571 = vmatprep.mubr.bf16.mxu0 0
      %4572 = vmatmul.mubr.bf16.gmra.mrb[0].mxu0 %v871
      %v4573 = vpop.f32.mrb[0].mxu0
      %v4574 = vadd.f32 0.0, %v4573
      %v4575 = vpop.f32.mrb[0].mxu0
      %v4576 = vpop.f32.mrb[0].mxu0
      %v4577 = vadd.f32 0.0, %v4576
      %v4578 = vpop.f32.mrb[0].mxu0
      %4579 = vmatprep.mubr.bf16.mxu0 0
      %4580 = vmatmul.mubr.bf16.gmra.mrb[0].mxu0 %v872
      %v4581 = vpop.f32.mrb[0].mxu0
      %v4582 = vadd.f32 0.0, %v4581
      %v4583 = vpop.f32.mrb[0].mxu0
      %v4584 = vpop.f32.mrb[0].mxu0
      %v4585 = vadd.f32 0.0, %v4584
      %v4586 = vpop.f32.mrb[0].mxu0
      %4587 = vmatprep.mubr.bf16.mxu0 0
      %4588 = vmatmul.mubr.bf16.gmra.mrb[0].mxu0 %v873
      %v4589 = vpop.f32.mrb[0].mxu0
      %v4590 = vadd.f32 0.0, %v4589
      %v4591 = vpop.f32.mrb[0].mxu0
      %v4592 = vpop.f32.mrb[0].mxu0
      %v4593 = vadd.f32 0.0, %v4592
      %v4594 = vpop.f32.mrb[0].mxu0
      %4595 = vmatprep.mubr.bf16.mxu0 0
      %4596 = vmatmul.mubr.bf16.gmra.mrb[0].mxu0 %v874
      %v4597 = vpop.f32.mrb[0].mxu0
      %v4598 = vadd.f32 0.0, %v4597
      %v4599 = vpop.f32.mrb[0].mxu0
      %v4600 = vpop.f32.mrb[0].mxu0
      %v4601 = vadd.f32 0.0, %v4600
      %v4602 = vpop.f32.mrb[0].mxu0
      %4603 = vmatprep.mubr.bf16.mxu0 0
      %4604 = vmatmul.mubr.bf16.gmra.mrb[0].mxu0 %v875
      %v4605 = vpop.f32.mrb[0].mxu0
      %v4606 = vadd.f32 0.0, %v4605
      %v4607 = vpop.f32.mrb[0].mxu0
      %v4608 = vpop.f32.mrb[0].mxu0
      %v4609 = vadd.f32 0.0, %v4608
      %v4610 = vpop.f32.mrb[0].mxu0
      %4611 = vmatprep.mubr.bf16.mxu0 0
      %4612 = vmatmul.mubr.bf16.gmra.mrb[0].mxu0 %v876
      %v4613 = vpop.f32.mrb[0].mxu0
      %v4614 = vadd.f32 0.0, %v4613
      %v4615 = vpop.f32.mrb[0].mxu0
      %v4616 = vpop.f32.mrb[0].mxu0
      %v4617 = vadd.f32 0.0, %v4616
      %v4618 = vpop.f32.mrb[0].mxu0
      %4619 = vmatprep.mubr.bf16.mxu0 0
      %4620 = vmatmul.mubr.bf16.gmra.mrb[0].mxu0 %v877
      %v4621 = vpop.f32.mrb[0].mxu0
      %v4622 = vadd.f32 0.0, %v4621
      %v4623 = vpop.f32.mrb[0].mxu0
      %v4624 = vpop.f32.mrb[0].mxu0
      %v4625 = vadd.f32 0.0, %v4624
      %v4626 = vpop.f32.mrb[0].mxu0
      %4627 = vmatprep.mubr.bf16.mxu0 0
      %4628 = vmatmul.mubr.bf16.gmra.mrb[0].mxu0 %v878
      %v4629 = vpop.f32.mrb[0].mxu0
      %v4630 = vadd.f32 0.0, %v4629
      %v4631 = vpop.f32.mrb[0].mxu0
      %v4632 = vpop.f32.mrb[0].mxu0
      %v4633 = vadd.f32 0.0, %v4632
      %v4634 = vpop.f32.mrb[0].mxu0
      %4635 = vmatprep.mubr.bf16.mxu0 0
      %4636 = vmatmul.mubr.bf16.gmra.mrb[0].mxu0 %v879
      %v4637 = vpop.f32.mrb[0].mxu0
      %v4638 = vadd.f32 0.0, %v4637
      %v4639 = vpop.f32.mrb[0].mxu0
      %v4640 = vpop.f32.mrb[0].mxu0
      %v4641 = vadd.f32 0.0, %v4640
      %v4642 = vpop.f32.mrb[0].mxu0
      %4643 = vdwg.mxu0
      %v4675 = vrot.slane %v4521, 7
      %v4676 = vrot.slane %v4526, 7
      %v4677 = vsel %vm2037, %v4675, %v4676
      %v4678 = vrot.slane %v4529, 7
      %v4679 = vsel %vm2037, %v4676, %v4678
      %v4680 = vrot.slane %v4534, 7
      %v4681 = vsel %vm2037, %v4678, %v4680
      %v4682 = vrot.slane %v4537, 7
      %v4683 = vsel %vm2037, %v4680, %v4682
      %v4684 = vrot.slane %v4542, 7
      %v4685 = vsel %vm2037, %v4682, %v4684
      %v4686 = vrot.slane %v4545, 7
      %v4687 = vsel %vm2037, %v4684, %v4686
      %v4688 = vrot.slane %v4550, 7
      %v4689 = vsel %vm2037, %v4686, %v4688
      %v4690 = vrot.slane %v4553, 7
      %v4691 = vsel %vm2037, %v4688, %v4690
      %v4692 = vrot.slane %v4558, 7
      %v4693 = vsel %vm2037, %v4690, %v4692
      %v4694 = vrot.slane %v4561, 7
      %v4695 = vsel %vm2037, %v4692, %v4694
      %v4696 = vrot.slane %v4566, 7
      %v4697 = vsel %vm2037, %v4694, %v4696
      %v4698 = vrot.slane %v4569, 7
      %v4699 = vsel %vm2037, %v4696, %v4698
      %v4700 = vrot.slane %v4574, 7
      %v4701 = vsel %vm2037, %v4698, %v4700
      %v4702 = vrot.slane %v4577, 7
      %v4703 = vsel %vm2037, %v4700, %v4702
      %v4704 = vrot.slane %v4582, 7
      %v4705 = vsel %vm2037, %v4702, %v4704
      %v4706 = vrot.slane %v4585, 7
      %v4707 = vsel %vm2037, %v4704, %v4706
      %v4708 = vrot.slane %v4590, 7
      %v4709 = vsel %vm2037, %v4706, %v4708
      %v4710 = vrot.slane %v4593, 7
      %v4711 = vsel %vm2037, %v4708, %v4710
      %v4712 = vrot.slane %v4598, 7
      %v4713 = vsel %vm2037, %v4710, %v4712
      %v4714 = vrot.slane %v4601, 7
      %v4715 = vsel %vm2037, %v4712, %v4714
      %v4716 = vrot.slane %v4606, 7
      %v4717 = vsel %vm2037, %v4714, %v4716
      %v4718 = vrot.slane %v4609, 7
      %v4719 = vsel %vm2037, %v4716, %v4718
      %v4720 = vrot.slane %v4614, 7
      %v4721 = vsel %vm2037, %v4718, %v4720
      %v4722 = vrot.slane %v4617, 7
      %v4723 = vsel %vm2037, %v4720, %v4722
      %v4724 = vrot.slane %v4622, 7
      %v4725 = vsel %vm2037, %v4722, %v4724
      %v4726 = vrot.slane %v4625, 7
      %v4727 = vsel %vm2037, %v4724, %v4726
      %v4728 = vrot.slane %v4630, 7
      %v4729 = vsel %vm2037, %v4726, %v4728
      %v4730 = vrot.slane %v4633, 7
      %v4731 = vsel %vm2037, %v4728, %v4730
      %v4732 = vrot.slane %v4638, 7
      %v4733 = vsel %vm2037, %v4730, %v4732
      %v4734 = vrot.slane %v4641, 7
      %v4735 = vsel %vm2037, %v4732, %v4734
      %v4768 = vrot.slane %v4518, 7
      %v4769 = vsel %vm2037, %v4768, %v4675
      %v4772 = vsel %vm2037, %v4734, %v4768
      %vm4773 = vmand %vm1713, %vm1745
      %vm4774 = vmand %vm1714, %vm1746
      %vm4775 = vmand %vm1715, %vm1747
      %vm4776 = vmand %vm1716, %vm1748
      %vm4777 = vmand %vm1717, %vm1749
      %vm4778 = vmand %vm1718, %vm1750
      %vm4779 = vmand %vm1719, %vm1751
      %vm4780 = vmand %vm1720, %vm1752
      %vm4781 = vmand %vm1721, %vm1753
      %vm4782 = vmand %vm1722, %vm1754
      %vm4783 = vmand %vm1723, %vm1755
      %vm4784 = vmand %vm1724, %vm1756
      %vm4785 = vmand %vm1725, %vm1757
      %vm4786 = vmand %vm1726, %vm1758
      %vm4787 = vmand %vm1727, %vm1759
      %vm4788 = vmand %vm1728, %vm1760
      %vm4789 = vmand %vm1729, %vm1761
      %vm4790 = vmand %vm1730, %vm1762
      %vm4791 = vmand %vm1731, %vm1763
      %vm4792 = vmand %vm1732, %vm1764
      %vm4793 = vmand %vm1733, %vm1765
      %vm4794 = vmand %vm1734, %vm1766
      %vm4795 = vmand %vm1735, %vm1767
      %vm4796 = vmand %vm1736, %vm1768
      %vm4797 = vmand %vm1737, %vm1769
      %vm4798 = vmand %vm1738, %vm1770
      %vm4799 = vmand %vm1739, %vm1771
      %vm4800 = vmand %vm1740, %vm1772
      %vm4801 = vmand %vm1741, %vm1773
      %vm4802 = vmand %vm1742, %vm1774
      %vm4803 = vmand %vm1743, %vm1775
      %vm4804 = vmand %vm1744, %vm1776
      %v4805 = vsel %vm4773, 1, 0
      %v4806 = vsel %vm4774, 1, 0
      %v4807 = vsel %vm4775, 1, 0
      %v4808 = vsel %vm4776, 1, 0
      %v4809 = vsel %vm4777, 1, 0
      %v4810 = vsel %vm4778, 1, 0
      %v4811 = vsel %vm4779, 1, 0
      %v4812 = vsel %vm4780, 1, 0
      %v4813 = vsel %vm4781, 1, 0
      %v4814 = vsel %vm4782, 1, 0
      %v4815 = vsel %vm4783, 1, 0
      %v4816 = vsel %vm4784, 1, 0
      %v4817 = vsel %vm4785, 1, 0
      %v4818 = vsel %vm4786, 1, 0
      %v4819 = vsel %vm4787, 1, 0
      %v4820 = vsel %vm4788, 1, 0
      %v4821 = vsel %vm4789, 1, 0
      %v4822 = vsel %vm4790, 1, 0
      %v4823 = vsel %vm4791, 1, 0
      %v4824 = vsel %vm4792, 1, 0
      %v4825 = vsel %vm4793, 1, 0
      %v4826 = vsel %vm4794, 1, 0
      %v4827 = vsel %vm4795, 1, 0
      %v4828 = vsel %vm4796, 1, 0
      %v4829 = vsel %vm4797, 1, 0
      %v4830 = vsel %vm4798, 1, 0
      %v4831 = vsel %vm4799, 1, 0
      %v4832 = vsel %vm4800, 1, 0
      %v4833 = vsel %vm4801, 1, 0
      %v4834 = vsel %vm4802, 1, 0
      %v4835 = vsel %vm4803, 1, 0
      %v4836 = vsel %vm4804, 1, 0
      %vm4837 = vcmp.eq.s32.totalorder %v4805, 1
      %vm4838 = vcmp.eq.s32.totalorder %v4806, 1
      %vm4839 = vcmp.eq.s32.totalorder %v4807, 1
      %vm4840 = vcmp.eq.s32.totalorder %v4808, 1
      %vm4841 = vcmp.eq.s32.totalorder %v4809, 1
      %vm4842 = vcmp.eq.s32.totalorder %v4810, 1
      %vm4843 = vcmp.eq.s32.totalorder %v4811, 1
      %vm4844 = vcmp.eq.s32.totalorder %v4812, 1
      %vm4845 = vcmp.eq.s32.totalorder %v4813, 1
      %vm4846 = vcmp.eq.s32.totalorder %v4814, 1
      %vm4847 = vcmp.eq.s32.totalorder %v4815, 1
      %vm4848 = vcmp.eq.s32.totalorder %v4816, 1
      %vm4849 = vcmp.eq.s32.totalorder %v4817, 1
      %vm4850 = vcmp.eq.s32.totalorder %v4818, 1
      %vm4851 = vcmp.eq.s32.totalorder %v4819, 1
      %vm4852 = vcmp.eq.s32.totalorder %v4820, 1
      %vm4853 = vcmp.eq.s32.totalorder %v4821, 1
      %vm4854 = vcmp.eq.s32.totalorder %v4822, 1
      %vm4855 = vcmp.eq.s32.totalorder %v4823, 1
      %vm4856 = vcmp.eq.s32.totalorder %v4824, 1
      %vm4857 = vcmp.eq.s32.totalorder %v4825, 1
      %vm4858 = vcmp.eq.s32.totalorder %v4826, 1
      %vm4859 = vcmp.eq.s32.totalorder %v4827, 1
      %vm4860 = vcmp.eq.s32.totalorder %v4828, 1
      %vm4861 = vcmp.eq.s32.totalorder %v4829, 1
      %vm4862 = vcmp.eq.s32.totalorder %v4830, 1
      %vm4863 = vcmp.eq.s32.totalorder %v4831, 1
      %vm4864 = vcmp.eq.s32.totalorder %v4832, 1
      %vm4865 = vcmp.eq.s32.totalorder %v4833, 1
      %vm4866 = vcmp.eq.s32.totalorder %v4834, 1
      %vm4867 = vcmp.eq.s32.totalorder %v4835, 1
      %vm4868 = vcmp.eq.s32.totalorder %v4836, 1
      %v4869 = vsel %vm4837, %v4677, 0.0
      %v4870 = vsel %vm4838, %v4679, 0.0
      %v4871 = vsel %vm4839, %v4681, 0.0
      %v4872 = vsel %vm4840, %v4683, 0.0
      %v4873 = vsel %vm4841, %v4685, 0.0
      %v4874 = vsel %vm4842, %v4687, 0.0
      %v4875 = vsel %vm4843, %v4689, 0.0
      %v4876 = vsel %vm4844, %v4691, 0.0
      %v4877 = vsel %vm4845, %v4693, 0.0
      %v4878 = vsel %vm4846, %v4695, 0.0
      %v4879 = vsel %vm4847, %v4697, 0.0
      %v4880 = vsel %vm4848, %v4699, 0.0
      %v4881 = vsel %vm4849, %v4701, 0.0
      %v4882 = vsel %vm4850, %v4703, 0.0
      %v4883 = vsel %vm4851, %v4705, 0.0
      %v4884 = vsel %vm4852, %v4707, 0.0
      %v4885 = vsel %vm4853, %v4709, 0.0
      %v4886 = vsel %vm4854, %v4711, 0.0
      %v4887 = vsel %vm4855, %v4713, 0.0
      %v4888 = vsel %vm4856, %v4715, 0.0
      %v4889 = vsel %vm4857, %v4717, 0.0
      %v4890 = vsel %vm4858, %v4719, 0.0
      %v4891 = vsel %vm4859, %v4721, 0.0
      %v4892 = vsel %vm4860, %v4723, 0.0
      %v4893 = vsel %vm4861, %v4725, 0.0
      %v4894 = vsel %vm4862, %v4727, 0.0
      %v4895 = vsel %vm4863, %v4729, 0.0
      %v4896 = vsel %vm4864, %v4731, 0.0
      %v4897 = vsel %vm4865, %v4733, 0.0
      %v4898 = vsel %vm4866, %v4735, 0.0
      %v4899 = vsel %vm4867, %v4772, 0.0
      %v4900 = vsel %vm4868, %v4769, 0.0
      %v4901 = vadd.f32 %v4386, %v4869
      %v4902 = vadd.f32 %v4387, %v4870
      %v4903 = vadd.f32 %v4388, %v4871
      %v4904 = vadd.f32 %v4389, %v4872
      %v4905 = vadd.f32 %v4390, %v4873
      %v4906 = vadd.f32 %v4391, %v4874
      %v4907 = vadd.f32 %v4392, %v4875
      %v4908 = vadd.f32 %v4393, %v4876
      %v4909 = vadd.f32 %v4394, %v4877
      %v4910 = vadd.f32 %v4395, %v4878
      %v4911 = vadd.f32 %v4396, %v4879
      %v4912 = vadd.f32 %v4397, %v4880
      %v4913 = vadd.f32 %v4398, %v4881
      %v4914 = vadd.f32 %v4399, %v4882
      %v4915 = vadd.f32 %v4400, %v4883
      %v4916 = vadd.f32 %v4401, %v4884
      %v4917 = vadd.f32 %v4402, %v4885
      %v4918 = vadd.f32 %v4403, %v4886
      %v4919 = vadd.f32 %v4404, %v4887
      %v4920 = vadd.f32 %v4405, %v4888
      %v4921 = vadd.f32 %v4406, %v4889
      %v4922 = vadd.f32 %v4407, %v4890
      %v4923 = vadd.f32 %v4408, %v4891
      %v4924 = vadd.f32 %v4409, %v4892
      %v4925 = vadd.f32 %v4410, %v4893
      %v4926 = vadd.f32 %v4411, %v4894
      %v4927 = vadd.f32 %v4412, %v4895
      %v4928 = vadd.f32 %v4413, %v4896
      %v4929 = vadd.f32 %v4414, %v4897
      %v4930 = vadd.f32 %v4415, %v4898
      %v4931 = vadd.f32 %v4416, %v4899
      %v4932 = vadd.f32 %v4417, %v4900
      %s4933 = scalar_lea.vmem %s5, 448
      %v4934 = vld [vmem:[%s4933] sm:$0xf]
      %v4935 = vld [vmem:[%s4933 + $0x4] sm:$0xf]
      %v4936 = vld [vmem:[%s4933 + $0x8] sm:$0xf]
      %v4937 = vld [vmem:[%s4933 + $0xc] sm:$0xf]
      %v4938 = vld [vmem:[%s4933 + $0x10] sm:$0xf]
      %v4939 = vld [vmem:[%s4933 + $0x14] sm:$0xf]
      %v4940 = vld [vmem:[%s4933 + $0x18] sm:$0xf]
      %v4941 = vld [vmem:[%s4933 + $0x1c] sm:$0xf]
      %v4942 = vld [vmem:[%s4933 + $0x20] sm:$0xf]
      %v4943 = vld [vmem:[%s4933 + $0x24] sm:$0xf]
      %v4944 = vld [vmem:[%s4933 + $0x28] sm:$0xf]
      %v4945 = vld [vmem:[%s4933 + $0x2c] sm:$0xf]
      %v4946 = vld [vmem:[%s4933 + $0x30] sm:$0xf]
      %v4947 = vld [vmem:[%s4933 + $0x34] sm:$0xf]
      %v4948 = vld [vmem:[%s4933 + $0x38] sm:$0xf]
      %v4949 = vld [vmem:[%s4933 + $0x3c] sm:$0xf]
      %v4966 = vunpack.c.l.b16 %v4934
      %v4967 = vunpack.c.l.b16 %v4935
      %v4968 = vunpack.c.l.b16 %v4936
      %v4969 = vunpack.c.l.b16 %v4937
      %v4970 = vunpack.c.l.b16 %v4938
      %v4971 = vunpack.c.l.b16 %v4939
      %v4972 = vunpack.c.l.b16 %v4940
      %v4973 = vunpack.c.l.b16 %v4941
      %v4974 = vunpack.c.l.b16 %v4942
      %v4975 = vunpack.c.l.b16 %v4943
      %v4976 = vunpack.c.l.b16 %v4944
      %v4977 = vunpack.c.l.b16 %v4945
      %v4978 = vunpack.c.l.b16 %v4946
      %v4979 = vunpack.c.l.b16 %v4947
      %v4980 = vunpack.c.l.b16 %v4948
      %v4981 = vunpack.c.l.b16 %v4949
      %v4982 = vpack.c.b16 %v4967, %v4966
      %v4983 = vpack.c.b16 %v4969, %v4968
      %v4984 = vpack.c.b16 %v4971, %v4970
      %v4985 = vpack.c.b16 %v4973, %v4972
      %v4986 = vpack.c.b16 %v4975, %v4974
      %v4987 = vpack.c.b16 %v4977, %v4976
      %v4988 = vpack.c.b16 %v4979, %v4978
      %v4989 = vpack.c.b16 %v4981, %v4980
      %4998 = vmatprep.subr.bf16.mxu0 0
      %4999 = vmatpush1.bf16.msra.mxu0 %v4982
      %5000 = vmatprep.subr.bf16.mxu0 0
      %5001 = vmatpush1.bf16.msra.mxu0 %v4983
      %5002 = vmatprep.subr.bf16.mxu0 0
      %5003 = vmatpush1.bf16.msra.mxu0 %v4984
      %5004 = vmatprep.subr.bf16.mxu0 0
      %5005 = vmatpush1.bf16.msra.mxu0 %v4985
      %5006 = vmatprep.subr.bf16.mxu0 0
      %5007 = vmatpush1.bf16.msra.mxu0 %v4986
      %5008 = vmatprep.subr.bf16.mxu0 0
      %5009 = vmatpush1.bf16.msra.mxu0 %v4987
      %5010 = vmatprep.subr.bf16.mxu0 0
      %5011 = vmatpush1.bf16.msra.mxu0 %v4988
      %5012 = vmatprep.subr.bf16.mxu0 0
      %5013 = vmatpush1.bf16.msra.mxu0 %v4989
      %5014 = vmatprep.subr.bf16.mxu0 0
      %5015 = vmatpush1.bf16.msra.mxu0 0
      %5016 = vmatprep.subr.bf16.mxu0 0
      %5017 = vmatpush1.bf16.msra.mxu0 0
      %5018 = vmatprep.subr.bf16.mxu0 0
      %5019 = vmatpush1.bf16.msra.mxu0 0
      %5020 = vmatprep.subr.bf16.mxu0 0
      %5021 = vmatpush1.bf16.msra.mxu0 0
      %5022 = vmatprep.subr.bf16.mxu0 0
      %5023 = vmatpush1.bf16.msra.mxu0 0
      %5024 = vmatprep.subr.bf16.mxu0 0
      %5025 = vmatpush1.bf16.msra.mxu0 0
      %5026 = vmatprep.subr.bf16.mxu0 0
      %5027 = vmatpush1.bf16.msra.mxu0 0
      %5028 = vmatprep.subr.bf16.mxu0 0
      %5029 = vmatpush1.bf16.msra.mxu0 0
      %5030 = vmatprep.mubr.bf16.mxu0 0
      %5031 = vmatmul.mubr.bf16.gmra.mrb[0].mxu0 %v864
      %v5032 = vpop.f32.mrb[0].mxu0
      %v5033 = vadd.f32 0.0, %v5032
      %v5034 = vpop.f32.mrb[0].mxu0
      %v5035 = vpop.f32.mrb[0].mxu0
      %v5036 = vadd.f32 0.0, %v5035
      %v5037 = vpop.f32.mrb[0].mxu0
      %5038 = vmatprep.mubr.bf16.mxu0 0
      %5039 = vmatmul.mubr.bf16.gmra.mrb[0].mxu0 %v865
      %v5040 = vpop.f32.mrb[0].mxu0
      %v5041 = vadd.f32 0.0, %v5040
      %v5042 = vpop.f32.mrb[0].mxu0
      %v5043 = vpop.f32.mrb[0].mxu0
      %v5044 = vadd.f32 0.0, %v5043
      %v5045 = vpop.f32.mrb[0].mxu0
      %5046 = vmatprep.mubr.bf16.mxu0 0
      %5047 = vmatmul.mubr.bf16.gmra.mrb[0].mxu0 %v866
      %v5048 = vpop.f32.mrb[0].mxu0
      %v5049 = vadd.f32 0.0, %v5048
      %v5050 = vpop.f32.mrb[0].mxu0
      %v5051 = vpop.f32.mrb[0].mxu0
      %v5052 = vadd.f32 0.0, %v5051
      %v5053 = vpop.f32.mrb[0].mxu0
      %5054 = vmatprep.mubr.bf16.mxu0 0
      %5055 = vmatmul.mubr.bf16.gmra.mrb[0].mxu0 %v867
      %v5056 = vpop.f32.mrb[0].mxu0
      %v5057 = vadd.f32 0.0, %v5056
      %v5058 = vpop.f32.mrb[0].mxu0
      %v5059 = vpop.f32.mrb[0].mxu0
      %v5060 = vadd.f32 0.0, %v5059
      %v5061 = vpop.f32.mrb[0].mxu0
      %5062 = vmatprep.mubr.bf16.mxu0 0
      %5063 = vmatmul.mubr.bf16.gmra.mrb[0].mxu0 %v868
      %v5064 = vpop.f32.mrb[0].mxu0
      %v5065 = vadd.f32 0.0, %v5064
      %v5066 = vpop.f32.mrb[0].mxu0
      %v5067 = vpop.f32.mrb[0].mxu0
      %v5068 = vadd.f32 0.0, %v5067
      %v5069 = vpop.f32.mrb[0].mxu0
      %5070 = vmatprep.mubr.bf16.mxu0 0
      %5071 = vmatmul.mubr.bf16.gmra.mrb[0].mxu0 %v869
      %v5072 = vpop.f32.mrb[0].mxu0
      %v5073 = vadd.f32 0.0, %v5072
      %v5074 = vpop.f32.mrb[0].mxu0
      %v5075 = vpop.f32.mrb[0].mxu0
      %v5076 = vadd.f32 0.0, %v5075
      %v5077 = vpop.f32.mrb[0].mxu0
      %5078 = vmatprep.mubr.bf16.mxu0 0
      %5079 = vmatmul.mubr.bf16.gmra.mrb[0].mxu0 %v870
      %v5080 = vpop.f32.mrb[0].mxu0
      %v5081 = vadd.f32 0.0, %v5080
      %v5082 = vpop.f32.mrb[0].mxu0
      %v5083 = vpop.f32.mrb[0].mxu0
      %v5084 = vadd.f32 0.0, %v5083
      %v5085 = vpop.f32.mrb[0].mxu0
      %5086 = vmatprep.mubr.bf16.mxu0 0
      %5087 = vmatmul.mubr.bf16.gmra.mrb[0].mxu0 %v871
      %v5088 = vpop.f32.mrb[0].mxu0
      %v5089 = vadd.f32 0.0, %v5088
      %v5090 = vpop.f32.mrb[0].mxu0
      %v5091 = vpop.f32.mrb[0].mxu0
      %v5092 = vadd.f32 0.0, %v5091
      %v5093 = vpop.f32.mrb[0].mxu0
      %5094 = vmatprep.mubr.bf16.mxu0 0
      %5095 = vmatmul.mubr.bf16.gmra.mrb[0].mxu0 %v872
      %v5096 = vpop.f32.mrb[0].mxu0
      %v5097 = vadd.f32 0.0, %v5096
      %v5098 = vpop.f32.mrb[0].mxu0
      %v5099 = vpop.f32.mrb[0].mxu0
      %v5100 = vadd.f32 0.0, %v5099
      %v5101 = vpop.f32.mrb[0].mxu0
      %5102 = vmatprep.mubr.bf16.mxu0 0
      %5103 = vmatmul.mubr.bf16.gmra.mrb[0].mxu0 %v873
      %v5104 = vpop.f32.mrb[0].mxu0
      %v5105 = vadd.f32 0.0, %v5104
      %v5106 = vpop.f32.mrb[0].mxu0
      %v5107 = vpop.f32.mrb[0].mxu0
      %v5108 = vadd.f32 0.0, %v5107
      %v5109 = vpop.f32.mrb[0].mxu0
      %5110 = vmatprep.mubr.bf16.mxu0 0
      %5111 = vmatmul.mubr.bf16.gmra.mrb[0].mxu0 %v874
      %v5112 = vpop.f32.mrb[0].mxu0
      %v5113 = vadd.f32 0.0, %v5112
      %v5114 = vpop.f32.mrb[0].mxu0
      %v5115 = vpop.f32.mrb[0].mxu0
      %v5116 = vadd.f32 0.0, %v5115
      %v5117 = vpop.f32.mrb[0].mxu0
      %5118 = vmatprep.mubr.bf16.mxu0 0
      %5119 = vmatmul.mubr.bf16.gmra.mrb[0].mxu0 %v875
      %v5120 = vpop.f32.mrb[0].mxu0
      %v5121 = vadd.f32 0.0, %v5120
      %v5122 = vpop.f32.mrb[0].mxu0
      %v5123 = vpop.f32.mrb[0].mxu0
      %v5124 = vadd.f32 0.0, %v5123
      %v5125 = vpop.f32.mrb[0].mxu0
      %5126 = vmatprep.mubr.bf16.mxu0 0
      %5127 = vmatmul.mubr.bf16.gmra.mrb[0].mxu0 %v876
      %v5128 = vpop.f32.mrb[0].mxu0
      %v5129 = vadd.f32 0.0, %v5128
      %v5130 = vpop.f32.mrb[0].mxu0
      %v5131 = vpop.f32.mrb[0].mxu0
      %v5132 = vadd.f32 0.0, %v5131
      %v5133 = vpop.f32.mrb[0].mxu0
      %5134 = vmatprep.mubr.bf16.mxu0 0
      %5135 = vmatmul.mubr.bf16.gmra.mrb[0].mxu0 %v877
      %v5136 = vpop.f32.mrb[0].mxu0
      %v5137 = vadd.f32 0.0, %v5136
      %v5138 = vpop.f32.mrb[0].mxu0
      %v5139 = vpop.f32.mrb[0].mxu0
      %v5140 = vadd.f32 0.0, %v5139
      %v5141 = vpop.f32.mrb[0].mxu0
      %5142 = vmatprep.mubr.bf16.mxu0 0
      %5143 = vmatmul.mubr.bf16.gmra.mrb[0].mxu0 %v878
      %v5144 = vpop.f32.mrb[0].mxu0
      %v5145 = vadd.f32 0.0, %v5144
      %v5146 = vpop.f32.mrb[0].mxu0
      %v5147 = vpop.f32.mrb[0].mxu0
      %v5148 = vadd.f32 0.0, %v5147
      %v5149 = vpop.f32.mrb[0].mxu0
      %5150 = vmatprep.mubr.bf16.mxu0 0
      %5151 = vmatmul.mubr.bf16.gmra.mrb[0].mxu0 %v879
      %v5152 = vpop.f32.mrb[0].mxu0
      %v5153 = vadd.f32 0.0, %v5152
      %v5154 = vpop.f32.mrb[0].mxu0
      %v5155 = vpop.f32.mrb[0].mxu0
      %v5156 = vadd.f32 0.0, %v5155
      %v5157 = vpop.f32.mrb[0].mxu0
      %5158 = vdwg.mxu0
      %v5159 = vsel %vm1713, 1, 0
      %v5160 = vsel %vm1714, 1, 0
      %v5161 = vsel %vm1715, 1, 0
      %v5162 = vsel %vm1716, 1, 0
      %v5163 = vsel %vm1717, 1, 0
      %v5164 = vsel %vm1718, 1, 0
      %v5165 = vsel %vm1719, 1, 0
      %v5166 = vsel %vm1720, 1, 0
      %v5167 = vsel %vm1721, 1, 0
      %v5168 = vsel %vm1722, 1, 0
      %v5169 = vsel %vm1723, 1, 0
      %v5170 = vsel %vm1724, 1, 0
      %v5171 = vsel %vm1725, 1, 0
      %v5172 = vsel %vm1726, 1, 0
      %v5173 = vsel %vm1727, 1, 0
      %v5174 = vsel %vm1728, 1, 0
      %v5175 = vsel %vm1729, 1, 0
      %v5176 = vsel %vm1730, 1, 0
      %v5177 = vsel %vm1731, 1, 0
      %v5178 = vsel %vm1732, 1, 0
      %v5179 = vsel %vm1733, 1, 0
      %v5180 = vsel %vm1734, 1, 0
      %v5181 = vsel %vm1735, 1, 0
      %v5182 = vsel %vm1736, 1, 0
      %v5183 = vsel %vm1737, 1, 0
      %v5184 = vsel %vm1738, 1, 0
      %v5185 = vsel %vm1739, 1, 0
      %v5186 = vsel %vm1740, 1, 0
      %v5187 = vsel %vm1741, 1, 0
      %v5188 = vsel %vm1742, 1, 0
      %v5189 = vsel %vm1743, 1, 0
      %v5190 = vsel %vm1744, 1, 0
      %vm5191 = vcmp.eq.s32.totalorder %v5159, 1
      %vm5192 = vcmp.eq.s32.totalorder %v5160, 1
      %vm5193 = vcmp.eq.s32.totalorder %v5161, 1
      %vm5194 = vcmp.eq.s32.totalorder %v5162, 1
      %vm5195 = vcmp.eq.s32.totalorder %v5163, 1
      %vm5196 = vcmp.eq.s32.totalorder %v5164, 1
      %vm5197 = vcmp.eq.s32.totalorder %v5165, 1
      %vm5198 = vcmp.eq.s32.totalorder %v5166, 1
      %vm5199 = vcmp.eq.s32.totalorder %v5167, 1
      %vm5200 = vcmp.eq.s32.totalorder %v5168, 1
      %vm5201 = vcmp.eq.s32.totalorder %v5169, 1
      %vm5202 = vcmp.eq.s32.totalorder %v5170, 1
      %vm5203 = vcmp.eq.s32.totalorder %v5171, 1
      %vm5204 = vcmp.eq.s32.totalorder %v5172, 1
      %vm5205 = vcmp.eq.s32.totalorder %v5173, 1
      %vm5206 = vcmp.eq.s32.totalorder %v5174, 1
      %vm5207 = vcmp.eq.s32.totalorder %v5175, 1
      %vm5208 = vcmp.eq.s32.totalorder %v5176, 1
      %vm5209 = vcmp.eq.s32.totalorder %v5177, 1
      %vm5210 = vcmp.eq.s32.totalorder %v5178, 1
      %vm5211 = vcmp.eq.s32.totalorder %v5179, 1
      %vm5212 = vcmp.eq.s32.totalorder %v5180, 1
      %vm5213 = vcmp.eq.s32.totalorder %v5181, 1
      %vm5214 = vcmp.eq.s32.totalorder %v5182, 1
      %vm5215 = vcmp.eq.s32.totalorder %v5183, 1
      %vm5216 = vcmp.eq.s32.totalorder %v5184, 1
      %vm5217 = vcmp.eq.s32.totalorder %v5185, 1
      %vm5218 = vcmp.eq.s32.totalorder %v5186, 1
      %vm5219 = vcmp.eq.s32.totalorder %v5187, 1
      %vm5220 = vcmp.eq.s32.totalorder %v5188, 1
      %vm5221 = vcmp.eq.s32.totalorder %v5189, 1
      %vm5222 = vcmp.eq.s32.totalorder %v5190, 1
      %v5223 = vsel %vm5191, %v5041, 0.0
      %v5224 = vsel %vm5192, %v5044, 0.0
      %v5225 = vsel %vm5193, %v5049, 0.0
      %v5226 = vsel %vm5194, %v5052, 0.0
      %v5227 = vsel %vm5195, %v5057, 0.0
      %v5228 = vsel %vm5196, %v5060, 0.0
      %v5229 = vsel %vm5197, %v5065, 0.0
      %v5230 = vsel %vm5198, %v5068, 0.0
      %v5231 = vsel %vm5199, %v5073, 0.0
      %v5232 = vsel %vm5200, %v5076, 0.0
      %v5233 = vsel %vm5201, %v5081, 0.0
      %v5234 = vsel %vm5202, %v5084, 0.0
      %v5235 = vsel %vm5203, %v5089, 0.0
      %v5236 = vsel %vm5204, %v5092, 0.0
      %v5237 = vsel %vm5205, %v5097, 0.0
      %v5238 = vsel %vm5206, %v5100, 0.0
      %v5239 = vsel %vm5207, %v5105, 0.0
      %v5240 = vsel %vm5208, %v5108, 0.0
      %v5241 = vsel %vm5209, %v5113, 0.0
      %v5242 = vsel %vm5210, %v5116, 0.0
      %v5243 = vsel %vm5211, %v5121, 0.0
      %v5244 = vsel %vm5212, %v5124, 0.0
      %v5245 = vsel %vm5213, %v5129, 0.0
      %v5246 = vsel %vm5214, %v5132, 0.0
      %v5247 = vsel %vm5215, %v5137, 0.0
      %v5248 = vsel %vm5216, %v5140, 0.0
      %v5249 = vsel %vm5217, %v5145, 0.0
      %v5250 = vsel %vm5218, %v5148, 0.0
      %v5251 = vsel %vm5219, %v5153, 0.0
      %v5252 = vsel %vm5220, %v5156, 0.0
      %v5253 = vsel %vm5221, %v5033, 0.0
      %v5254 = vsel %vm5222, %v5036, 0.0
      %v5255 = vadd.f32 %v4901, %v5223
      %v5256 = vadd.f32 %v4902, %v5224
      %v5257 = vadd.f32 %v4903, %v5225
      %v5258 = vadd.f32 %v4904, %v5226
      %v5259 = vadd.f32 %v4905, %v5227
      %v5260 = vadd.f32 %v4906, %v5228
      %v5261 = vadd.f32 %v4907, %v5229
      %v5262 = vadd.f32 %v4908, %v5230
      %v5263 = vadd.f32 %v4909, %v5231
      %v5264 = vadd.f32 %v4910, %v5232
      %v5265 = vadd.f32 %v4911, %v5233
      %v5266 = vadd.f32 %v4912, %v5234
      %v5267 = vadd.f32 %v4913, %v5235
      %v5268 = vadd.f32 %v4914, %v5236
      %v5269 = vadd.f32 %v4915, %v5237
      %v5270 = vadd.f32 %v4916, %v5238
      %v5271 = vadd.f32 %v4917, %v5239
      %v5272 = vadd.f32 %v4918, %v5240
      %v5273 = vadd.f32 %v4919, %v5241
      %v5274 = vadd.f32 %v4920, %v5242
      %v5275 = vadd.f32 %v4921, %v5243
      %v5276 = vadd.f32 %v4922, %v5244
      %v5277 = vadd.f32 %v4923, %v5245
      %v5278 = vadd.f32 %v4924, %v5246
      %v5279 = vadd.f32 %v4925, %v5247
      %v5280 = vadd.f32 %v4926, %v5248
      %v5281 = vadd.f32 %v4927, %v5249
      %v5282 = vadd.f32 %v4928, %v5250
      %v5283 = vadd.f32 %v4929, %v5251
      %v5284 = vadd.f32 %v4930, %v5252
      %v5285 = vadd.f32 %v4931, %v5253
      %v5286 = vadd.f32 %v4932, %v5254
      %s5287 = scalar_lea.vmem %s5, 512
      %v5288 = vld [vmem:[%s5287] sm:$0xf]
      %v5289 = vld [vmem:[%s5287 + $0x4] sm:$0xf]
      %v5290 = vld [vmem:[%s5287 + $0x8] sm:$0xf]
      %v5291 = vld [vmem:[%s5287 + $0xc] sm:$0xf]
      %v5292 = vld [vmem:[%s5287 + $0x10] sm:$0xf]
      %v5293 = vld [vmem:[%s5287 + $0x14] sm:$0xf]
      %v5294 = vld [vmem:[%s5287 + $0x18] sm:$0xf]
      %v5295 = vld [vmem:[%s5287 + $0x1c] sm:$0xf]
      %v5296 = vld [vmem:[%s5287 + $0x20] sm:$0xf]
      %v5297 = vld [vmem:[%s5287 + $0x24] sm:$0xf]
      %v5298 = vld [vmem:[%s5287 + $0x28] sm:$0xf]
      %v5299 = vld [vmem:[%s5287 + $0x2c] sm:$0xf]
      %v5300 = vld [vmem:[%s5287 + $0x30] sm:$0xf]
      %v5301 = vld [vmem:[%s5287 + $0x34] sm:$0xf]
      %v5302 = vld [vmem:[%s5287 + $0x38] sm:$0xf]
      %v5303 = vld [vmem:[%s5287 + $0x3c] sm:$0xf]
      %v5320 = vunpack.c.l.b16 %v5288
      %v5321 = vunpack.c.l.b16 %v5289
      %v5322 = vunpack.c.l.b16 %v5290
      %v5323 = vunpack.c.l.b16 %v5291
      %v5324 = vunpack.c.l.b16 %v5292
      %v5325 = vunpack.c.l.b16 %v5293
      %v5326 = vunpack.c.l.b16 %v5294
      %v5327 = vunpack.c.l.b16 %v5295
      %v5328 = vunpack.c.l.b16 %v5296
      %v5329 = vunpack.c.l.b16 %v5297
      %v5330 = vunpack.c.l.b16 %v5298
      %v5331 = vunpack.c.l.b16 %v5299
      %v5332 = vunpack.c.l.b16 %v5300
      %v5333 = vunpack.c.l.b16 %v5301
      %v5334 = vunpack.c.l.b16 %v5302
      %v5335 = vunpack.c.l.b16 %v5303
      %v5336 = vpack.c.b16 %v5321, %v5320
      %v5337 = vpack.c.b16 %v5323, %v5322
      %v5338 = vpack.c.b16 %v5325, %v5324
      %v5339 = vpack.c.b16 %v5327, %v5326
      %v5340 = vpack.c.b16 %v5329, %v5328
      %v5341 = vpack.c.b16 %v5331, %v5330
      %v5342 = vpack.c.b16 %v5333, %v5332
      %v5343 = vpack.c.b16 %v5335, %v5334
      %5352 = vmatprep.subr.bf16.mxu0 0
      %5353 = vmatpush1.bf16.msra.mxu0 %v5336
      %5354 = vmatprep.subr.bf16.mxu0 0
      %5355 = vmatpush1.bf16.msra.mxu0 %v5337
      %5356 = vmatprep.subr.bf16.mxu0 0
      %5357 = vmatpush1.bf16.msra.mxu0 %v5338
      %5358 = vmatprep.subr.bf16.mxu0 0
      %5359 = vmatpush1.bf16.msra.mxu0 %v5339
      %5360 = vmatprep.subr.bf16.mxu0 0
      %5361 = vmatpush1.bf16.msra.mxu0 %v5340
      %5362 = vmatprep.subr.bf16.mxu0 0
      %5363 = vmatpush1.bf16.msra.mxu0 %v5341
      %5364 = vmatprep.subr.bf16.mxu0 0
      %5365 = vmatpush1.bf16.msra.mxu0 %v5342
      %5366 = vmatprep.subr.bf16.mxu0 0
      %5367 = vmatpush1.bf16.msra.mxu0 %v5343
      %5368 = vmatprep.subr.bf16.mxu0 0
      %5369 = vmatpush1.bf16.msra.mxu0 0
      %5370 = vmatprep.subr.bf16.mxu0 0
      %5371 = vmatpush1.bf16.msra.mxu0 0
      %5372 = vmatprep.subr.bf16.mxu0 0
      %5373 = vmatpush1.bf16.msra.mxu0 0
      %5374 = vmatprep.subr.bf16.mxu0 0
      %5375 = vmatpush1.bf16.msra.mxu0 0
      %5376 = vmatprep.subr.bf16.mxu0 0
      %5377 = vmatpush1.bf16.msra.mxu0 0
      %5378 = vmatprep.subr.bf16.mxu0 0
      %5379 = vmatpush1.bf16.msra.mxu0 0
      %5380 = vmatprep.subr.bf16.mxu0 0
      %5381 = vmatpush1.bf16.msra.mxu0 0
      %5382 = vmatprep.subr.bf16.mxu0 0
      %5383 = vmatpush1.bf16.msra.mxu0 0
      %5384 = vmatprep.mubr.bf16.mxu0 0
      %5385 = vmatmul.mubr.bf16.gmra.mrb[0].mxu0 %v864
      %v5386 = vpop.f32.mrb[0].mxu0
      %v5387 = vadd.f32 0.0, %v5386
      %v5388 = vpop.f32.mrb[0].mxu0
      %v5389 = vpop.f32.mrb[0].mxu0
      %v5390 = vadd.f32 0.0, %v5389
      %v5391 = vpop.f32.mrb[0].mxu0
      %5392 = vmatprep.mubr.bf16.mxu0 0
      %5393 = vmatmul.mubr.bf16.gmra.mrb[0].mxu0 %v865
      %v5394 = vpop.f32.mrb[0].mxu0
      %v5395 = vadd.f32 0.0, %v5394
      %v5396 = vpop.f32.mrb[0].mxu0
      %v5397 = vpop.f32.mrb[0].mxu0
      %v5398 = vadd.f32 0.0, %v5397
      %v5399 = vpop.f32.mrb[0].mxu0
      %5400 = vmatprep.mubr.bf16.mxu0 0
      %5401 = vmatmul.mubr.bf16.gmra.mrb[0].mxu0 %v866
      %v5402 = vpop.f32.mrb[0].mxu0
      %v5403 = vadd.f32 0.0, %v5402
      %v5404 = vpop.f32.mrb[0].mxu0
      %v5405 = vpop.f32.mrb[0].mxu0
      %v5406 = vadd.f32 0.0, %v5405
      %v5407 = vpop.f32.mrb[0].mxu0
      %5408 = vmatprep.mubr.bf16.mxu0 0
      %5409 = vmatmul.mubr.bf16.gmra.mrb[0].mxu0 %v867
      %v5410 = vpop.f32.mrb[0].mxu0
      %v5411 = vadd.f32 0.0, %v5410
      %v5412 = vpop.f32.mrb[0].mxu0
      %v5413 = vpop.f32.mrb[0].mxu0
      %v5414 = vadd.f32 0.0, %v5413
      %v5415 = vpop.f32.mrb[0].mxu0
      %5416 = vmatprep.mubr.bf16.mxu0 0
      %5417 = vmatmul.mubr.bf16.gmra.mrb[0].mxu0 %v868
      %v5418 = vpop.f32.mrb[0].mxu0
      %v5419 = vadd.f32 0.0, %v5418
      %v5420 = vpop.f32.mrb[0].mxu0
      %v5421 = vpop.f32.mrb[0].mxu0
      %v5422 = vadd.f32 0.0, %v5421
      %v5423 = vpop.f32.mrb[0].mxu0
      %5424 = vmatprep.mubr.bf16.mxu0 0
      %5425 = vmatmul.mubr.bf16.gmra.mrb[0].mxu0 %v869
      %v5426 = vpop.f32.mrb[0].mxu0
      %v5427 = vadd.f32 0.0, %v5426
      %v5428 = vpop.f32.mrb[0].mxu0
      %v5429 = vpop.f32.mrb[0].mxu0
      %v5430 = vadd.f32 0.0, %v5429
      %v5431 = vpop.f32.mrb[0].mxu0
      %5432 = vmatprep.mubr.bf16.mxu0 0
      %5433 = vmatmul.mubr.bf16.gmra.mrb[0].mxu0 %v870
      %v5434 = vpop.f32.mrb[0].mxu0
      %v5435 = vadd.f32 0.0, %v5434
      %v5436 = vpop.f32.mrb[0].mxu0
      %v5437 = vpop.f32.mrb[0].mxu0
      %v5438 = vadd.f32 0.0, %v5437
      %v5439 = vpop.f32.mrb[0].mxu0
      %5440 = vmatprep.mubr.bf16.mxu0 0
      %5441 = vmatmul.mubr.bf16.gmra.mrb[0].mxu0 %v871
      %v5442 = vpop.f32.mrb[0].mxu0
      %v5443 = vadd.f32 0.0, %v5442
      %v5444 = vpop.f32.mrb[0].mxu0
      %v5445 = vpop.f32.mrb[0].mxu0
      %v5446 = vadd.f32 0.0, %v5445
      %v5447 = vpop.f32.mrb[0].mxu0
      %5448 = vmatprep.mubr.bf16.mxu0 0
      %5449 = vmatmul.mubr.bf16.gmra.mrb[0].mxu0 %v872
      %v5450 = vpop.f32.mrb[0].mxu0
      %v5451 = vadd.f32 0.0, %v5450
      %v5452 = vpop.f32.mrb[0].mxu0
      %v5453 = vpop.f32.mrb[0].mxu0
      %v5454 = vadd.f32 0.0, %v5453
      %v5455 = vpop.f32.mrb[0].mxu0
      %5456 = vmatprep.mubr.bf16.mxu0 0
      %5457 = vmatmul.mubr.bf16.gmra.mrb[0].mxu0 %v873
      %v5458 = vpop.f32.mrb[0].mxu0
      %v5459 = vadd.f32 0.0, %v5458
      %v5460 = vpop.f32.mrb[0].mxu0
      %v5461 = vpop.f32.mrb[0].mxu0
      %v5462 = vadd.f32 0.0, %v5461
      %v5463 = vpop.f32.mrb[0].mxu0
      %5464 = vmatprep.mubr.bf16.mxu0 0
      %5465 = vmatmul.mubr.bf16.gmra.mrb[0].mxu0 %v874
      %v5466 = vpop.f32.mrb[0].mxu0
      %v5467 = vadd.f32 0.0, %v5466
      %v5468 = vpop.f32.mrb[0].mxu0
      %v5469 = vpop.f32.mrb[0].mxu0
      %v5470 = vadd.f32 0.0, %v5469
      %v5471 = vpop.f32.mrb[0].mxu0
      %5472 = vmatprep.mubr.bf16.mxu0 0
      %5473 = vmatmul.mubr.bf16.gmra.mrb[0].mxu0 %v875
      %v5474 = vpop.f32.mrb[0].mxu0
      %v5475 = vadd.f32 0.0, %v5474
      %v5476 = vpop.f32.mrb[0].mxu0
      %v5477 = vpop.f32.mrb[0].mxu0
      %v5478 = vadd.f32 0.0, %v5477
      %v5479 = vpop.f32.mrb[0].mxu0
      %5480 = vmatprep.mubr.bf16.mxu0 0
      %5481 = vmatmul.mubr.bf16.gmra.mrb[0].mxu0 %v876
      %v5482 = vpop.f32.mrb[0].mxu0
      %v5483 = vadd.f32 0.0, %v5482
      %v5484 = vpop.f32.mrb[0].mxu0
      %v5485 = vpop.f32.mrb[0].mxu0
      %v5486 = vadd.f32 0.0, %v5485
      %v5487 = vpop.f32.mrb[0].mxu0
      %5488 = vmatprep.mubr.bf16.mxu0 0
      %5489 = vmatmul.mubr.bf16.gmra.mrb[0].mxu0 %v877
      %v5490 = vpop.f32.mrb[0].mxu0
      %v5491 = vadd.f32 0.0, %v5490
      %v5492 = vpop.f32.mrb[0].mxu0
      %v5493 = vpop.f32.mrb[0].mxu0
      %v5494 = vadd.f32 0.0, %v5493
      %v5495 = vpop.f32.mrb[0].mxu0
      %5496 = vmatprep.mubr.bf16.mxu0 0
      %5497 = vmatmul.mubr.bf16.gmra.mrb[0].mxu0 %v878
      %v5498 = vpop.f32.mrb[0].mxu0
      %v5499 = vadd.f32 0.0, %v5498
      %v5500 = vpop.f32.mrb[0].mxu0
      %v5501 = vpop.f32.mrb[0].mxu0
      %v5502 = vadd.f32 0.0, %v5501
      %v5503 = vpop.f32.mrb[0].mxu0
      %5504 = vmatprep.mubr.bf16.mxu0 0
      %5505 = vmatmul.mubr.bf16.gmra.mrb[0].mxu0 %v879
      %v5506 = vpop.f32.mrb[0].mxu0
      %v5507 = vadd.f32 0.0, %v5506
      %v5508 = vpop.f32.mrb[0].mxu0
      %v5509 = vpop.f32.mrb[0].mxu0
      %v5510 = vadd.f32 0.0, %v5509
      %v5511 = vpop.f32.mrb[0].mxu0
      %5512 = vdwg.mxu0
      %v5543 = vrot.slane %v5395, 1
      %v5544 = vrot.slane %v5398, 1
      %v5545 = vsel %vm2906, %v5543, %v5544
      %v5546 = vrot.slane %v5403, 1
      %v5547 = vsel %vm2906, %v5544, %v5546
      %v5548 = vrot.slane %v5406, 1
      %v5549 = vsel %vm2906, %v5546, %v5548
      %v5550 = vrot.slane %v5411, 1
      %v5551 = vsel %vm2906, %v5548, %v5550
      %v5552 = vrot.slane %v5414, 1
      %v5553 = vsel %vm2906, %v5550, %v5552
      %v5554 = vrot.slane %v5419, 1
      %v5555 = vsel %vm2906, %v5552, %v5554
      %v5556 = vrot.slane %v5422, 1
      %v5557 = vsel %vm2906, %v5554, %v5556
      %v5558 = vrot.slane %v5427, 1
      %v5559 = vsel %vm2906, %v5556, %v5558
      %v5560 = vrot.slane %v5430, 1
      %v5561 = vsel %vm2906, %v5558, %v5560
      %v5562 = vrot.slane %v5435, 1
      %v5563 = vsel %vm2906, %v5560, %v5562
      %v5564 = vrot.slane %v5438, 1
      %v5565 = vsel %vm2906, %v5562, %v5564
      %v5566 = vrot.slane %v5443, 1
      %v5567 = vsel %vm2906, %v5564, %v5566
      %v5568 = vrot.slane %v5446, 1
      %v5569 = vsel %vm2906, %v5566, %v5568
      %v5570 = vrot.slane %v5451, 1
      %v5571 = vsel %vm2906, %v5568, %v5570
      %v5572 = vrot.slane %v5454, 1
      %v5573 = vsel %vm2906, %v5570, %v5572
      %v5574 = vrot.slane %v5459, 1
      %v5575 = vsel %vm2906, %v5572, %v5574
      %v5576 = vrot.slane %v5462, 1
      %v5577 = vsel %vm2906, %v5574, %v5576
      %v5578 = vrot.slane %v5467, 1
      %v5579 = vsel %vm2906, %v5576, %v5578
      %v5580 = vrot.slane %v5470, 1
      %v5581 = vsel %vm2906, %v5578, %v5580
      %v5582 = vrot.slane %v5475, 1
      %v5583 = vsel %vm2906, %v5580, %v5582
      %v5584 = vrot.slane %v5478, 1
      %v5585 = vsel %vm2906, %v5582, %v5584
      %v5586 = vrot.slane %v5483, 1
      %v5587 = vsel %vm2906, %v5584, %v5586
      %v5588 = vrot.slane %v5486, 1
      %v5589 = vsel %vm2906, %v5586, %v5588
      %v5590 = vrot.slane %v5491, 1
      %v5591 = vsel %vm2906, %v5588, %v5590
      %v5592 = vrot.slane %v5494, 1
      %v5593 = vsel %vm2906, %v5590, %v5592
      %v5594 = vrot.slane %v5499, 1
      %v5595 = vsel %vm2906, %v5592, %v5594
      %v5596 = vrot.slane %v5502, 1
      %v5597 = vsel %vm2906, %v5594, %v5596
      %v5598 = vrot.slane %v5507, 1
      %v5599 = vsel %vm2906, %v5596, %v5598
      %v5600 = vrot.slane %v5510, 1
      %v5601 = vsel %vm2906, %v5598, %v5600
      %v5634 = vrot.slane %v5387, 1
      %v5635 = vrot.slane %v5390, 1
      %v5636 = vsel %vm2906, %v5634, %v5635
      %v5637 = vsel %vm2906, %v5635, %v5543
      %v5641 = vsel %vm2906, %v5600, %v5634
      %vm5642 = vmand %vm1713, %vm1777
      %vm5643 = vmand %vm1714, %vm1778
      %vm5644 = vmand %vm1715, %vm1779
      %vm5645 = vmand %vm1716, %vm1780
      %vm5646 = vmand %vm1717, %vm1781
      %vm5647 = vmand %vm1718, %vm1782
      %vm5648 = vmand %vm1719, %vm1783
      %vm5649 = vmand %vm1720, %vm1784
      %vm5650 = vmand %vm1721, %vm1785
      %vm5651 = vmand %vm1722, %vm1786
      %vm5652 = vmand %vm1723, %vm1787
      %vm5653 = vmand %vm1724, %vm1788
      %vm5654 = vmand %vm1725, %vm1789
      %vm5655 = vmand %vm1726, %vm1790
      %vm5656 = vmand %vm1727, %vm1791
      %vm5657 = vmand %vm1728, %vm1792
      %vm5658 = vmand %vm1729, %vm1793
      %vm5659 = vmand %vm1730, %vm1794
      %vm5660 = vmand %vm1731, %vm1795
      %vm5661 = vmand %vm1732, %vm1796
      %vm5662 = vmand %vm1733, %vm1797
      %vm5663 = vmand %vm1734, %vm1798
      %vm5664 = vmand %vm1735, %vm1799
      %vm5665 = vmand %vm1736, %vm1800
      %vm5666 = vmand %vm1737, %vm1801
      %vm5667 = vmand %vm1738, %vm1802
      %vm5668 = vmand %vm1739, %vm1803
      %vm5669 = vmand %vm1740, %vm1804
      %vm5670 = vmand %vm1741, %vm1805
      %vm5671 = vmand %vm1742, %vm1806
      %vm5672 = vmand %vm1743, %vm1807
      %vm5673 = vmand %vm1744, %vm1808
      %v5674 = vsel %vm5642, 1, 0
      %v5675 = vsel %vm5643, 1, 0
      %v5676 = vsel %vm5644, 1, 0
      %v5677 = vsel %vm5645, 1, 0
      %v5678 = vsel %vm5646, 1, 0
      %v5679 = vsel %vm5647, 1, 0
      %v5680 = vsel %vm5648, 1, 0
      %v5681 = vsel %vm5649, 1, 0
      %v5682 = vsel %vm5650, 1, 0
      %v5683 = vsel %vm5651, 1, 0
      %v5684 = vsel %vm5652, 1, 0
      %v5685 = vsel %vm5653, 1, 0
      %v5686 = vsel %vm5654, 1, 0
      %v5687 = vsel %vm5655, 1, 0
      %v5688 = vsel %vm5656, 1, 0
      %v5689 = vsel %vm5657, 1, 0
      %v5690 = vsel %vm5658, 1, 0
      %v5691 = vsel %vm5659, 1, 0
      %v5692 = vsel %vm5660, 1, 0
      %v5693 = vsel %vm5661, 1, 0
      %v5694 = vsel %vm5662, 1, 0
      %v5695 = vsel %vm5663, 1, 0
      %v5696 = vsel %vm5664, 1, 0
      %v5697 = vsel %vm5665, 1, 0
      %v5698 = vsel %vm5666, 1, 0
      %v5699 = vsel %vm5667, 1, 0
      %v5700 = vsel %vm5668, 1, 0
      %v5701 = vsel %vm5669, 1, 0
      %v5702 = vsel %vm5670, 1, 0
      %v5703 = vsel %vm5671, 1, 0
      %v5704 = vsel %vm5672, 1, 0
      %v5705 = vsel %vm5673, 1, 0
      %vm5706 = vcmp.eq.s32.totalorder %v5674, 1
      %vm5707 = vcmp.eq.s32.totalorder %v5675, 1
      %vm5708 = vcmp.eq.s32.totalorder %v5676, 1
      %vm5709 = vcmp.eq.s32.totalorder %v5677, 1
      %vm5710 = vcmp.eq.s32.totalorder %v5678, 1
      %vm5711 = vcmp.eq.s32.totalorder %v5679, 1
      %vm5712 = vcmp.eq.s32.totalorder %v5680, 1
      %vm5713 = vcmp.eq.s32.totalorder %v5681, 1
      %vm5714 = vcmp.eq.s32.totalorder %v5682, 1
      %vm5715 = vcmp.eq.s32.totalorder %v5683, 1
      %vm5716 = vcmp.eq.s32.totalorder %v5684, 1
      %vm5717 = vcmp.eq.s32.totalorder %v5685, 1
      %vm5718 = vcmp.eq.s32.totalorder %v5686, 1
      %vm5719 = vcmp.eq.s32.totalorder %v5687, 1
      %vm5720 = vcmp.eq.s32.totalorder %v5688, 1
      %vm5721 = vcmp.eq.s32.totalorder %v5689, 1
      %vm5722 = vcmp.eq.s32.totalorder %v5690, 1
      %vm5723 = vcmp.eq.s32.totalorder %v5691, 1
      %vm5724 = vcmp.eq.s32.totalorder %v5692, 1
      %vm5725 = vcmp.eq.s32.totalorder %v5693, 1
      %vm5726 = vcmp.eq.s32.totalorder %v5694, 1
      %vm5727 = vcmp.eq.s32.totalorder %v5695, 1
      %vm5728 = vcmp.eq.s32.totalorder %v5696, 1
      %vm5729 = vcmp.eq.s32.totalorder %v5697, 1
      %vm5730 = vcmp.eq.s32.totalorder %v5698, 1
      %vm5731 = vcmp.eq.s32.totalorder %v5699, 1
      %vm5732 = vcmp.eq.s32.totalorder %v5700, 1
      %vm5733 = vcmp.eq.s32.totalorder %v5701, 1
      %vm5734 = vcmp.eq.s32.totalorder %v5702, 1
      %vm5735 = vcmp.eq.s32.totalorder %v5703, 1
      %vm5736 = vcmp.eq.s32.totalorder %v5704, 1
      %vm5737 = vcmp.eq.s32.totalorder %v5705, 1
      %v5738 = vsel %vm5706, %v5545, 0.0
      %v5739 = vsel %vm5707, %v5547, 0.0
      %v5740 = vsel %vm5708, %v5549, 0.0
      %v5741 = vsel %vm5709, %v5551, 0.0
      %v5742 = vsel %vm5710, %v5553, 0.0
      %v5743 = vsel %vm5711, %v5555, 0.0
      %v5744 = vsel %vm5712, %v5557, 0.0
      %v5745 = vsel %vm5713, %v5559, 0.0
      %v5746 = vsel %vm5714, %v5561, 0.0
      %v5747 = vsel %vm5715, %v5563, 0.0
      %v5748 = vsel %vm5716, %v5565, 0.0
      %v5749 = vsel %vm5717, %v5567, 0.0
      %v5750 = vsel %vm5718, %v5569, 0.0
      %v5751 = vsel %vm5719, %v5571, 0.0
      %v5752 = vsel %vm5720, %v5573, 0.0
      %v5753 = vsel %vm5721, %v5575, 0.0
      %v5754 = vsel %vm5722, %v5577, 0.0
      %v5755 = vsel %vm5723, %v5579, 0.0
      %v5756 = vsel %vm5724, %v5581, 0.0
      %v5757 = vsel %vm5725, %v5583, 0.0
      %v5758 = vsel %vm5726, %v5585, 0.0
      %v5759 = vsel %vm5727, %v5587, 0.0
      %v5760 = vsel %vm5728, %v5589, 0.0
      %v5761 = vsel %vm5729, %v5591, 0.0
      %v5762 = vsel %vm5730, %v5593, 0.0
      %v5763 = vsel %vm5731, %v5595, 0.0
      %v5764 = vsel %vm5732, %v5597, 0.0
      %v5765 = vsel %vm5733, %v5599, 0.0
      %v5766 = vsel %vm5734, %v5601, 0.0
      %v5767 = vsel %vm5735, %v5641, 0.0
      %v5768 = vsel %vm5736, %v5636, 0.0
      %v5769 = vsel %vm5737, %v5637, 0.0
      %v5770 = vadd.f32 %v5255, %v5738
      %v5771 = vadd.f32 %v5256, %v5739
      %v5772 = vadd.f32 %v5257, %v5740
      %v5773 = vadd.f32 %v5258, %v5741
      %v5774 = vadd.f32 %v5259, %v5742
      %v5775 = vadd.f32 %v5260, %v5743
      %v5776 = vadd.f32 %v5261, %v5744
      %v5777 = vadd.f32 %v5262, %v5745
      %v5778 = vadd.f32 %v5263, %v5746
      %v5779 = vadd.f32 %v5264, %v5747
      %v5780 = vadd.f32 %v5265, %v5748
      %v5781 = vadd.f32 %v5266, %v5749
      %v5782 = vadd.f32 %v5267, %v5750
      %v5783 = vadd.f32 %v5268, %v5751
      %v5784 = vadd.f32 %v5269, %v5752
      %v5785 = vadd.f32 %v5270, %v5753
      %v5786 = vadd.f32 %v5271, %v5754
      %v5787 = vadd.f32 %v5272, %v5755
      %v5788 = vadd.f32 %v5273, %v5756
      %v5789 = vadd.f32 %v5274, %v5757
      %v5790 = vadd.f32 %v5275, %v5758
      %v5791 = vadd.f32 %v5276, %v5759
      %v5792 = vadd.f32 %v5277, %v5760
      %v5793 = vadd.f32 %v5278, %v5761
      %v5794 = vadd.f32 %v5279, %v5762
      %v5795 = vadd.f32 %v5280, %v5763
      %v5796 = vadd.f32 %v5281, %v5764
      %v5797 = vadd.f32 %v5282, %v5765
      %v5798 = vadd.f32 %v5283, %v5766
      %v5799 = vadd.f32 %v5284, %v5767
      %v5800 = vadd.f32 %v5285, %v5768
      %v5801 = vadd.f32 %v5286, %v5769
      %v5802 = vld [vmem:[%s6] sm:$0x1]
      %v5804 = vlaneseq
      %v5805 = vshrl.u32 %v5804, 7
      %v5806 = vsub.s32 0, %v5805
      %v5807 = vrot.slane %v5802, %v5806
      %v5809 = vmul.f32 %v5770, %v5807
      %v5810 = vmul.f32 %v5771, %v5807
      %v5811 = vmul.f32 %v5772, %v5807
      %v5812 = vmul.f32 %v5773, %v5807
      %v5813 = vmul.f32 %v5774, %v5807
      %v5814 = vmul.f32 %v5775, %v5807
      %v5815 = vmul.f32 %v5776, %v5807
      %v5816 = vmul.f32 %v5777, %v5807
      %v5817 = vmul.f32 %v5778, %v5807
      %v5818 = vmul.f32 %v5779, %v5807
      %v5819 = vmul.f32 %v5780, %v5807
      %v5820 = vmul.f32 %v5781, %v5807
      %v5821 = vmul.f32 %v5782, %v5807
      %v5822 = vmul.f32 %v5783, %v5807
      %v5823 = vmul.f32 %v5784, %v5807
      %v5824 = vmul.f32 %v5785, %v5807
      %v5825 = vmul.f32 %v5786, %v5807
      %v5826 = vmul.f32 %v5787, %v5807
      %v5827 = vmul.f32 %v5788, %v5807
      %v5828 = vmul.f32 %v5789, %v5807
      %v5829 = vmul.f32 %v5790, %v5807
      %v5830 = vmul.f32 %v5791, %v5807
      %v5831 = vmul.f32 %v5792, %v5807
      %v5832 = vmul.f32 %v5793, %v5807
      %v5833 = vmul.f32 %v5794, %v5807
      %v5834 = vmul.f32 %v5795, %v5807
      %v5835 = vmul.f32 %v5796, %v5807
      %v5836 = vmul.f32 %v5797, %v5807
      %v5837 = vmul.f32 %v5798, %v5807
      %v5838 = vmul.f32 %v5799, %v5807
      %v5839 = vmul.f32 %v5800, %v5807
      %v5840 = vmul.f32 %v5801, %v5807
      %v5841 = vld [vmem:[%s7] sm:$0x1]
      %v5843 = vlaneseq
      %v5844 = vshrl.u32 %v5843, 7
      %v5845 = vsub.s32 0, %v5844
      %v5846 = vrot.slane %v5841, %v5845
      %v5848 = vadd.f32 %v5809, %v5846
      %v5849 = vadd.f32 %v5810, %v5846
      %v5850 = vadd.f32 %v5811, %v5846
      %v5851 = vadd.f32 %v5812, %v5846
      %v5852 = vadd.f32 %v5813, %v5846
      %v5853 = vadd.f32 %v5814, %v5846
      %v5854 = vadd.f32 %v5815, %v5846
      %v5855 = vadd.f32 %v5816, %v5846
      %v5856 = vadd.f32 %v5817, %v5846
      %v5857 = vadd.f32 %v5818, %v5846
      %v5858 = vadd.f32 %v5819, %v5846
      %v5859 = vadd.f32 %v5820, %v5846
      %v5860 = vadd.f32 %v5821, %v5846
      %v5861 = vadd.f32 %v5822, %v5846
      %v5862 = vadd.f32 %v5823, %v5846
      %v5863 = vadd.f32 %v5824, %v5846
      %v5864 = vadd.f32 %v5825, %v5846
      %v5865 = vadd.f32 %v5826, %v5846
      %v5866 = vadd.f32 %v5827, %v5846
      %v5867 = vadd.f32 %v5828, %v5846
      %v5868 = vadd.f32 %v5829, %v5846
      %v5869 = vadd.f32 %v5830, %v5846
      %v5870 = vadd.f32 %v5831, %v5846
      %v5871 = vadd.f32 %v5832, %v5846
      %v5872 = vadd.f32 %v5833, %v5846
      %v5873 = vadd.f32 %v5834, %v5846
      %v5874 = vadd.f32 %v5835, %v5846
      %v5875 = vadd.f32 %v5836, %v5846
      %v5876 = vadd.f32 %v5837, %v5846
      %v5877 = vadd.f32 %v5838, %v5846
      %v5878 = vadd.f32 %v5839, %v5846
      %v5879 = vadd.f32 %v5840, %v5846
      %v5880 = vld [vmem:[%s401] sm:$0xf]
      %v5881 = vld [vmem:[%s401 + $0x4] sm:$0xf]
      %v5882 = vld [vmem:[%s401 + $0x8] sm:$0xf]
      %v5883 = vld [vmem:[%s401 + $0xc] sm:$0xf]
      %v5884 = vld [vmem:[%s401 + $0x10] sm:$0xf]
      %v5885 = vld [vmem:[%s401 + $0x14] sm:$0xf]
      %v5886 = vld [vmem:[%s401 + $0x18] sm:$0xf]
      %v5887 = vld [vmem:[%s401 + $0x1c] sm:$0xf]
      %v5888 = vld [vmem:[%s401 + $0x20] sm:$0xf]
      %v5889 = vld [vmem:[%s401 + $0x24] sm:$0xf]
      %v5890 = vld [vmem:[%s401 + $0x28] sm:$0xf]
      %v5891 = vld [vmem:[%s401 + $0x2c] sm:$0xf]
      %v5892 = vld [vmem:[%s401 + $0x30] sm:$0xf]
      %v5893 = vld [vmem:[%s401 + $0x34] sm:$0xf]
      %v5894 = vld [vmem:[%s401 + $0x38] sm:$0xf]
      %v5895 = vld [vmem:[%s401 + $0x3c] sm:$0xf]
      %v5896 = vld [vmem:[%s401 + $0x40] sm:$0xf]
      %v5897 = vld [vmem:[%s401 + $0x44] sm:$0xf]
      %v5898 = vld [vmem:[%s401 + $0x48] sm:$0xf]
      %v5899 = vld [vmem:[%s401 + $0x4c] sm:$0xf]
      %v5900 = vld [vmem:[%s401 + $0x50] sm:$0xf]
      %v5901 = vld [vmem:[%s401 + $0x54] sm:$0xf]
      %v5902 = vld [vmem:[%s401 + $0x58] sm:$0xf]
      %v5903 = vld [vmem:[%s401 + $0x5c] sm:$0xf]
      %v5904 = vld [vmem:[%s401 + $0x60] sm:$0xf]
      %v5905 = vld [vmem:[%s401 + $0x64] sm:$0xf]
      %v5906 = vld [vmem:[%s401 + $0x68] sm:$0xf]
      %v5907 = vld [vmem:[%s401 + $0x6c] sm:$0xf]
      %v5908 = vld [vmem:[%s401 + $0x70] sm:$0xf]
      %v5909 = vld [vmem:[%s401 + $0x74] sm:$0xf]
      %v5910 = vld [vmem:[%s401 + $0x78] sm:$0xf]
      %v5911 = vld [vmem:[%s401 + $0x7c] sm:$0xf]
      %v5912 = vld [vmem:[%s8] sm:$0x3]
      %v5945 = vunpack.c.l.b16 %v5880
      %v5946 = vunpack.c.l.b16 %v5881
      %v5947 = vunpack.c.l.b16 %v5882
      %v5948 = vunpack.c.l.b16 %v5883
      %v5949 = vunpack.c.l.b16 %v5884
      %v5950 = vunpack.c.l.b16 %v5885
      %v5951 = vunpack.c.l.b16 %v5886
      %v5952 = vunpack.c.l.b16 %v5887
      %v5953 = vunpack.c.l.b16 %v5888
      %v5954 = vunpack.c.l.b16 %v5889
      %v5955 = vunpack.c.l.b16 %v5890
      %v5956 = vunpack.c.l.b16 %v5891
      %v5957 = vunpack.c.l.b16 %v5892
      %v5958 = vunpack.c.l.b16 %v5893
      %v5959 = vunpack.c.l.b16 %v5894
      %v5960 = vunpack.c.l.b16 %v5895
      %v5961 = vunpack.c.l.b16 %v5896
      %v5962 = vunpack.c.l.b16 %v5897
      %v5963 = vunpack.c.l.b16 %v5898
      %v5964 = vunpack.c.l.b16 %v5899
      %v5965 = vunpack.c.l.b16 %v5900
      %v5966 = vunpack.c.l.b16 %v5901
      %v5967 = vunpack.c.l.b16 %v5902
      %v5968 = vunpack.c.l.b16 %v5903
      %v5969 = vunpack.c.l.b16 %v5904
      %v5970 = vunpack.c.l.b16 %v5905
      %v5971 = vunpack.c.l.b16 %v5906
      %v5972 = vunpack.c.l.b16 %v5907
      %v5973 = vunpack.c.l.b16 %v5908
      %v5974 = vunpack.c.l.b16 %v5909
      %v5975 = vunpack.c.l.b16 %v5910
      %v5976 = vunpack.c.l.b16 %v5911
      %v5977 = vpack.c.b16 %v5946, %v5945
      %v5978 = vpack.c.b16 %v5948, %v5947
      %v5979 = vpack.c.b16 %v5950, %v5949
      %v5980 = vpack.c.b16 %v5952, %v5951
      %v5981 = vpack.c.b16 %v5954, %v5953
      %v5982 = vpack.c.b16 %v5956, %v5955
      %v5983 = vpack.c.b16 %v5958, %v5957
      %v5984 = vpack.c.b16 %v5960, %v5959
      %v5985 = vpack.c.b16 %v5962, %v5961
      %v5986 = vpack.c.b16 %v5964, %v5963
      %v5987 = vpack.c.b16 %v5966, %v5965
      %v5988 = vpack.c.b16 %v5968, %v5967
      %v5989 = vpack.c.b16 %v5970, %v5969
      %v5990 = vpack.c.b16 %v5972, %v5971
      %v5991 = vpack.c.b16 %v5974, %v5973
      %v5992 = vpack.c.b16 %v5976, %v5975
      %vm5993 = vcmask 31744
      %v5995 = vsel %vm5993, %v5977, 0
      %v5998 = vsel %vm5993, %v5978, 0
      %v6001 = vsel %vm5993, %v5979, 0
      %v6004 = vsel %vm5993, %v5980, 0
      %v6007 = vsel %vm5993, %v5981, 0
      %v6010 = vsel %vm5993, %v5982, 0
      %v6013 = vsel %vm5993, %v5983, 0
      %v6016 = vsel %vm5993, %v5984, 0
      %v6019 = vsel %vm5993, %v5985, 0
      %v6022 = vsel %vm5993, %v5986, 0
      %v6025 = vsel %vm5993, %v5987, 0
      %v6028 = vsel %vm5993, %v5988, 0
      %v6031 = vsel %vm5993, %v5989, 0
      %v6034 = vsel %vm5993, %v5990, 0
      %v6037 = vsel %vm5993, %v5991, 0
      %v6040 = vsel %vm5993, %v5992, 0
      %v6043 = vsel %vm589, %v5912, 0
      %6045 = vmatprep.subr.bf16.mxu0 0
      %6046 = vmatpush1.bf16.msra.mxu0 %v6043
      %6047 = vmatprep.subr.bf16.mxu0 0
      %6048 = vmatpush1.bf16.msra.mxu0 0
      %6049 = vmatprep.subr.bf16.mxu0 0
      %6050 = vmatpush1.bf16.msra.mxu0 0
      %6051 = vmatprep.subr.bf16.mxu0 0
      %6052 = vmatpush1.bf16.msra.mxu0 0
      %6053 = vmatprep.subr.bf16.mxu0 0
      %6054 = vmatpush1.bf16.msra.mxu0 0
      %6055 = vmatprep.subr.bf16.mxu0 0
      %6056 = vmatpush1.bf16.msra.mxu0 0
      %6057 = vmatprep.subr.bf16.mxu0 0
      %6058 = vmatpush1.bf16.msra.mxu0 0
      %6059 = vmatprep.subr.bf16.mxu0 0
      %6060 = vmatpush1.bf16.msra.mxu0 0
      %6061 = vmatprep.subr.bf16.mxu0 0
      %6062 = vmatpush1.bf16.msra.mxu0 0
      %6063 = vmatprep.subr.bf16.mxu0 0
      %6064 = vmatpush1.bf16.msra.mxu0 0
      %6065 = vmatprep.subr.bf16.mxu0 0
      %6066 = vmatpush1.bf16.msra.mxu0 0
      %6067 = vmatprep.subr.bf16.mxu0 0
      %6068 = vmatpush1.bf16.msra.mxu0 0
      %6069 = vmatprep.subr.bf16.mxu0 0
      %6070 = vmatpush1.bf16.msra.mxu0 0
      %6071 = vmatprep.subr.bf16.mxu0 0
      %6072 = vmatpush1.bf16.msra.mxu0 0
      %6073 = vmatprep.subr.bf16.mxu0 0
      %6074 = vmatpush1.bf16.msra.mxu0 0
      %6075 = vmatprep.subr.bf16.mxu0 0
      %6076 = vmatpush1.bf16.msra.mxu0 0
      %6077 = vmatprep.mubr.bf16.mxu0 0
      %6078 = vmatmul.mubr.bf16.gmra.mrb[0].mxu0 %v5995
      %v6079 = vpop.f32.mrb[0].mxu0
      %v6080 = vadd.f32 0.0, %v6079
      %v6081 = vpop.f32.mrb[0].mxu0
      %v6082 = vpop.f32.mrb[0].mxu0
      %v6083 = vadd.f32 0.0, %v6082
      %v6084 = vpop.f32.mrb[0].mxu0
      %6085 = vmatprep.mubr.bf16.mxu0 0
      %6086 = vmatmul.mubr.bf16.gmra.mrb[0].mxu0 %v5998
      %v6087 = vpop.f32.mrb[0].mxu0
      %v6088 = vadd.f32 0.0, %v6087
      %v6089 = vpop.f32.mrb[0].mxu0
      %v6090 = vpop.f32.mrb[0].mxu0
      %v6091 = vadd.f32 0.0, %v6090
      %v6092 = vpop.f32.mrb[0].mxu0
      %6093 = vmatprep.mubr.bf16.mxu0 0
      %6094 = vmatmul.mubr.bf16.gmra.mrb[0].mxu0 %v6001
      %v6095 = vpop.f32.mrb[0].mxu0
      %v6096 = vadd.f32 0.0, %v6095
      %v6097 = vpop.f32.mrb[0].mxu0
      %v6098 = vpop.f32.mrb[0].mxu0
      %v6099 = vadd.f32 0.0, %v6098
      %v6100 = vpop.f32.mrb[0].mxu0
      %6101 = vmatprep.mubr.bf16.mxu0 0
      %6102 = vmatmul.mubr.bf16.gmra.mrb[0].mxu0 %v6004
      %v6103 = vpop.f32.mrb[0].mxu0
      %v6104 = vadd.f32 0.0, %v6103
      %v6105 = vpop.f32.mrb[0].mxu0
      %v6106 = vpop.f32.mrb[0].mxu0
      %v6107 = vadd.f32 0.0, %v6106
      %v6108 = vpop.f32.mrb[0].mxu0
      %6109 = vmatprep.mubr.bf16.mxu0 0
      %6110 = vmatmul.mubr.bf16.gmra.mrb[0].mxu0 %v6007
      %v6111 = vpop.f32.mrb[0].mxu0
      %v6112 = vadd.f32 0.0, %v6111
      %v6113 = vpop.f32.mrb[0].mxu0
      %v6114 = vpop.f32.mrb[0].mxu0
      %v6115 = vadd.f32 0.0, %v6114
      %v6116 = vpop.f32.mrb[0].mxu0
      %6117 = vmatprep.mubr.bf16.mxu0 0
      %6118 = vmatmul.mubr.bf16.gmra.mrb[0].mxu0 %v6010
      %v6119 = vpop.f32.mrb[0].mxu0
      %v6120 = vadd.f32 0.0, %v6119
      %v6121 = vpop.f32.mrb[0].mxu0
      %v6122 = vpop.f32.mrb[0].mxu0
      %v6123 = vadd.f32 0.0, %v6122
      %v6124 = vpop.f32.mrb[0].mxu0
      %6125 = vmatprep.mubr.bf16.mxu0 0
      %6126 = vmatmul.mubr.bf16.gmra.mrb[0].mxu0 %v6013
      %v6127 = vpop.f32.mrb[0].mxu0
      %v6128 = vadd.f32 0.0, %v6127
      %v6129 = vpop.f32.mrb[0].mxu0
      %v6130 = vpop.f32.mrb[0].mxu0
      %v6131 = vadd.f32 0.0, %v6130
      %v6132 = vpop.f32.mrb[0].mxu0
      %6133 = vmatprep.mubr.bf16.mxu0 0
      %6134 = vmatmul.mubr.bf16.gmra.mrb[0].mxu0 %v6016
      %v6135 = vpop.f32.mrb[0].mxu0
      %v6136 = vadd.f32 0.0, %v6135
      %v6137 = vpop.f32.mrb[0].mxu0
      %v6138 = vpop.f32.mrb[0].mxu0
      %v6139 = vadd.f32 0.0, %v6138
      %v6140 = vpop.f32.mrb[0].mxu0
      %6141 = vmatprep.mubr.bf16.mxu0 0
      %6142 = vmatmul.mubr.bf16.gmra.mrb[0].mxu0 %v6019
      %v6143 = vpop.f32.mrb[0].mxu0
      %v6144 = vadd.f32 0.0, %v6143
      %v6145 = vpop.f32.mrb[0].mxu0
      %v6146 = vpop.f32.mrb[0].mxu0
      %v6147 = vadd.f32 0.0, %v6146
      %v6148 = vpop.f32.mrb[0].mxu0
      %6149 = vmatprep.mubr.bf16.mxu0 0
      %6150 = vmatmul.mubr.bf16.gmra.mrb[0].mxu0 %v6022
      %v6151 = vpop.f32.mrb[0].mxu0
      %v6152 = vadd.f32 0.0, %v6151
      %v6153 = vpop.f32.mrb[0].mxu0
      %v6154 = vpop.f32.mrb[0].mxu0
      %v6155 = vadd.f32 0.0, %v6154
      %v6156 = vpop.f32.mrb[0].mxu0
      %6157 = vmatprep.mubr.bf16.mxu0 0
      %6158 = vmatmul.mubr.bf16.gmra.mrb[0].mxu0 %v6025
      %v6159 = vpop.f32.mrb[0].mxu0
      %v6160 = vadd.f32 0.0, %v6159
      %v6161 = vpop.f32.mrb[0].mxu0
      %v6162 = vpop.f32.mrb[0].mxu0
      %v6163 = vadd.f32 0.0, %v6162
      %v6164 = vpop.f32.mrb[0].mxu0
      %6165 = vmatprep.mubr.bf16.mxu0 0
      %6166 = vmatmul.mubr.bf16.gmra.mrb[0].mxu0 %v6028
      %v6167 = vpop.f32.mrb[0].mxu0
      %v6168 = vadd.f32 0.0, %v6167
      %v6169 = vpop.f32.mrb[0].mxu0
      %v6170 = vpop.f32.mrb[0].mxu0
      %v6171 = vadd.f32 0.0, %v6170
      %v6172 = vpop.f32.mrb[0].mxu0
      %6173 = vmatprep.mubr.bf16.mxu0 0
      %6174 = vmatmul.mubr.bf16.gmra.mrb[0].mxu0 %v6031
      %v6175 = vpop.f32.mrb[0].mxu0
      %v6176 = vadd.f32 0.0, %v6175
      %v6177 = vpop.f32.mrb[0].mxu0
      %v6178 = vpop.f32.mrb[0].mxu0
      %v6179 = vadd.f32 0.0, %v6178
      %v6180 = vpop.f32.mrb[0].mxu0
      %6181 = vmatprep.mubr.bf16.mxu0 0
      %6182 = vmatmul.mubr.bf16.gmra.mrb[0].mxu0 %v6034
      %v6183 = vpop.f32.mrb[0].mxu0
      %v6184 = vadd.f32 0.0, %v6183
      %v6185 = vpop.f32.mrb[0].mxu0
      %v6186 = vpop.f32.mrb[0].mxu0
      %v6187 = vadd.f32 0.0, %v6186
      %v6188 = vpop.f32.mrb[0].mxu0
      %6189 = vmatprep.mubr.bf16.mxu0 0
      %6190 = vmatmul.mubr.bf16.gmra.mrb[0].mxu0 %v6037
      %v6191 = vpop.f32.mrb[0].mxu0
      %v6192 = vadd.f32 0.0, %v6191
      %v6193 = vpop.f32.mrb[0].mxu0
      %v6194 = vpop.f32.mrb[0].mxu0
      %v6195 = vadd.f32 0.0, %v6194
      %v6196 = vpop.f32.mrb[0].mxu0
      %6197 = vmatprep.mubr.bf16.mxu0 0
      %6198 = vmatmul.mubr.bf16.gmra.mrb[0].mxu0 %v6040
      %v6199 = vpop.f32.mrb[0].mxu0
      %v6200 = vadd.f32 0.0, %v6199
      %v6201 = vpop.f32.mrb[0].mxu0
      %v6202 = vpop.f32.mrb[0].mxu0
      %v6203 = vadd.f32 0.0, %v6202
      %v6204 = vpop.f32.mrb[0].mxu0
      %6205 = vdwg.mxu0
      %v6206 = vld [vmem:[%s9] sm:$0x1]
      %v6208 = vlaneseq
      %v6209 = vshrl.u32 %v6208, 7
      %v6210 = vsub.s32 0, %v6209
      %v6211 = vrot.slane %v6206, %v6210
      %v6213 = vmul.f32 %v6080, %v6211
      %v6214 = vmul.f32 %v6083, %v6211
      %v6215 = vmul.f32 %v6088, %v6211
      %v6216 = vmul.f32 %v6091, %v6211
      %v6217 = vmul.f32 %v6096, %v6211
      %v6218 = vmul.f32 %v6099, %v6211
      %v6219 = vmul.f32 %v6104, %v6211
      %v6220 = vmul.f32 %v6107, %v6211
      %v6221 = vmul.f32 %v6112, %v6211
      %v6222 = vmul.f32 %v6115, %v6211
      %v6223 = vmul.f32 %v6120, %v6211
      %v6224 = vmul.f32 %v6123, %v6211
      %v6225 = vmul.f32 %v6128, %v6211
      %v6226 = vmul.f32 %v6131, %v6211
      %v6227 = vmul.f32 %v6136, %v6211
      %v6228 = vmul.f32 %v6139, %v6211
      %v6229 = vmul.f32 %v6144, %v6211
      %v6230 = vmul.f32 %v6147, %v6211
      %v6231 = vmul.f32 %v6152, %v6211
      %v6232 = vmul.f32 %v6155, %v6211
      %v6233 = vmul.f32 %v6160, %v6211
      %v6234 = vmul.f32 %v6163, %v6211
      %v6235 = vmul.f32 %v6168, %v6211
      %v6236 = vmul.f32 %v6171, %v6211
      %v6237 = vmul.f32 %v6176, %v6211
      %v6238 = vmul.f32 %v6179, %v6211
      %v6239 = vmul.f32 %v6184, %v6211
      %v6240 = vmul.f32 %v6187, %v6211
      %v6241 = vmul.f32 %v6192, %v6211
      %v6242 = vmul.f32 %v6195, %v6211
      %v6243 = vmul.f32 %v6200, %v6211
      %v6244 = vmul.f32 %v6203, %v6211
      %v6245 = vld [vmem:[%s10] sm:$0x1]
      %v6247 = vlaneseq
      %v6248 = vshrl.u32 %v6247, 7
      %v6249 = vsub.s32 0, %v6248
      %v6250 = vrot.slane %v6245, %v6249
      %v6252 = vadd.f32 %v6213, %v6250
      %v6253 = vadd.f32 %v6214, %v6250
      %v6254 = vadd.f32 %v6215, %v6250
      %v6255 = vadd.f32 %v6216, %v6250
      %v6256 = vadd.f32 %v6217, %v6250
      %v6257 = vadd.f32 %v6218, %v6250
      %v6258 = vadd.f32 %v6219, %v6250
      %v6259 = vadd.f32 %v6220, %v6250
      %v6260 = vadd.f32 %v6221, %v6250
      %v6261 = vadd.f32 %v6222, %v6250
      %v6262 = vadd.f32 %v6223, %v6250
      %v6263 = vadd.f32 %v6224, %v6250
      %v6264 = vadd.f32 %v6225, %v6250
      %v6265 = vadd.f32 %v6226, %v6250
      %v6266 = vadd.f32 %v6227, %v6250
      %v6267 = vadd.f32 %v6228, %v6250
      %v6268 = vadd.f32 %v6229, %v6250
      %v6269 = vadd.f32 %v6230, %v6250
      %v6270 = vadd.f32 %v6231, %v6250
      %v6271 = vadd.f32 %v6232, %v6250
      %v6272 = vadd.f32 %v6233, %v6250
      %v6273 = vadd.f32 %v6234, %v6250
      %v6274 = vadd.f32 %v6235, %v6250
      %v6275 = vadd.f32 %v6236, %v6250
      %v6276 = vadd.f32 %v6237, %v6250
      %v6277 = vadd.f32 %v6238, %v6250
      %v6278 = vadd.f32 %v6239, %v6250
      %v6279 = vadd.f32 %v6240, %v6250
      %v6280 = vadd.f32 %v6241, %v6250
      %v6281 = vadd.f32 %v6242, %v6250
      %v6282 = vadd.f32 %v6243, %v6250
      %v6283 = vadd.f32 %v6244, %v6250
      %v6284 = vadd.f32 %v5848, %v6252
      %v6285 = vadd.f32 %v5849, %v6253
      %v6286 = vadd.f32 %v5850, %v6254
      %v6287 = vadd.f32 %v5851, %v6255
      %v6288 = vadd.f32 %v5852, %v6256
      %v6289 = vadd.f32 %v5853, %v6257
      %v6290 = vadd.f32 %v5854, %v6258
      %v6291 = vadd.f32 %v5855, %v6259
      %v6292 = vadd.f32 %v5856, %v6260
      %v6293 = vadd.f32 %v5857, %v6261
      %v6294 = vadd.f32 %v5858, %v6262
      %v6295 = vadd.f32 %v5859, %v6263
      %v6296 = vadd.f32 %v5860, %v6264
      %v6297 = vadd.f32 %v5861, %v6265
      %v6298 = vadd.f32 %v5862, %v6266
      %v6299 = vadd.f32 %v5863, %v6267
      %v6300 = vadd.f32 %v5864, %v6268
      %v6301 = vadd.f32 %v5865, %v6269
      %v6302 = vadd.f32 %v5866, %v6270
      %v6303 = vadd.f32 %v5867, %v6271
      %v6304 = vadd.f32 %v5868, %v6272
      %v6305 = vadd.f32 %v5869, %v6273
      %v6306 = vadd.f32 %v5870, %v6274
      %v6307 = vadd.f32 %v5871, %v6275
      %v6308 = vadd.f32 %v5872, %v6276
      %v6309 = vadd.f32 %v5873, %v6277
      %v6310 = vadd.f32 %v5874, %v6278
      %v6311 = vadd.f32 %v5875, %v6279
      %v6312 = vadd.f32 %v5876, %v6280
      %v6313 = vadd.f32 %v5877, %v6281
      %v6314 = vadd.f32 %v5878, %v6282
      %v6315 = vadd.f32 %v5879, %v6283
      %v6316 = vmax.f32 %v6284, 0.0
      %v6317 = vmax.f32 %v6285, 0.0
      %v6318 = vmax.f32 %v6286, 0.0
      %v6319 = vmax.f32 %v6287, 0.0
      %v6320 = vmax.f32 %v6288, 0.0
      %v6321 = vmax.f32 %v6289, 0.0
      %v6322 = vmax.f32 %v6290, 0.0
      %v6323 = vmax.f32 %v6291, 0.0
      %v6324 = vmax.f32 %v6292, 0.0
      %v6325 = vmax.f32 %v6293, 0.0
      %v6326 = vmax.f32 %v6294, 0.0
      %v6327 = vmax.f32 %v6295, 0.0
      %v6328 = vmax.f32 %v6296, 0.0
      %v6329 = vmax.f32 %v6297, 0.0
      %v6330 = vmax.f32 %v6298, 0.0
      %v6331 = vmax.f32 %v6299, 0.0
      %v6332 = vmax.f32 %v6300, 0.0
      %v6333 = vmax.f32 %v6301, 0.0
      %v6334 = vmax.f32 %v6302, 0.0
      %v6335 = vmax.f32 %v6303, 0.0
      %v6336 = vmax.f32 %v6304, 0.0
      %v6337 = vmax.f32 %v6305, 0.0
      %v6338 = vmax.f32 %v6306, 0.0
      %v6339 = vmax.f32 %v6307, 0.0
      %v6340 = vmax.f32 %v6308, 0.0
      %v6341 = vmax.f32 %v6309, 0.0
      %v6342 = vmax.f32 %v6310, 0.0
      %v6343 = vmax.f32 %v6311, 0.0
      %v6344 = vmax.f32 %v6312, 0.0
      %v6345 = vmax.f32 %v6313, 0.0
      %v6346 = vmax.f32 %v6314, 0.0
      %v6347 = vmax.f32 %v6315, 0.0
      %6348 = vst [vmem:[%s406] sm:$0xff] %v6316
      %6349 = vst [vmem:[%s406 + $0x8] sm:$0xff] %v6317
      %6350 = vst [vmem:[%s406 + $0x10] sm:$0xff] %v6318
      %6351 = vst [vmem:[%s406 + $0x18] sm:$0xff] %v6319
      %6352 = vst [vmem:[%s406 + $0x20] sm:$0xff] %v6320
      %6353 = vst [vmem:[%s406 + $0x28] sm:$0xff] %v6321
      %6354 = vst [vmem:[%s406 + $0x30] sm:$0xff] %v6322
      %6355 = vst [vmem:[%s406 + $0x38] sm:$0xff] %v6323
      %6356 = vst [vmem:[%s406 + $0x40] sm:$0xff] %v6324
      %6357 = vst [vmem:[%s406 + $0x48] sm:$0xff] %v6325
      %6358 = vst [vmem:[%s406 + $0x50] sm:$0xff] %v6326
      %6359 = vst [vmem:[%s406 + $0x58] sm:$0xff] %v6327
      %6360 = vst [vmem:[%s406 + $0x60] sm:$0xff] %v6328
      %6361 = vst [vmem:[%s406 + $0x68] sm:$0xff] %v6329
      %6362 = vst [vmem:[%s406 + $0x70] sm:$0xff] %v6330
      %6363 = vst [vmem:[%s406 + $0x78] sm:$0xff] %v6331
      %6364 = vst [vmem:[%s406 + $0x80] sm:$0xff] %v6332
      %6365 = vst [vmem:[%s406 + $0x88] sm:$0xff] %v6333
      %6366 = vst [vmem:[%s406 + $0x90] sm:$0xff] %v6334
      %6367 = vst [vmem:[%s406 + $0x98] sm:$0xff] %v6335
      %6368 = vst [vmem:[%s406 + $0xa0] sm:$0xff] %v6336
      %6369 = vst [vmem:[%s406 + $0xa8] sm:$0xff] %v6337
      %6370 = vst [vmem:[%s406 + $0xb0] sm:$0xff] %v6338
      %6371 = vst [vmem:[%s406 + $0xb8] sm:$0xff] %v6339
      %6372 = vst [vmem:[%s406 + $0xc0] sm:$0xff] %v6340
      %6373 = vst [vmem:[%s406 + $0xc8] sm:$0xff] %v6341
      %6374 = vst [vmem:[%s406 + $0xd0] sm:$0xff] %v6342
      %6375 = vst [vmem:[%s406 + $0xd8] sm:$0xff] %v6343
      %6376 = vst [vmem:[%s406 + $0xe0] sm:$0xff] %v6344
      %6377 = vst [vmem:[%s406 + $0xe8] sm:$0xff] %v6345
      %6378 = vst [vmem:[%s406 + $0xf0] sm:$0xff] %v6346
      %6379 = vst [vmem:[%s406 + $0xf8] sm:$0xff] %v6347
      %p6380 = scmp.lt.s32.totalorder %s22, 1
      %s6381 = scalar_select %p6380, %s22, 1
      %s6382 = smul.addr %s6381, 32
      %s6383 = smul.addr %s6382, 8
      %s6384 = scalar_lea.vmem %s11, %s6383
      // Predicated region
      $region65: #{basic_block_forward.1} parent=63 // pred_check
        %p6385 = pneg %p281
      $region66: #{basic_block_forward.1} parent=63 // pred_check_branch
        %6387 = sbr.rel (%p6385) target = $region68
      $region67: #{basic_block_forward.1} parent=63 // pred_region
        _
      $region68: #{basic_block_forward.1} parent=63 // pred_fallthru
        _
    $region64: #{basic_block_forward.1} parent=5 // pred_fallthru
      _
    %p6388 = scmp.le.s32.totalorder 2, %s17
    // Predicated region
    $region69: #{basic_block_forward.1} parent=5 // pred_check
      %p6389 = pneg %p6388
    $region70: #{basic_block_forward.1} parent=5 // pred_check_branch
      %6391 = sbr.rel (%p6389) target = $region72
    $region71: #{basic_block_forward.1} parent=5 // pred_region
      %s6392 = ssub.s32 %s17, 2
      // Predicated region
      $region73: #{basic_block_forward.1} parent=71 // pred_check
        %p6393 = pneg %p287
      $region74: #{basic_block_forward.1} parent=71 // pred_check_branch
        %6395 = sbr.rel (%p6393) target = $region76
      $region75: #{basic_block_forward.1} parent=71 // pred_region
        %p6396 = scmp.lt.s32.totalorder %s23, 1
        %s6397 = scalar_select %p6396, %s23, 1
        %s6398 = smul.addr %s6397, 32
        %s6399 = smul.addr %s6398, 8
        %s6400 = scalar_lea.vmem %s11, %s6399
      $region76: #{basic_block_forward.1} parent=71 // pred_fallthru
        _
    $region72: #{basic_block_forward.1} parent=5 // pred_fallthru
      _
  $region6: #{basic_block_forward.1} parent=0 // loop_footer
    %s21 = sadd.s32 1, %s17
  $region7: #{basic_block_forward.1} parent=0 // loop_footer_branch
    %16 = sbr.rel target = $region3
  $region8: #{basic_block_forward.1} parent=0 // loop_exit
    _

</llo_original>
